<compile_context>
chip_gen: v5e
topology: v5e:2x2
jax: 0.10.0
libtpu: 0.0.40
codegen_flags: <defaults>
</compile_context>

<pallas_src>
import jax
import jax.numpy as jnp
from jax.experimental import pallas as pl
from jax.experimental.pallas import tpu as pltpu

LANE = 128


# ----------------------------- helpers --------------------------------------

def _round_up(x, m):
    return ((x + m - 1) // m) * m


def _choose_tm(m, max_tm=512):
    """Row-tile size: big enough to pipeline well, multiple of 8 sublanes."""
    m8 = _round_up(m, 8)
    return m8 if m8 <= max_tm else max_tm


def _prep_weight(w2d, kp, np_):
    """(N, K) torch-layout weight -> (Kp, Np) bf16, zero padded."""
    n, k = w2d.shape
    wt = w2d.T.astype(jnp.bfloat16)
    return jnp.pad(wt, ((0, kp - k), (0, np_ - n)))


def _prep_bias(b, np_):
    return jnp.pad(b.astype(jnp.float32), (0, np_ - b.shape[0])).reshape(1, np_)


# ----------------------------- Pallas kernels -------------------------------

def _conv_relu_pool_kernel(x0_ref, x1_ref, x2_ref, x3_ref, w_ref, b_ref, o_ref):
    """Fused conv(im2col matmul) + bias + ReLU + 2x2 max-pool.

    x{0..3}: (TM, Kp) bf16 im2col rows of the four pool-window corners
    w:       (Kp, Np) bf16   b: (1, Np) f32   o: (TM, Np) bf16
    max/bias/relu commute (bias is per-channel, relu monotone), so we pool
    the raw matmul results and apply bias+relu once.
    """
    w = w_ref[...]

    def dot(xr):
        return jnp.dot(xr[...], w, preferred_element_type=jnp.float32)

    m = jnp.maximum(jnp.maximum(dot(x0_ref), dot(x1_ref)),
                    jnp.maximum(dot(x2_ref), dot(x3_ref)))
    m = m + b_ref[...]
    o_ref[...] = jnp.maximum(m, 0.0).astype(o_ref.dtype)


def _matmul_bias_kernel(x_ref, w_ref, b_ref, o_ref):
    acc = jnp.dot(x_ref[...], w_ref[...], preferred_element_type=jnp.float32)
    o_ref[...] = (acc + b_ref[...]).astype(o_ref.dtype)


# ------------------------------ wrappers -------------------------------------

def conv_relu_pool(corners, w_t, b_row, n_out):
    """corners: 4 arrays (M, K) bf16 (one per 2x2 pool corner).
    Returns pooled conv output (M, n_out) bf16."""
    M, K = corners[0].shape
    Kp, Np = w_t.shape
    TM = _choose_tm(M)
    Mp = _round_up(M, TM)

    xs = [jnp.pad(c, ((0, Mp - M), (0, Kp - K))) for c in corners]

    out = pl.pallas_call(
        _conv_relu_pool_kernel,
        out_shape=jax.ShapeDtypeStruct((Mp, Np), jnp.bfloat16),
        grid=(Mp // TM,),
        in_specs=[pl.BlockSpec((TM, Kp), lambda i: (i, 0))] * 4 + [
            pl.BlockSpec((Kp, Np), lambda i: (0, 0)),   # weights stay VMEM-resident
            pl.BlockSpec((1, Np), lambda i: (0, 0)),
        ],
        out_specs=pl.BlockSpec((TM, Np), lambda i: (i, 0)),
        compiler_params=pltpu.CompilerParams(
            dimension_semantics=("parallel",)),
    )(*xs, w_t, b_row)
    return out[:M, :n_out]


def linear(x, w_t, b_row, n_out):
    """(M, K) bf16 @ (Kp, Np) bf16 + bias, f32 output sliced to (M, n_out)."""
    M, K = x.shape
    Kp, Np = w_t.shape
    TM = _choose_tm(M)
    Mp = _round_up(M, TM)

    xp = jnp.pad(x, ((0, Mp - M), (0, Kp - K)))

    out = pl.pallas_call(
        _matmul_bias_kernel,
        out_shape=jax.ShapeDtypeStruct((Mp, Np), jnp.float32),
        grid=(Mp // TM,),
        in_specs=[
            pl.BlockSpec((TM, Kp), lambda i: (i, 0)),
            pl.BlockSpec((Kp, Np), lambda i: (0, 0)),
            pl.BlockSpec((1, Np), lambda i: (0, 0)),
        ],
        out_specs=pl.BlockSpec((TM, Np), lambda i: (i, 0)),
        compiler_params=pltpu.CompilerParams(
            dimension_semantics=("parallel",)),
    )(xp, w_t, b_row)
    return out[:M, :n_out]


# ------------------------------ host-side glue --------------------------------

def im2col_nhwc(x_nhwc, k, pad):
    """k x k patches, stride 1, zero-padded. Feature order (C, kh, kw) so it
    matches torch's conv weight.reshape(Cout, -1). Returns (B, H, W, C*k*k)."""
    B, H, W, C = x_nhwc.shape
    xp = jnp.pad(x_nhwc, ((0, 0), (pad, pad), (pad, pad), (0, 0)))
    cols = [xp[:, dh:dh + H, dw:dw + W, :] for dh in range(k) for dw in range(k)]
    p = jnp.stack(cols, axis=0).reshape(k, k, B, H, W, C)
    p = p.transpose(2, 3, 4, 5, 0, 1)            # (B, H, W, C, kh, kw)
    return p.reshape(B, H, W, C * k * k)


def pool_corners(p):
    """Split im2col rows into the 4 corners of each 2x2 pool window.
    Each corner: rows ordered (B, Ho, Wo) row-major."""
    B, H, W, K = p.shape
    return [p[:, dh::2, dw::2, :].reshape(-1, K)
            for dh in (0, 1) for dw in (0, 1)]


# ------------------------------ full forward ----------------------------------

def init_params(key):
    k1, k2, k3, k4, k5, k6 = jax.random.split(key, 6)
    return {
        "w1": 0.1 * jax.random.normal(k1, (16, 1, 5, 5), jnp.float32),
        "b1": 0.1 * jax.random.normal(k2, (16,), jnp.float32),
        "w2": 0.1 * jax.random.normal(k3, (32, 16, 5, 5), jnp.float32),
        "b2": 0.1 * jax.random.normal(k4, (32,), jnp.float32),
        "w3": 0.1 * jax.random.normal(k5, (10, 32 * 7 * 7), jnp.float32),
        "b3": 0.1 * jax.random.normal(k6, (10,), jnp.float32),
    }


def cnn_forward(params, x_nchw):
    """x_nchw: (B, 1, 28, 28) float32, mirroring the PyTorch module."""
    B = x_nchw.shape[0]

    # ---- conv1: Conv2d(1->16, k=5, pad=2) + ReLU + MaxPool2d(2), fused ----
    x_nhwc = x_nchw.transpose(0, 2, 3, 1).astype(jnp.bfloat16)   # (B, 28, 28, 1)
    p1 = im2col_nhwc(x_nhwc, k=5, pad=2)                         # (B, 28, 28, 25)
    K1 = p1.shape[-1]
    Kp1 = _round_up(K1, LANE)                                    # 128
    w1 = _prep_weight(params["w1"].reshape(16, -1), Kp1, LANE)
    b1 = _prep_bias(params["b1"], LANE)
    y1 = conv_relu_pool(pool_corners(p1), w1, b1, 16)            # (B*196, 16) bf16
    y1 = y1.reshape(B, 14, 14, 16)                               # pooled NHWC

    # ---- conv2: Conv2d(16->32, k=5, pad=2) + ReLU + MaxPool2d(2), fused ----
    p2 = im2col_nhwc(y1, k=5, pad=2)                             # (B, 14, 14, 400)
    K2 = p2.shape[-1]
    Kp2 = _round_up(K2, LANE)                                    # 512
    w2 = _prep_weight(params["w2"].reshape(32, -1), Kp2, LANE)
    b2 = _prep_bias(params["b2"], LANE)
    y2 = conv_relu_pool(pool_corners(p2), w2, b2, 32)            # (B*49, 32) bf16
    y2 = y2.reshape(B, 7, 7, 32)                                 # pooled NHWC

    # ---- flatten exactly like PyTorch: NCHW .view(B, -1) ----
    flat = y2.transpose(0, 3, 1, 2).reshape(B, 32 * 7 * 7)       # (B, 1568) bf16

    # ---- Linear(1568 -> 10) ----
    K3 = flat.shape[-1]
    Kp3 = _round_up(K3, LANE)                                    # 1664
    w3 = _prep_weight(params["w3"], Kp3, LANE)
    b3 = _prep_bias(params["b3"], LANE)
    out = linear(flat, w3, b3, 10)                               # (B, 10) f32
    return out


if __name__ == "__main__":
    key = jax.random.PRNGKey(0)
    pkey, xkey = jax.random.split(key)
    params = init_params(pkey)

    # The Linear(32*7*7, 10) layer pins the spatial size to 28x28 (MNIST).
    x = jax.random.normal(xkey, (2, 1, 28, 28), jnp.float32)

    logits = jax.jit(cnn_forward)(params, x)
    logits = jax.block_until_ready(logits)

    assert logits.shape == (2, 10), logits.shape
    assert logits.dtype == jnp.float32
    assert bool(jnp.all(jnp.isfinite(logits)))
    print("KERNEL_OK")
</pallas_src>

<mosaic_0001>
module attributes {stable_mosaic.version = 11 : i64} {
  func.func @_conv_relu_pool_kernel(%arg0: i32, %arg1: memref<392x128xbf16, #tpu.memory_space<vmem>>, %arg2: memref<392x128xbf16, #tpu.memory_space<vmem>>, %arg3: memref<392x128xbf16, #tpu.memory_space<vmem>>, %arg4: memref<392x128xbf16, #tpu.memory_space<vmem>>, %arg5: memref<128x128xbf16, #tpu.memory_space<vmem>>, %arg6: memref<1x128xf32, #tpu.memory_space<vmem>>, %arg7: memref<392x128xbf16, #tpu.memory_space<vmem>>) attributes {dimension_semantics = [#tpu.dimension_semantics<parallel>], iteration_bounds = array<i64: 1>, scalar_prefetch = 0 : i64, scratch_operands = 0 : i64, tpu.core_type = #tpu.core_type<tc>, window_params = [{transform_indices = @transform_0, window_bounds = array<i64: 392, 128>}, {transform_indices = @transform_1, window_bounds = array<i64: 392, 128>}, {transform_indices = @transform_2, window_bounds = array<i64: 392, 128>}, {transform_indices = @transform_3, window_bounds = array<i64: 392, 128>}, {pipeline_mode = #tpu.pipeline_mode<synchronous>, transform_indices = @transform_4, window_bounds = array<i64: 128, 128>}, {pipeline_mode = #tpu.pipeline_mode<synchronous>, transform_indices = @transform_5, window_bounds = array<i64: 1, 128>}, {transform_indices = @transform_6, window_bounds = array<i64: 392, 128>}]} {
    %c0 = arith.constant 0 : index
    %c0_0 = arith.constant 0 : index
    %0 = vector.load %arg5[%c0, %c0_0] : memref<128x128xbf16, #tpu.memory_space<vmem>>, vector<128x128xbf16>
    %c0_1 = arith.constant 0 : index
    %c0_2 = arith.constant 0 : index
    %1 = vector.load %arg1[%c0_1, %c0_2] : memref<392x128xbf16, #tpu.memory_space<vmem>>, vector<392x128xbf16>
    %cst = arith.constant dense<0.000000e+00> : vector<392x128xf32>
    %2 = tpu.matmul %1, %0, %cst {dimension_numbers = #tpu.dot_dimension_numbers<[1], [0], [0], [1], [0, 0, 1, 1], [], []>} : vector<392x128xbf16>, vector<128x128xbf16>, vector<392x128xf32> -> vector<392x128xf32>
    %c0_3 = arith.constant 0 : index
    %c0_4 = arith.constant 0 : index
    %3 = vector.load %arg2[%c0_3, %c0_4] : memref<392x128xbf16, #tpu.memory_space<vmem>>, vector<392x128xbf16>
    %cst_5 = arith.constant dense<0.000000e+00> : vector<392x128xf32>
    %4 = tpu.matmul %3, %0, %cst_5 {dimension_numbers = #tpu.dot_dimension_numbers<[1], [0], [0], [1], [0, 0, 1, 1], [], []>} : vector<392x128xbf16>, vector<128x128xbf16>, vector<392x128xf32> -> vector<392x128xf32>
    %5 = arith.maximumf %2, %4 : vector<392x128xf32>
    %c0_6 = arith.constant 0 : index
    %c0_7 = arith.constant 0 : index
    %6 = vector.load %arg3[%c0_6, %c0_7] : memref<392x128xbf16, #tpu.memory_space<vmem>>, vector<392x128xbf16>
    %cst_8 = arith.constant dense<0.000000e+00> : vector<392x128xf32>
    %7 = tpu.matmul %6, %0, %cst_8 {dimension_numbers = #tpu.dot_dimension_numbers<[1], [0], [0], [1], [0, 0, 1, 1], [], []>} : vector<392x128xbf16>, vector<128x128xbf16>, vector<392x128xf32> -> vector<392x128xf32>
    %c0_9 = arith.constant 0 : index
    %c0_10 = arith.constant 0 : index
    %8 = vector.load %arg4[%c0_9, %c0_10] : memref<392x128xbf16, #tpu.memory_space<vmem>>, vector<392x128xbf16>
    %cst_11 = arith.constant dense<0.000000e+00> : vector<392x128xf32>
    %9 = tpu.matmul %8, %0, %cst_11 {dimension_numbers = #tpu.dot_dimension_numbers<[1], [0], [0], [1], [0, 0, 1, 1], [], []>} : vector<392x128xbf16>, vector<128x128xbf16>, vector<392x128xf32> -> vector<392x128xf32>
    %10 = arith.maximumf %7, %9 : vector<392x128xf32>
    %11 = arith.maximumf %5, %10 : vector<392x128xf32>
    %c0_12 = arith.constant 0 : index
    %c0_13 = arith.constant 0 : index
    %12 = vector.load %arg6[%c0_12, %c0_13] : memref<1x128xf32, #tpu.memory_space<vmem>>, vector<1x128xf32>
    %13 = vector.broadcast %12 : vector<1x128xf32> to vector<392x128xf32>
    %14 = arith.addf %11, %13 : vector<392x128xf32>
    %cst_14 = arith.constant 0.000000e+00 : f32
    %15 = vector.broadcast %cst_14 : f32 to vector<392x128xf32>
    %16 = arith.maximumf %14, %15 : vector<392x128xf32>
    %17 = arith.truncf %16 : vector<392x128xf32> to vector<392x128xbf16>
    %c0_15 = arith.constant 0 : index
    %c0_16 = arith.constant 0 : index
    %18 = vector.load %arg7[%c0_15, %c0_16] : memref<392x128xbf16, #tpu.memory_space<vmem>>, vector<392x128xbf16>
    tpu.vector_store %arg7[%c0_15, %c0_16], %17 {strides = array<i32>} : memref<392x128xbf16, #tpu.memory_space<vmem>>, vector<392x128xbf16>,
    return
  }
  func.func @transform_0(%arg0: i32) -> (i32, i32) {
    %c0_i32 = arith.constant 0 : i32
    %c0_i32_0 = arith.constant 0 : i32
    return %arg0, %c0_i32 : i32, i32
  }
  func.func @transform_1(%arg0: i32) -> (i32, i32) {
    %c0_i32 = arith.constant 0 : i32
    %c0_i32_0 = arith.constant 0 : i32
    return %arg0, %c0_i32 : i32, i32
  }
  func.func @transform_2(%arg0: i32) -> (i32, i32) {
    %c0_i32 = arith.constant 0 : i32
    %c0_i32_0 = arith.constant 0 : i32
    return %arg0, %c0_i32 : i32, i32
  }
  func.func @transform_3(%arg0: i32) -> (i32, i32) {
    %c0_i32 = arith.constant 0 : i32
    %c0_i32_0 = arith.constant 0 : i32
    return %arg0, %c0_i32 : i32, i32
  }
  func.func @transform_4(%arg0: i32) -> (i32, i32) {
    %c0_i32 = arith.constant 0 : i32
    %c0_i32_0 = arith.constant 0 : i32
    %c0_i32_1 = arith.constant 0 : i32
    return %c0_i32, %c0_i32_0 : i32, i32
  }
  func.func @transform_5(%arg0: i32) -> (i32, i32) {
    %c0_i32 = arith.constant 0 : i32
    %c0_i32_0 = arith.constant 0 : i32
    %c0_i32_1 = arith.constant 0 : i32
    return %c0_i32, %c0_i32_0 : i32, i32
  }
  func.func @transform_6(%arg0: i32) -> (i32, i32) {
    %c0_i32 = arith.constant 0 : i32
    %c0_i32_0 = arith.constant 0 : i32
    return %arg0, %c0_i32 : i32, i32
  }
}

module attributes {stable_mosaic.version = 11 : i64} {
  func.func @_conv_relu_pool_kernel(%arg0: i32, %arg1: memref<104x512xbf16, #tpu.memory_space<vmem>>, %arg2: memref<104x512xbf16, #tpu.memory_space<vmem>>, %arg3: memref<104x512xbf16, #tpu.memory_space<vmem>>, %arg4: memref<104x512xbf16, #tpu.memory_space<vmem>>, %arg5: memref<512x128xbf16, #tpu.memory_space<vmem>>, %arg6: memref<1x128xf32, #tpu.memory_space<vmem>>, %arg7: memref<104x128xbf16, #tpu.memory_space<vmem>>) attributes {dimension_semantics = [#tpu.dimension_semantics<parallel>], iteration_bounds = array<i64: 1>, scalar_prefetch = 0 : i64, scratch_operands = 0 : i64, tpu.core_type = #tpu.core_type<tc>, window_params = [{transform_indices = @transform_0, window_bounds = array<i64: 104, 512>}, {transform_indices = @transform_1, window_bounds = array<i64: 104, 512>}, {transform_indices = @transform_2, window_bounds = array<i64: 104, 512>}, {transform_indices = @transform_3, window_bounds = array<i64: 104, 512>}, {pipeline_mode = #tpu.pipeline_mode<synchronous>, transform_indices = @transform_4, window_bounds = array<i64: 512, 128>}, {pipeline_mode = #tpu.pipeline_mode<synchronous>, transform_indices = @transform_5, window_bounds = array<i64: 1, 128>}, {transform_indices = @transform_6, window_bounds = array<i64: 104, 128>}]} {
    %c0 = arith.constant 0 : index
    %c0_0 = arith.constant 0 : index
    %0 = vector.load %arg5[%c0, %c0_0] : memref<512x128xbf16, #tpu.memory_space<vmem>>, vector<512x128xbf16>
    %c0_1 = arith.constant 0 : index
    %c0_2 = arith.constant 0 : index
    %1 = vector.load %arg1[%c0_1, %c0_2] : memref<104x512xbf16, #tpu.memory_space<vmem>>, vector<104x512xbf16>
    %cst = arith.constant dense<0.000000e+00> : vector<104x128xf32>
    %2 = tpu.matmul %1, %0, %cst {dimension_numbers = #tpu.dot_dimension_numbers<[1], [0], [0], [1], [0, 0, 1, 1], [], []>} : vector<104x512xbf16>, vector<512x128xbf16>, vector<104x128xf32> -> vector<104x128xf32>
    %c0_3 = arith.constant 0 : index
    %c0_4 = arith.constant 0 : index
    %3 = vector.load %arg2[%c0_3, %c0_4] : memref<104x512xbf16, #tpu.memory_space<vmem>>, vector<104x512xbf16>
    %cst_5 = arith.constant dense<0.000000e+00> : vector<104x128xf32>
    %4 = tpu.matmul %3, %0, %cst_5 {dimension_numbers = #tpu.dot_dimension_numbers<[1], [0], [0], [1], [0, 0, 1, 1], [], []>} : vector<104x512xbf16>, vector<512x128xbf16>, vector<104x128xf32> -> vector<104x128xf32>
    %5 = arith.maximumf %2, %4 : vector<104x128xf32>
    %c0_6 = arith.constant 0 : index
    %c0_7 = arith.constant 0 : index
    %6 = vector.load %arg3[%c0_6, %c0_7] : memref<104x512xbf16, #tpu.memory_space<vmem>>, vector<104x512xbf16>
    %cst_8 = arith.constant dense<0.000000e+00> : vector<104x128xf32>
    %7 = tpu.matmul %6, %0, %cst_8 {dimension_numbers = #tpu.dot_dimension_numbers<[1], [0], [0], [1], [0, 0, 1, 1], [], []>} : vector<104x512xbf16>, vector<512x128xbf16>, vector<104x128xf32> -> vector<104x128xf32>
    %c0_9 = arith.constant 0 : index
    %c0_10 = arith.constant 0 : index
    %8 = vector.load %arg4[%c0_9, %c0_10] : memref<104x512xbf16, #tpu.memory_space<vmem>>, vector<104x512xbf16>
    %cst_11 = arith.constant dense<0.000000e+00> : vector<104x128xf32>
    %9 = tpu.matmul %8, %0, %cst_11 {dimension_numbers = #tpu.dot_dimension_numbers<[1], [0], [0], [1], [0, 0, 1, 1], [], []>} : vector<104x512xbf16>, vector<512x128xbf16>, vector<104x128xf32> -> vector<104x128xf32>
    %10 = arith.maximumf %7, %9 : vector<104x128xf32>
    %11 = arith.maximumf %5, %10 : vector<104x128xf32>
    %c0_12 = arith.constant 0 : index
    %c0_13 = arith.constant 0 : index
    %12 = vector.load %arg6[%c0_12, %c0_13] : memref<1x128xf32, #tpu.memory_space<vmem>>, vector<1x128xf32>
    %13 = vector.broadcast %12 : vector<1x128xf32> to vector<104x128xf32>
    %14 = arith.addf %11, %13 : vector<104x128xf32>
    %cst_14 = arith.constant 0.000000e+00 : f32
    %15 = vector.broadcast %cst_14 : f32 to vector<104x128xf32>
    %16 = arith.maximumf %14, %15 : vector<104x128xf32>
    %17 = arith.truncf %16 : vector<104x128xf32> to vector<104x128xbf16>
    %c0_15 = arith.constant 0 : index
    %c0_16 = arith.constant 0 : index
    %18 = vector.load %arg7[%c0_15, %c0_16] : memref<104x128xbf16, #tpu.memory_space<vmem>>, vector<104x128xbf16>
    tpu.vector_store %arg7[%c0_15, %c0_16], %17 {strides = array<i32>} : memref<104x128xbf16, #tpu.memory_space<vmem>>, vector<104x128xbf16>,
    return
  }
  func.func @transform_0(%arg0: i32) -> (i32, i32) {
    %c0_i32 = arith.constant 0 : i32
    %c0_i32_0 = arith.constant 0 : i32
    return %arg0, %c0_i32 : i32, i32
  }
  func.func @transform_1(%arg0: i32) -> (i32, i32) {
    %c0_i32 = arith.constant 0 : i32
    %c0_i32_0 = arith.constant 0 : i32
    return %arg0, %c0_i32 : i32, i32
  }
  func.func @transform_2(%arg0: i32) -> (i32, i32) {
    %c0_i32 = arith.constant 0 : i32
    %c0_i32_0 = arith.constant 0 : i32
    return %arg0, %c0_i32 : i32, i32
  }
  func.func @transform_3(%arg0: i32) -> (i32, i32) {
    %c0_i32 = arith.constant 0 : i32
    %c0_i32_0 = arith.constant 0 : i32
    return %arg0, %c0_i32 : i32, i32
  }
  func.func @transform_4(%arg0: i32) -> (i32, i32) {
    %c0_i32 = arith.constant 0 : i32
    %c0_i32_0 = arith.constant 0 : i32
    %c0_i32_1 = arith.constant 0 : i32
    return %c0_i32, %c0_i32_0 : i32, i32
  }
  func.func @transform_5(%arg0: i32) -> (i32, i32) {
    %c0_i32 = arith.constant 0 : i32
    %c0_i32_0 = arith.constant 0 : i32
    %c0_i32_1 = arith.constant 0 : i32
    return %c0_i32, %c0_i32_0 : i32, i32
  }
  func.func @transform_6(%arg0: i32) -> (i32, i32) {
    %c0_i32 = arith.constant 0 : i32
    %c0_i32_0 = arith.constant 0 : i32
    return %arg0, %c0_i32 : i32, i32
  }
}

module attributes {stable_mosaic.version = 11 : i64} {
  func.func @_matmul_bias_kernel(%arg0: i32, %arg1: memref<8x1664xbf16, #tpu.memory_space<vmem>>, %arg2: memref<1664x128xbf16, #tpu.memory_space<vmem>>, %arg3: memref<1x128xf32, #tpu.memory_space<vmem>>, %arg4: memref<8x128xf32, #tpu.memory_space<vmem>>) attributes {dimension_semantics = [#tpu.dimension_semantics<parallel>], iteration_bounds = array<i64: 1>, scalar_prefetch = 0 : i64, scratch_operands = 0 : i64, tpu.core_type = #tpu.core_type<tc>, window_params = [{transform_indices = @transform_0, window_bounds = array<i64: 8, 1664>}, {pipeline_mode = #tpu.pipeline_mode<synchronous>, transform_indices = @transform_1, window_bounds = array<i64: 1664, 128>}, {pipeline_mode = #tpu.pipeline_mode<synchronous>, transform_indices = @transform_2, window_bounds = array<i64: 1, 128>}, {transform_indices = @transform_3, window_bounds = array<i64: 8, 128>}]} {
    %c0 = arith.constant 0 : index
    %c0_0 = arith.constant 0 : index
    %0 = vector.load %arg1[%c0, %c0_0] : memref<8x1664xbf16, #tpu.memory_space<vmem>>, vector<8x1664xbf16>
    %c0_1 = arith.constant 0 : index
    %c0_2 = arith.constant 0 : index
    %1 = vector.load %arg2[%c0_1, %c0_2] : memref<1664x128xbf16, #tpu.memory_space<vmem>>, vector<1664x128xbf16>
    %cst = arith.constant dense<0.000000e+00> : vector<8x128xf32>
    %2 = tpu.matmul %0, %1, %cst {dimension_numbers = #tpu.dot_dimension_numbers<[1], [0], [0], [1], [0, 0, 1, 1], [], []>} : vector<8x1664xbf16>, vector<1664x128xbf16>, vector<8x128xf32> -> vector<8x128xf32>
    %c0_3 = arith.constant 0 : index
    %c0_4 = arith.constant 0 : index
    %3 = vector.load %arg3[%c0_3, %c0_4] : memref<1x128xf32, #tpu.memory_space<vmem>>, vector<1x128xf32>
    %4 = vector.broadcast %3 : vector<1x128xf32> to vector<8x128xf32>
    %5 = arith.addf %2, %4 : vector<8x128xf32>
    %c0_5 = arith.constant 0 : index
    %c0_6 = arith.constant 0 : index
    %6 = vector.load %arg4[%c0_5, %c0_6] : memref<8x128xf32, #tpu.memory_space<vmem>>, vector<8x128xf32>
    tpu.vector_store %arg4[%c0_5, %c0_6], %5 {strides = array<i32>} : memref<8x128xf32, #tpu.memory_space<vmem>>, vector<8x128xf32>,
    return
  }
  func.func @transform_0(%arg0: i32) -> (i32, i32) {
    %c0_i32 = arith.constant 0 : i32
    %c0_i32_0 = arith.constant 0 : i32
    return %arg0, %c0_i32 : i32, i32
  }
  func.func @transform_1(%arg0: i32) -> (i32, i32) {
    %c0_i32 = arith.constant 0 : i32
    %c0_i32_0 = arith.constant 0 : i32
    %c0_i32_1 = arith.constant 0 : i32
    return %c0_i32, %c0_i32_0 : i32, i32
  }
  func.func @transform_2(%arg0: i32) -> (i32, i32) {
    %c0_i32 = arith.constant 0 : i32
    %c0_i32_0 = arith.constant 0 : i32
    %c0_i32_1 = arith.constant 0 : i32
    return %c0_i32, %c0_i32_0 : i32, i32
  }
  func.func @transform_3(%arg0: i32) -> (i32, i32) {
    %c0_i32 = arith.constant 0 : i32
    %c0_i32_0 = arith.constant 0 : i32
    return %arg0, %c0_i32 : i32, i32
  }
}

</mosaic_0001>

<llo_original>
// kernel: cnn_forward.3
$region0: #{cnn_forward.3}
  #allocation0 [shape = 'u32[]', space=smem, size = 0x4, offset = 0x4, fixed_abs, tag = 'smem constant byte address 0x4 - core index']
  #allocation1 [shape = 'u32[72,128]{1,0:T(1,128)}', space=vmem, size = 0x9000, scoped, tag = 'internal scratch']
  %s0 = inlined_call_operand.vmem [shape: bf16[392,128], index: 0, kind: input, shape index: {}]
  %s1 = inlined_call_operand.vmem [shape: bf16[392,128], index: 1, kind: input, shape index: {}]
  %s2 = inlined_call_operand.vmem [shape: bf16[392,128], index: 2, kind: input, shape index: {}]
  %s3 = inlined_call_operand.vmem [shape: bf16[392,128], index: 3, kind: input, shape index: {}]
  %s4 = inlined_call_operand.vmem [shape: bf16[128,128], index: 4, kind: input, shape index: {}]
  %s5 = inlined_call_operand.vmem [shape: f32[1,128], index: 5, kind: input, shape index: {}]
  %s6 = inlined_call_operand.vmem [shape: bf16[392,128], index: 6, kind: output, shape index: {}]
  %s7 = sld [smem:[#allocation0]]
  $region34: #{cnn_forward.3} parent=0
    _
  %s9 = ssub.s32 1, %s7
  %s10 = scalar_select 0, %s9, %s7
  // Predicated region
  $region2: #{cnn_forward.3} parent=0 // pred_check
    _
  $region3: #{cnn_forward.3} parent=0 // pred_check_branch
    %12 = sbr.rel (0) target = $region5
  $region4: #{cnn_forward.3} parent=0 // pred_region
    _
  $region5: #{cnn_forward.3} parent=0 // pred_fallthru
    _
  // Predicated region
  $region6: #{cnn_forward.3} parent=0 // pred_check
    _
  $region7: #{cnn_forward.3} parent=0 // pred_check_branch
    %14 = sbr.rel (0) target = $region9
  $region8: #{cnn_forward.3} parent=0 // pred_region
    _
  $region9: #{cnn_forward.3} parent=0 // pred_fallthru
    _
  // Predicated region
  $region10: #{cnn_forward.3} parent=0 // pred_check
    _
  $region11: #{cnn_forward.3} parent=0 // pred_check_branch
    %16 = sbr.rel (0) target = $region13
  $region12: #{cnn_forward.3} parent=0 // pred_region
    _
  $region13: #{cnn_forward.3} parent=0 // pred_fallthru
    _
  // Predicated region
  $region14: #{cnn_forward.3} parent=0 // pred_check
    _
  $region15: #{cnn_forward.3} parent=0 // pred_check_branch
    %18 = sbr.rel (0) target = $region17
  $region16: #{cnn_forward.3} parent=0 // pred_region
    _
  $region17: #{cnn_forward.3} parent=0 // pred_fallthru
    _
  // Predicated region
  $region18: #{cnn_forward.3} parent=0 // pred_check
    _
  $region19: #{cnn_forward.3} parent=0 // pred_check_branch
    %20 = sbr.rel (0) target = $region21
  $region20: #{cnn_forward.3} parent=0 // pred_region
    _
  $region21: #{cnn_forward.3} parent=0 // pred_fallthru
    _
  // Predicated region
  $region22: #{cnn_forward.3} parent=0 // pred_check
    _
  $region23: #{cnn_forward.3} parent=0 // pred_check_branch
    %22 = sbr.rel (0) target = $region25
  $region24: #{cnn_forward.3} parent=0 // pred_region
    _
  $region25: #{cnn_forward.3} parent=0 // pred_fallthru
    _
  %v23 = vld [vmem:[%s4] sm:$0xf]
  %v24 = vld [vmem:[%s4 + $0x4] sm:$0xf]
  %v25 = vld [vmem:[%s4 + $0x8] sm:$0xf]
  %v26 = vld [vmem:[%s4 + $0xc] sm:$0xf]
  %v27 = vld [vmem:[%s4 + $0x10] sm:$0xf]
  %v28 = vld [vmem:[%s4 + $0x14] sm:$0xf]
  %v29 = vld [vmem:[%s4 + $0x18] sm:$0xf]
  %v30 = vld [vmem:[%s4 + $0x1c] sm:$0xf]
  %v31 = vld [vmem:[%s4 + $0x20] sm:$0xf]
  %v32 = vld [vmem:[%s4 + $0x24] sm:$0xf]
  %v33 = vld [vmem:[%s4 + $0x28] sm:$0xf]
  %v34 = vld [vmem:[%s4 + $0x2c] sm:$0xf]
  %v35 = vld [vmem:[%s4 + $0x30] sm:$0xf]
  %v36 = vld [vmem:[%s4 + $0x34] sm:$0xf]
  %v37 = vld [vmem:[%s4 + $0x38] sm:$0xf]
  %v38 = vld [vmem:[%s4 + $0x3c] sm:$0xf]
  %v39 = vld [vmem:[%s0] sm:$0xf]
  %v40 = vld [vmem:[%s0 + $0x4] sm:$0xf]
  %v41 = vld [vmem:[%s0 + $0x8] sm:$0xf]
  %v42 = vld [vmem:[%s0 + $0xc] sm:$0xf]
  %v43 = vld [vmem:[%s0 + $0x10] sm:$0xf]
  %v44 = vld [vmem:[%s0 + $0x14] sm:$0xf]
  %v45 = vld [vmem:[%s0 + $0x18] sm:$0xf]
  %v46 = vld [vmem:[%s0 + $0x1c] sm:$0xf]
  %v47 = vld [vmem:[%s0 + $0x20] sm:$0xf]
  %v48 = vld [vmem:[%s0 + $0x24] sm:$0xf]
  %v49 = vld [vmem:[%s0 + $0x28] sm:$0xf]
  %v50 = vld [vmem:[%s0 + $0x2c] sm:$0xf]
  %v51 = vld [vmem:[%s0 + $0x30] sm:$0xf]
  %v52 = vld [vmem:[%s0 + $0x34] sm:$0xf]
  %v53 = vld [vmem:[%s0 + $0x38] sm:$0xf]
  %v54 = vld [vmem:[%s0 + $0x3c] sm:$0xf]
  %v55 = vld [vmem:[%s0 + $0x40] sm:$0xf]
  %v56 = vld [vmem:[%s0 + $0x44] sm:$0xf]
  %v57 = vld [vmem:[%s0 + $0x48] sm:$0xf]
  %v58 = vld [vmem:[%s0 + $0x4c] sm:$0xf]
  %v59 = vld [vmem:[%s0 + $0x50] sm:$0xf]
  %v60 = vld [vmem:[%s0 + $0x54] sm:$0xf]
  %v61 = vld [vmem:[%s0 + $0x58] sm:$0xf]
  %v62 = vld [vmem:[%s0 + $0x5c] sm:$0xf]
  %v63 = vld [vmem:[%s0 + $0x60] sm:$0xf]
  %v64 = vld [vmem:[%s0 + $0x64] sm:$0xf]
  %v65 = vld [vmem:[%s0 + $0x68] sm:$0xf]
  %v66 = vld [vmem:[%s0 + $0x6c] sm:$0xf]
  %v67 = vld [vmem:[%s0 + $0x70] sm:$0xf]
  %v68 = vld [vmem:[%s0 + $0x74] sm:$0xf]
  %v69 = vld [vmem:[%s0 + $0x78] sm:$0xf]
  %v70 = vld [vmem:[%s0 + $0x7c] sm:$0xf]
  %v71 = vld [vmem:[%s0 + $0x80] sm:$0xf]
  %v72 = vld [vmem:[%s0 + $0x84] sm:$0xf]
  %v73 = vld [vmem:[%s0 + $0x88] sm:$0xf]
  %v74 = vld [vmem:[%s0 + $0x8c] sm:$0xf]
  %v75 = vld [vmem:[%s0 + $0x90] sm:$0xf]
  %v76 = vld [vmem:[%s0 + $0x94] sm:$0xf]
  %v77 = vld [vmem:[%s0 + $0x98] sm:$0xf]
  %v78 = vld [vmem:[%s0 + $0x9c] sm:$0xf]
  %v79 = vld [vmem:[%s0 + $0xa0] sm:$0xf]
  %v80 = vld [vmem:[%s0 + $0xa4] sm:$0xf]
  %v81 = vld [vmem:[%s0 + $0xa8] sm:$0xf]
  %v82 = vld [vmem:[%s0 + $0xac] sm:$0xf]
  %v83 = vld [vmem:[%s0 + $0xb0] sm:$0xf]
  %v84 = vld [vmem:[%s0 + $0xb4] sm:$0xf]
  %v85 = vld [vmem:[%s0 + $0xb8] sm:$0xf]
  %v86 = vld [vmem:[%s0 + $0xbc] sm:$0xf]
  %v87 = vld [vmem:[%s0 + $0xc0] sm:$0xf]
  %v137 = vunpack.c.l.b16 %v39
  %v138 = vunpack.c.l.b16 %v40
  %v139 = vunpack.c.l.b16 %v41
  %v140 = vunpack.c.l.b16 %v42
  %v141 = vunpack.c.l.b16 %v43
  %v142 = vunpack.c.l.b16 %v44
  %v143 = vunpack.c.l.b16 %v45
  %v144 = vunpack.c.l.b16 %v46
  %v145 = vunpack.c.l.b16 %v47
  %v146 = vunpack.c.l.b16 %v48
  %v147 = vunpack.c.l.b16 %v49
  %v148 = vunpack.c.l.b16 %v50
  %v149 = vunpack.c.l.b16 %v51
  %v150 = vunpack.c.l.b16 %v52
  %v151 = vunpack.c.l.b16 %v53
  %v152 = vunpack.c.l.b16 %v54
  %v153 = vunpack.c.l.b16 %v55
  %v154 = vunpack.c.l.b16 %v56
  %v155 = vunpack.c.l.b16 %v57
  %v156 = vunpack.c.l.b16 %v58
  %v157 = vunpack.c.l.b16 %v59
  %v158 = vunpack.c.l.b16 %v60
  %v159 = vunpack.c.l.b16 %v61
  %v160 = vunpack.c.l.b16 %v62
  %v161 = vunpack.c.l.b16 %v63
  %v162 = vunpack.c.l.b16 %v64
  %v163 = vunpack.c.l.b16 %v65
  %v164 = vunpack.c.l.b16 %v66
  %v165 = vunpack.c.l.b16 %v67
  %v166 = vunpack.c.l.b16 %v68
  %v167 = vunpack.c.l.b16 %v69
  %v168 = vunpack.c.l.b16 %v70
  %v169 = vunpack.c.l.b16 %v71
  %v170 = vunpack.c.l.b16 %v72
  %v171 = vunpack.c.l.b16 %v73
  %v172 = vunpack.c.l.b16 %v74
  %v173 = vunpack.c.l.b16 %v75
  %v174 = vunpack.c.l.b16 %v76
  %v175 = vunpack.c.l.b16 %v77
  %v176 = vunpack.c.l.b16 %v78
  %v177 = vunpack.c.l.b16 %v79
  %v178 = vunpack.c.l.b16 %v80
  %v179 = vunpack.c.l.b16 %v81
  %v180 = vunpack.c.l.b16 %v82
  %v181 = vunpack.c.l.b16 %v83
  %v182 = vunpack.c.l.b16 %v84
  %v183 = vunpack.c.l.b16 %v85
  %v184 = vunpack.c.l.b16 %v86
  %v185 = vunpack.c.l.b16 %v87
  %v186 = vpack.c.b16 %v138, %v137
  %v187 = vpack.c.b16 %v140, %v139
  %v188 = vpack.c.b16 %v142, %v141
  %v189 = vpack.c.b16 %v144, %v143
  %v190 = vpack.c.b16 %v146, %v145
  %v191 = vpack.c.b16 %v148, %v147
  %v192 = vpack.c.b16 %v150, %v149
  %v193 = vpack.c.b16 %v152, %v151
  %v194 = vpack.c.b16 %v154, %v153
  %v195 = vpack.c.b16 %v156, %v155
  %v196 = vpack.c.b16 %v158, %v157
  %v197 = vpack.c.b16 %v160, %v159
  %v198 = vpack.c.b16 %v162, %v161
  %v199 = vpack.c.b16 %v164, %v163
  %v200 = vpack.c.b16 %v166, %v165
  %v201 = vpack.c.b16 %v168, %v167
  %v202 = vpack.c.b16 %v170, %v169
  %v203 = vpack.c.b16 %v172, %v171
  %v204 = vpack.c.b16 %v174, %v173
  %v205 = vpack.c.b16 %v176, %v175
  %v206 = vpack.c.b16 %v178, %v177
  %v207 = vpack.c.b16 %v180, %v179
  %v208 = vpack.c.b16 %v182, %v181
  %v209 = vpack.c.b16 %v184, %v183
  %v210 = vpack.c.b16 %v185, %v185
  %v252 = vunpack.c.l.b16 %v23
  %v253 = vunpack.c.l.b16 %v24
  %v254 = vunpack.c.l.b16 %v25
  %v255 = vunpack.c.l.b16 %v26
  %v256 = vunpack.c.l.b16 %v27
  %v257 = vunpack.c.l.b16 %v28
  %v258 = vunpack.c.l.b16 %v29
  %v259 = vunpack.c.l.b16 %v30
  %v260 = vunpack.c.l.b16 %v31
  %v261 = vunpack.c.l.b16 %v32
  %v262 = vunpack.c.l.b16 %v33
  %v263 = vunpack.c.l.b16 %v34
  %v264 = vunpack.c.l.b16 %v35
  %v265 = vunpack.c.l.b16 %v36
  %v266 = vunpack.c.l.b16 %v37
  %v267 = vunpack.c.l.b16 %v38
  %v268 = vpack.c.b16 %v253, %v252
  %v269 = vpack.c.b16 %v255, %v254
  %v270 = vpack.c.b16 %v257, %v256
  %v271 = vpack.c.b16 %v259, %v258
  %v272 = vpack.c.b16 %v261, %v260
  %v273 = vpack.c.b16 %v263, %v262
  %v274 = vpack.c.b16 %v265, %v264
  %v275 = vpack.c.b16 %v267, %v266
  %284 = vmatpush.bf16.msra.mxu0 %v275
  %285 = vmatpush.bf16.msra.mxu0 %v274
  %286 = vmatpush.bf16.msra.mxu0 %v273
  %287 = vmatpush.bf16.msra.mxu0 %v272
  %288 = vmatpush.bf16.msra.mxu0 %v271
  %289 = vmatpush.bf16.msra.mxu0 %v270
  %290 = vmatpush.bf16.msra.mxu0 %v269
  %291 = vmatpush.bf16.msra.mxu0 %v268
  %292 = vmatmul.bf16.gmra.mxu0 %v186
  %v293 = vpop.f32.mrf.mxu0
  %v294 = vadd.f32 0.0, %v293
  %v295 = vpop.f32.mrf.mxu0
  %v296 = vadd.f32 0.0, %v295
  %297 = vmatmul.bf16.gmra.mxu0 %v187
  %v298 = vpop.f32.mrf.mxu0
  %v299 = vadd.f32 0.0, %v298
  %v300 = vpop.f32.mrf.mxu0
  %v301 = vadd.f32 0.0, %v300
  %302 = vmatmul.bf16.gmra.mxu0 %v188
  %v303 = vpop.f32.mrf.mxu0
  %v304 = vadd.f32 0.0, %v303
  %v305 = vpop.f32.mrf.mxu0
  %v306 = vadd.f32 0.0, %v305
  %307 = vmatmul.bf16.gmra.mxu0 %v189
  %v308 = vpop.f32.mrf.mxu0
  %v309 = vadd.f32 0.0, %v308
  %v310 = vpop.f32.mrf.mxu0
  %v311 = vadd.f32 0.0, %v310
  %312 = vmatmul.bf16.gmra.mxu0 %v190
  %v313 = vpop.f32.mrf.mxu0
  %v314 = vadd.f32 0.0, %v313
  %v315 = vpop.f32.mrf.mxu0
  %v316 = vadd.f32 0.0, %v315
  %317 = vmatmul.bf16.gmra.mxu0 %v191
  %v318 = vpop.f32.mrf.mxu0
  %v319 = vadd.f32 0.0, %v318
  %v320 = vpop.f32.mrf.mxu0
  %v321 = vadd.f32 0.0, %v320
  %322 = vmatmul.bf16.gmra.mxu0 %v192
  %v323 = vpop.f32.mrf.mxu0
  %v324 = vadd.f32 0.0, %v323
  %v325 = vpop.f32.mrf.mxu0
  %v326 = vadd.f32 0.0, %v325
  %327 = vmatmul.bf16.gmra.mxu0 %v193
  %v328 = vpop.f32.mrf.mxu0
  %v329 = vadd.f32 0.0, %v328
  %v330 = vpop.f32.mrf.mxu0
  %v331 = vadd.f32 0.0, %v330
  %332 = vmatmul.bf16.gmra.mxu0 %v194
  %v333 = vpop.f32.mrf.mxu0
  %v334 = vadd.f32 0.0, %v333
  %v335 = vpop.f32.mrf.mxu0
  %v336 = vadd.f32 0.0, %v335
  %337 = vmatmul.bf16.gmra.mxu0 %v195
  %v338 = vpop.f32.mrf.mxu0
  %v339 = vadd.f32 0.0, %v338
  %v340 = vpop.f32.mrf.mxu0
  %v341 = vadd.f32 0.0, %v340
  %342 = vmatmul.bf16.gmra.mxu0 %v196
  %v343 = vpop.f32.mrf.mxu0
  %v344 = vadd.f32 0.0, %v343
  %v345 = vpop.f32.mrf.mxu0
  %v346 = vadd.f32 0.0, %v345
  %347 = vmatmul.bf16.gmra.mxu0 %v197
  %v348 = vpop.f32.mrf.mxu0
  %v349 = vadd.f32 0.0, %v348
  %v350 = vpop.f32.mrf.mxu0
  %v351 = vadd.f32 0.0, %v350
  %352 = vmatmul.bf16.gmra.mxu0 %v198
  %v353 = vpop.f32.mrf.mxu0
  %v354 = vadd.f32 0.0, %v353
  %v355 = vpop.f32.mrf.mxu0
  %v356 = vadd.f32 0.0, %v355
  %357 = vmatmul.bf16.gmra.mxu0 %v199
  %v358 = vpop.f32.mrf.mxu0
  %v359 = vadd.f32 0.0, %v358
  %v360 = vpop.f32.mrf.mxu0
  %v361 = vadd.f32 0.0, %v360
  %362 = vmatmul.bf16.gmra.mxu0 %v200
  %v363 = vpop.f32.mrf.mxu0
  %v364 = vadd.f32 0.0, %v363
  %v365 = vpop.f32.mrf.mxu0
  %v366 = vadd.f32 0.0, %v365
  %367 = vmatmul.bf16.gmra.mxu0 %v201
  %v368 = vpop.f32.mrf.mxu0
  %v369 = vadd.f32 0.0, %v368
  %v370 = vpop.f32.mrf.mxu0
  %v371 = vadd.f32 0.0, %v370
  %372 = vmatmul.bf16.gmra.mxu0 %v202
  %v373 = vpop.f32.mrf.mxu0
  %v374 = vadd.f32 0.0, %v373
  %v375 = vpop.f32.mrf.mxu0
  %v376 = vadd.f32 0.0, %v375
  %377 = vmatmul.bf16.gmra.mxu0 %v203
  %v378 = vpop.f32.mrf.mxu0
  %v379 = vadd.f32 0.0, %v378
  %v380 = vpop.f32.mrf.mxu0
  %v381 = vadd.f32 0.0, %v380
  %382 = vmatmul.bf16.gmra.mxu0 %v204
  %v383 = vpop.f32.mrf.mxu0
  %v384 = vadd.f32 0.0, %v383
  %v385 = vpop.f32.mrf.mxu0
  %v386 = vadd.f32 0.0, %v385
  %387 = vmatmul.bf16.gmra.mxu0 %v205
  %v388 = vpop.f32.mrf.mxu0
  %v389 = vadd.f32 0.0, %v388
  %v390 = vpop.f32.mrf.mxu0
  %v391 = vadd.f32 0.0, %v390
  %392 = vmatmul.bf16.gmra.mxu0 %v206
  %v393 = vpop.f32.mrf.mxu0
  %v394 = vadd.f32 0.0, %v393
  %v395 = vpop.f32.mrf.mxu0
  %v396 = vadd.f32 0.0, %v395
  %397 = vmatmul.bf16.gmra.mxu0 %v207
  %v398 = vpop.f32.mrf.mxu0
  %v399 = vadd.f32 0.0, %v398
  %v400 = vpop.f32.mrf.mxu0
  %v401 = vadd.f32 0.0, %v400
  %402 = vmatmul.bf16.gmra.mxu0 %v208
  %v403 = vpop.f32.mrf.mxu0
  %v404 = vadd.f32 0.0, %v403
  %v405 = vpop.f32.mrf.mxu0
  %v406 = vadd.f32 0.0, %v405
  %407 = vmatmul.bf16.gmra.mxu0 %v209
  %v408 = vpop.f32.mrf.mxu0
  %v409 = vadd.f32 0.0, %v408
  %v410 = vpop.f32.mrf.mxu0
  %v411 = vadd.f32 0.0, %v410
  %412 = vmatmul.bf16.gmra.mxu0 %v210
  %v413 = vpop.f32.mrf.mxu0
  %v414 = vadd.f32 0.0, %v413
  %v415 = vpop.f32.mrf.mxu0
  %416 = vdwg.mxu0
  %v417 = vld [vmem:[%s1] sm:$0xf]
  %v418 = vld [vmem:[%s1 + $0x4] sm:$0xf]
  %v419 = vld [vmem:[%s1 + $0x8] sm:$0xf]
  %v420 = vld [vmem:[%s1 + $0xc] sm:$0xf]
  %v421 = vld [vmem:[%s1 + $0x10] sm:$0xf]
  %v422 = vld [vmem:[%s1 + $0x14] sm:$0xf]
  %v423 = vld [vmem:[%s1 + $0x18] sm:$0xf]
  %v424 = vld [vmem:[%s1 + $0x1c] sm:$0xf]
  %v425 = vld [vmem:[%s1 + $0x20] sm:$0xf]
  %v426 = vld [vmem:[%s1 + $0x24] sm:$0xf]
  %v427 = vld [vmem:[%s1 + $0x28] sm:$0xf]
  %v428 = vld [vmem:[%s1 + $0x2c] sm:$0xf]
  %v429 = vld [vmem:[%s1 + $0x30] sm:$0xf]
  %v430 = vld [vmem:[%s1 + $0x34] sm:$0xf]
  %v431 = vld [vmem:[%s1 + $0x38] sm:$0xf]
  %v432 = vld [vmem:[%s1 + $0x3c] sm:$0xf]
  %v433 = vld [vmem:[%s1 + $0x40] sm:$0xf]
  %v434 = vld [vmem:[%s1 + $0x44] sm:$0xf]
  %v435 = vld [vmem:[%s1 + $0x48] sm:$0xf]
  %v436 = vld [vmem:[%s1 + $0x4c] sm:$0xf]
  %v437 = vld [vmem:[%s1 + $0x50] sm:$0xf]
  %v438 = vld [vmem:[%s1 + $0x54] sm:$0xf]
  %v439 = vld [vmem:[%s1 + $0x58] sm:$0xf]
  %v440 = vld [vmem:[%s1 + $0x5c] sm:$0xf]
  %v441 = vld [vmem:[%s1 + $0x60] sm:$0xf]
  %v442 = vld [vmem:[%s1 + $0x64] sm:$0xf]
  %v443 = vld [vmem:[%s1 + $0x68] sm:$0xf]
  %v444 = vld [vmem:[%s1 + $0x6c] sm:$0xf]
  %v445 = vld [vmem:[%s1 + $0x70] sm:$0xf]
  %v446 = vld [vmem:[%s1 + $0x74] sm:$0xf]
  %v447 = vld [vmem:[%s1 + $0x78] sm:$0xf]
  %v448 = vld [vmem:[%s1 + $0x7c] sm:$0xf]
  %v449 = vld [vmem:[%s1 + $0x80] sm:$0xf]
  %v450 = vld [vmem:[%s1 + $0x84] sm:$0xf]
  %v451 = vld [vmem:[%s1 + $0x88] sm:$0xf]
  %v452 = vld [vmem:[%s1 + $0x8c] sm:$0xf]
  %v453 = vld [vmem:[%s1 + $0x90] sm:$0xf]
  %v454 = vld [vmem:[%s1 + $0x94] sm:$0xf]
  %v455 = vld [vmem:[%s1 + $0x98] sm:$0xf]
  %v456 = vld [vmem:[%s1 + $0x9c] sm:$0xf]
  %v457 = vld [vmem:[%s1 + $0xa0] sm:$0xf]
  %v458 = vld [vmem:[%s1 + $0xa4] sm:$0xf]
  %v459 = vld [vmem:[%s1 + $0xa8] sm:$0xf]
  %v460 = vld [vmem:[%s1 + $0xac] sm:$0xf]
  %v461 = vld [vmem:[%s1 + $0xb0] sm:$0xf]
  %v462 = vld [vmem:[%s1 + $0xb4] sm:$0xf]
  %v463 = vld [vmem:[%s1 + $0xb8] sm:$0xf]
  %v464 = vld [vmem:[%s1 + $0xbc] sm:$0xf]
  %v465 = vld [vmem:[%s1 + $0xc0] sm:$0xf]
  %v515 = vunpack.c.l.b16 %v417
  %v516 = vunpack.c.l.b16 %v418
  %v517 = vunpack.c.l.b16 %v419
  %v518 = vunpack.c.l.b16 %v420
  %v519 = vunpack.c.l.b16 %v421
  %v520 = vunpack.c.l.b16 %v422
  %v521 = vunpack.c.l.b16 %v423
  %v522 = vunpack.c.l.b16 %v424
  %v523 = vunpack.c.l.b16 %v425
  %v524 = vunpack.c.l.b16 %v426
  %v525 = vunpack.c.l.b16 %v427
  %v526 = vunpack.c.l.b16 %v428
  %v527 = vunpack.c.l.b16 %v429
  %v528 = vunpack.c.l.b16 %v430
  %v529 = vunpack.c.l.b16 %v431
  %v530 = vunpack.c.l.b16 %v432
  %v531 = vunpack.c.l.b16 %v433
  %v532 = vunpack.c.l.b16 %v434
  %v533 = vunpack.c.l.b16 %v435
  %v534 = vunpack.c.l.b16 %v436
  %v535 = vunpack.c.l.b16 %v437
  %v536 = vunpack.c.l.b16 %v438
  %v537 = vunpack.c.l.b16 %v439
  %v538 = vunpack.c.l.b16 %v440
  %v539 = vunpack.c.l.b16 %v441
  %v540 = vunpack.c.l.b16 %v442
  %v541 = vunpack.c.l.b16 %v443
  %v542 = vunpack.c.l.b16 %v444
  %v543 = vunpack.c.l.b16 %v445
  %v544 = vunpack.c.l.b16 %v446
  %v545 = vunpack.c.l.b16 %v447
  %v546 = vunpack.c.l.b16 %v448
  %v547 = vunpack.c.l.b16 %v449
  %v548 = vunpack.c.l.b16 %v450
  %v549 = vunpack.c.l.b16 %v451
  %v550 = vunpack.c.l.b16 %v452
  %v551 = vunpack.c.l.b16 %v453
  %v552 = vunpack.c.l.b16 %v454
  %v553 = vunpack.c.l.b16 %v455
  %v554 = vunpack.c.l.b16 %v456
  %v555 = vunpack.c.l.b16 %v457
  %v556 = vunpack.c.l.b16 %v458
  %v557 = vunpack.c.l.b16 %v459
  %v558 = vunpack.c.l.b16 %v460
  %v559 = vunpack.c.l.b16 %v461
  %v560 = vunpack.c.l.b16 %v462
  %v561 = vunpack.c.l.b16 %v463
  %v562 = vunpack.c.l.b16 %v464
  %v563 = vunpack.c.l.b16 %v465
  %v564 = vpack.c.b16 %v516, %v515
  %v565 = vpack.c.b16 %v518, %v517
  %v566 = vpack.c.b16 %v520, %v519
  %v567 = vpack.c.b16 %v522, %v521
  %v568 = vpack.c.b16 %v524, %v523
  %v569 = vpack.c.b16 %v526, %v525
  %v570 = vpack.c.b16 %v528, %v527
  %v571 = vpack.c.b16 %v530, %v529
  %v572 = vpack.c.b16 %v532, %v531
  %v573 = vpack.c.b16 %v534, %v533
  %v574 = vpack.c.b16 %v536, %v535
  %v575 = vpack.c.b16 %v538, %v537
  %v576 = vpack.c.b16 %v540, %v539
  %v577 = vpack.c.b16 %v542, %v541
  %v578 = vpack.c.b16 %v544, %v543
  %v579 = vpack.c.b16 %v546, %v545
  %v580 = vpack.c.b16 %v548, %v547
  %v581 = vpack.c.b16 %v550, %v549
  %v582 = vpack.c.b16 %v552, %v551
  %v583 = vpack.c.b16 %v554, %v553
  %v584 = vpack.c.b16 %v556, %v555
  %v585 = vpack.c.b16 %v558, %v557
  %v586 = vpack.c.b16 %v560, %v559
  %v587 = vpack.c.b16 %v562, %v561
  %v588 = vpack.c.b16 %v563, %v563
  %614 = vmatpush.bf16.msra.mxu0 %v275
  %615 = vmatpush.bf16.msra.mxu0 %v274
  %616 = vmatpush.bf16.msra.mxu0 %v273
  %617 = vmatpush.bf16.msra.mxu0 %v272
  %618 = vmatpush.bf16.msra.mxu0 %v271
  %619 = vmatpush.bf16.msra.mxu0 %v270
  %620 = vmatpush.bf16.msra.mxu0 %v269
  %621 = vmatpush.bf16.msra.mxu0 %v268
  %622 = vmatmul.bf16.gmra.mxu0 %v564
  %v623 = vpop.f32.mrf.mxu0
  %v624 = vadd.f32 0.0, %v623
  %v625 = vpop.f32.mrf.mxu0
  %v626 = vadd.f32 0.0, %v625
  %627 = vmatmul.bf16.gmra.mxu0 %v565
  %v628 = vpop.f32.mrf.mxu0
  %v629 = vadd.f32 0.0, %v628
  %v630 = vpop.f32.mrf.mxu0
  %v631 = vadd.f32 0.0, %v630
  %632 = vmatmul.bf16.gmra.mxu0 %v566
  %v633 = vpop.f32.mrf.mxu0
  %v634 = vadd.f32 0.0, %v633
  %v635 = vpop.f32.mrf.mxu0
  %v636 = vadd.f32 0.0, %v635
  %637 = vmatmul.bf16.gmra.mxu0 %v567
  %v638 = vpop.f32.mrf.mxu0
  %v639 = vadd.f32 0.0, %v638
  %v640 = vpop.f32.mrf.mxu0
  %v641 = vadd.f32 0.0, %v640
  %642 = vmatmul.bf16.gmra.mxu0 %v568
  %v643 = vpop.f32.mrf.mxu0
  %v644 = vadd.f32 0.0, %v643
  %v645 = vpop.f32.mrf.mxu0
  %v646 = vadd.f32 0.0, %v645
  %647 = vmatmul.bf16.gmra.mxu0 %v569
  %v648 = vpop.f32.mrf.mxu0
  %v649 = vadd.f32 0.0, %v648
  %v650 = vpop.f32.mrf.mxu0
  %v651 = vadd.f32 0.0, %v650
  %652 = vmatmul.bf16.gmra.mxu0 %v570
  %v653 = vpop.f32.mrf.mxu0
  %v654 = vadd.f32 0.0, %v653
  %v655 = vpop.f32.mrf.mxu0
  %v656 = vadd.f32 0.0, %v655
  %657 = vmatmul.bf16.gmra.mxu0 %v571
  %v658 = vpop.f32.mrf.mxu0
  %v659 = vadd.f32 0.0, %v658
  %v660 = vpop.f32.mrf.mxu0
  %v661 = vadd.f32 0.0, %v660
  %662 = vmatmul.bf16.gmra.mxu0 %v572
  %v663 = vpop.f32.mrf.mxu0
  %v664 = vadd.f32 0.0, %v663
  %v665 = vpop.f32.mrf.mxu0
  %v666 = vadd.f32 0.0, %v665
  %667 = vmatmul.bf16.gmra.mxu0 %v573
  %v668 = vpop.f32.mrf.mxu0
  %v669 = vadd.f32 0.0, %v668
  %v670 = vpop.f32.mrf.mxu0
  %v671 = vadd.f32 0.0, %v670
  %672 = vmatmul.bf16.gmra.mxu0 %v574
  %v673 = vpop.f32.mrf.mxu0
  %v674 = vadd.f32 0.0, %v673
  %v675 = vpop.f32.mrf.mxu0
  %v676 = vadd.f32 0.0, %v675
  %677 = vmatmul.bf16.gmra.mxu0 %v575
  %v678 = vpop.f32.mrf.mxu0
  %v679 = vadd.f32 0.0, %v678
  %v680 = vpop.f32.mrf.mxu0
  %v681 = vadd.f32 0.0, %v680
  %682 = vmatmul.bf16.gmra.mxu0 %v576
  %v683 = vpop.f32.mrf.mxu0
  %v684 = vadd.f32 0.0, %v683
  %v685 = vpop.f32.mrf.mxu0
  %v686 = vadd.f32 0.0, %v685
  %687 = vmatmul.bf16.gmra.mxu0 %v577
  %v688 = vpop.f32.mrf.mxu0
  %v689 = vadd.f32 0.0, %v688
  %v690 = vpop.f32.mrf.mxu0
  %v691 = vadd.f32 0.0, %v690
  %692 = vmatmul.bf16.gmra.mxu0 %v578
  %v693 = vpop.f32.mrf.mxu0
  %v694 = vadd.f32 0.0, %v693
  %v695 = vpop.f32.mrf.mxu0
  %v696 = vadd.f32 0.0, %v695
  %697 = vmatmul.bf16.gmra.mxu0 %v579
  %v698 = vpop.f32.mrf.mxu0
  %v699 = vadd.f32 0.0, %v698
  %v700 = vpop.f32.mrf.mxu0
  %v701 = vadd.f32 0.0, %v700
  %702 = vmatmul.bf16.gmra.mxu0 %v580
  %v703 = vpop.f32.mrf.mxu0
  %v704 = vadd.f32 0.0, %v703
  %v705 = vpop.f32.mrf.mxu0
  %v706 = vadd.f32 0.0, %v705
  %707 = vmatmul.bf16.gmra.mxu0 %v581
  %v708 = vpop.f32.mrf.mxu0
  %v709 = vadd.f32 0.0, %v708
  %v710 = vpop.f32.mrf.mxu0
  %v711 = vadd.f32 0.0, %v710
  %712 = vmatmul.bf16.gmra.mxu0 %v582
  %v713 = vpop.f32.mrf.mxu0
  %v714 = vadd.f32 0.0, %v713
  %v715 = vpop.f32.mrf.mxu0
  %v716 = vadd.f32 0.0, %v715
  %717 = vmatmul.bf16.gmra.mxu0 %v583
  %v718 = vpop.f32.mrf.mxu0
  %v719 = vadd.f32 0.0, %v718
  %v720 = vpop.f32.mrf.mxu0
  %v721 = vadd.f32 0.0, %v720
  %722 = vmatmul.bf16.gmra.mxu0 %v584
  %v723 = vpop.f32.mrf.mxu0
  %v724 = vadd.f32 0.0, %v723
  %v725 = vpop.f32.mrf.mxu0
  %v726 = vadd.f32 0.0, %v725
  %727 = vmatmul.bf16.gmra.mxu0 %v585
  %v728 = vpop.f32.mrf.mxu0
  %v729 = vadd.f32 0.0, %v728
  %v730 = vpop.f32.mrf.mxu0
  %v731 = vadd.f32 0.0, %v730
  %732 = vmatmul.bf16.gmra.mxu0 %v586
  %v733 = vpop.f32.mrf.mxu0
  %v734 = vadd.f32 0.0, %v733
  %v735 = vpop.f32.mrf.mxu0
  %v736 = vadd.f32 0.0, %v735
  %737 = vmatmul.bf16.gmra.mxu0 %v587
  %v738 = vpop.f32.mrf.mxu0
  %v739 = vadd.f32 0.0, %v738
  %v740 = vpop.f32.mrf.mxu0
  %v741 = vadd.f32 0.0, %v740
  %742 = vmatmul.bf16.gmra.mxu0 %v588
  %v743 = vpop.f32.mrf.mxu0
  %v744 = vadd.f32 0.0, %v743
  %v745 = vpop.f32.mrf.mxu0
  %746 = vdwg.mxu0
  %v747 = vmax.f32 %v294, %v624
  %v748 = vmax.f32 %v296, %v626
  %v749 = vmax.f32 %v299, %v629
  %v750 = vmax.f32 %v301, %v631
  %v751 = vmax.f32 %v304, %v634
  %v752 = vmax.f32 %v306, %v636
  %v753 = vmax.f32 %v309, %v639
  %v754 = vmax.f32 %v311, %v641
  %v755 = vmax.f32 %v314, %v644
  %v756 = vmax.f32 %v316, %v646
  %v757 = vmax.f32 %v319, %v649
  %v758 = vmax.f32 %v321, %v651
  %v759 = vmax.f32 %v324, %v654
  %v760 = vmax.f32 %v326, %v656
  %v761 = vmax.f32 %v329, %v659
  %v762 = vmax.f32 %v331, %v661
  %v763 = vmax.f32 %v334, %v664
  %v764 = vmax.f32 %v336, %v666
  %v765 = vmax.f32 %v339, %v669
  %v766 = vmax.f32 %v341, %v671
  %v767 = vmax.f32 %v344, %v674
  %v768 = vmax.f32 %v346, %v676
  %v769 = vmax.f32 %v349, %v679
  %v770 = vmax.f32 %v351, %v681
  %v771 = vmax.f32 %v354, %v684
  %v772 = vmax.f32 %v356, %v686
  %v773 = vmax.f32 %v359, %v689
  %v774 = vmax.f32 %v361, %v691
  %v775 = vmax.f32 %v364, %v694
  %v776 = vmax.f32 %v366, %v696
  %v777 = vmax.f32 %v369, %v699
  %v778 = vmax.f32 %v371, %v701
  %v779 = vmax.f32 %v374, %v704
  %v780 = vmax.f32 %v376, %v706
  %v781 = vmax.f32 %v379, %v709
  %v782 = vmax.f32 %v381, %v711
  %v783 = vmax.f32 %v384, %v714
  %v784 = vmax.f32 %v386, %v716
  %v785 = vmax.f32 %v389, %v719
  %v786 = vmax.f32 %v391, %v721
  %v787 = vmax.f32 %v394, %v724
  %v788 = vmax.f32 %v396, %v726
  %v789 = vmax.f32 %v399, %v729
  %v790 = vmax.f32 %v401, %v731
  %v791 = vmax.f32 %v404, %v734
  %v792 = vmax.f32 %v406, %v736
  %v793 = vmax.f32 %v409, %v739
  %v794 = vmax.f32 %v411, %v741
  %v795 = vmax.f32 %v414, %v744
  %v796 = vld [vmem:[%s2] sm:$0xf]
  %v797 = vld [vmem:[%s2 + $0x4] sm:$0xf]
  %v798 = vld [vmem:[%s2 + $0x8] sm:$0xf]
  %v799 = vld [vmem:[%s2 + $0xc] sm:$0xf]
  %v800 = vld [vmem:[%s2 + $0x10] sm:$0xf]
  %v801 = vld [vmem:[%s2 + $0x14] sm:$0xf]
  %v802 = vld [vmem:[%s2 + $0x18] sm:$0xf]
  %v803 = vld [vmem:[%s2 + $0x1c] sm:$0xf]
  %v804 = vld [vmem:[%s2 + $0x20] sm:$0xf]
  %v805 = vld [vmem:[%s2 + $0x24] sm:$0xf]
  %v806 = vld [vmem:[%s2 + $0x28] sm:$0xf]
  %v807 = vld [vmem:[%s2 + $0x2c] sm:$0xf]
  %v808 = vld [vmem:[%s2 + $0x30] sm:$0xf]
  %v809 = vld [vmem:[%s2 + $0x34] sm:$0xf]
  %v810 = vld [vmem:[%s2 + $0x38] sm:$0xf]
  %v811 = vld [vmem:[%s2 + $0x3c] sm:$0xf]
  %v812 = vld [vmem:[%s2 + $0x40] sm:$0xf]
  %v813 = vld [vmem:[%s2 + $0x44] sm:$0xf]
  %v814 = vld [vmem:[%s2 + $0x48] sm:$0xf]
  %v815 = vld [vmem:[%s2 + $0x4c] sm:$0xf]
  %v816 = vld [vmem:[%s2 + $0x50] sm:$0xf]
  %v817 = vld [vmem:[%s2 + $0x54] sm:$0xf]
  %v818 = vld [vmem:[%s2 + $0x58] sm:$0xf]
  %v819 = vld [vmem:[%s2 + $0x5c] sm:$0xf]
  %v820 = vld [vmem:[%s2 + $0x60] sm:$0xf]
  %v821 = vld [vmem:[%s2 + $0x64] sm:$0xf]
  %v822 = vld [vmem:[%s2 + $0x68] sm:$0xf]
  %v823 = vld [vmem:[%s2 + $0x6c] sm:$0xf]
  %v824 = vld [vmem:[%s2 + $0x70] sm:$0xf]
  %v825 = vld [vmem:[%s2 + $0x74] sm:$0xf]
  %v826 = vld [vmem:[%s2 + $0x78] sm:$0xf]
  %v827 = vld [vmem:[%s2 + $0x7c] sm:$0xf]
  %v828 = vld [vmem:[%s2 + $0x80] sm:$0xf]
  %v829 = vld [vmem:[%s2 + $0x84] sm:$0xf]
  %v830 = vld [vmem:[%s2 + $0x88] sm:$0xf]
  %v831 = vld [vmem:[%s2 + $0x8c] sm:$0xf]
  %v832 = vld [vmem:[%s2 + $0x90] sm:$0xf]
  %v833 = vld [vmem:[%s2 + $0x94] sm:$0xf]
  %v834 = vld [vmem:[%s2 + $0x98] sm:$0xf]
  %v835 = vld [vmem:[%s2 + $0x9c] sm:$0xf]
  %v836 = vld [vmem:[%s2 + $0xa0] sm:$0xf]
  %v837 = vld [vmem:[%s2 + $0xa4] sm:$0xf]
  %v838 = vld [vmem:[%s2 + $0xa8] sm:$0xf]
  %v839 = vld [vmem:[%s2 + $0xac] sm:$0xf]
  %v840 = vld [vmem:[%s2 + $0xb0] sm:$0xf]
  %v841 = vld [vmem:[%s2 + $0xb4] sm:$0xf]
  %v842 = vld [vmem:[%s2 + $0xb8] sm:$0xf]
  %v843 = vld [vmem:[%s2 + $0xbc] sm:$0xf]
  %v844 = vld [vmem:[%s2 + $0xc0] sm:$0xf]
  %v894 = vunpack.c.l.b16 %v796
  %v895 = vunpack.c.l.b16 %v797
  %v896 = vunpack.c.l.b16 %v798
  %v897 = vunpack.c.l.b16 %v799
  %v898 = vunpack.c.l.b16 %v800
  %v899 = vunpack.c.l.b16 %v801
  %v900 = vunpack.c.l.b16 %v802
  %v901 = vunpack.c.l.b16 %v803
  %v902 = vunpack.c.l.b16 %v804
  %v903 = vunpack.c.l.b16 %v805
  %v904 = vunpack.c.l.b16 %v806
  %v905 = vunpack.c.l.b16 %v807
  %v906 = vunpack.c.l.b16 %v808
  %v907 = vunpack.c.l.b16 %v809
  %v908 = vunpack.c.l.b16 %v810
  %v909 = vunpack.c.l.b16 %v811
  %v910 = vunpack.c.l.b16 %v812
  %v911 = vunpack.c.l.b16 %v813
  %v912 = vunpack.c.l.b16 %v814
  %v913 = vunpack.c.l.b16 %v815
  %v914 = vunpack.c.l.b16 %v816
  %v915 = vunpack.c.l.b16 %v817
  %v916 = vunpack.c.l.b16 %v818
  %v917 = vunpack.c.l.b16 %v819
  %v918 = vunpack.c.l.b16 %v820
  %v919 = vunpack.c.l.b16 %v821
  %v920 = vunpack.c.l.b16 %v822
  %v921 = vunpack.c.l.b16 %v823
  %v922 = vunpack.c.l.b16 %v824
  %v923 = vunpack.c.l.b16 %v825
  %v924 = vunpack.c.l.b16 %v826
  %v925 = vunpack.c.l.b16 %v827
  %v926 = vunpack.c.l.b16 %v828
  %v927 = vunpack.c.l.b16 %v829
  %v928 = vunpack.c.l.b16 %v830
  %v929 = vunpack.c.l.b16 %v831
  %v930 = vunpack.c.l.b16 %v832
  %v931 = vunpack.c.l.b16 %v833
  %v932 = vunpack.c.l.b16 %v834
  %v933 = vunpack.c.l.b16 %v835
  %v934 = vunpack.c.l.b16 %v836
  %v935 = vunpack.c.l.b16 %v837
  %v936 = vunpack.c.l.b16 %v838
  %v937 = vunpack.c.l.b16 %v839
  %v938 = vunpack.c.l.b16 %v840
  %v939 = vunpack.c.l.b16 %v841
  %v940 = vunpack.c.l.b16 %v842
  %v941 = vunpack.c.l.b16 %v843
  %v942 = vunpack.c.l.b16 %v844
  %v943 = vpack.c.b16 %v895, %v894
  %v944 = vpack.c.b16 %v897, %v896
  %v945 = vpack.c.b16 %v899, %v898
  %v946 = vpack.c.b16 %v901, %v900
  %v947 = vpack.c.b16 %v903, %v902
  %v948 = vpack.c.b16 %v905, %v904
  %v949 = vpack.c.b16 %v907, %v906
  %v950 = vpack.c.b16 %v909, %v908
  %v951 = vpack.c.b16 %v911, %v910
  %v952 = vpack.c.b16 %v913, %v912
  %v953 = vpack.c.b16 %v915, %v914
  %v954 = vpack.c.b16 %v917, %v916
  %v955 = vpack.c.b16 %v919, %v918
  %v956 = vpack.c.b16 %v921, %v920
  %v957 = vpack.c.b16 %v923, %v922
  %v958 = vpack.c.b16 %v925, %v924
  %v959 = vpack.c.b16 %v927, %v926
  %v960 = vpack.c.b16 %v929, %v928
  %v961 = vpack.c.b16 %v931, %v930
  %v962 = vpack.c.b16 %v933, %v932
  %v963 = vpack.c.b16 %v935, %v934
  %v964 = vpack.c.b16 %v937, %v936
  %v965 = vpack.c.b16 %v939, %v938
  %v966 = vpack.c.b16 %v941, %v940
  %v967 = vpack.c.b16 %v942, %v942
  %993 = vmatpush.bf16.msra.mxu0 %v275
  %994 = vmatpush.bf16.msra.mxu0 %v274
  %995 = vmatpush.bf16.msra.mxu0 %v273
  %996 = vmatpush.bf16.msra.mxu0 %v272
  %997 = vmatpush.bf16.msra.mxu0 %v271
  %998 = vmatpush.bf16.msra.mxu0 %v270
  %999 = vmatpush.bf16.msra.mxu0 %v269
  %1000 = vmatpush.bf16.msra.mxu0 %v268
  %1001 = vmatmul.bf16.gmra.mxu0 %v943
  %v1002 = vpop.f32.mrf.mxu0
  %v1003 = vadd.f32 0.0, %v1002
  %v1004 = vpop.f32.mrf.mxu0
  %v1005 = vadd.f32 0.0, %v1004
  %1006 = vmatmul.bf16.gmra.mxu0 %v944
  %v1007 = vpop.f32.mrf.mxu0
  %v1008 = vadd.f32 0.0, %v1007
  %v1009 = vpop.f32.mrf.mxu0
  %v1010 = vadd.f32 0.0, %v1009
  %1011 = vmatmul.bf16.gmra.mxu0 %v945
  %v1012 = vpop.f32.mrf.mxu0
  %v1013 = vadd.f32 0.0, %v1012
  %v1014 = vpop.f32.mrf.mxu0
  %v1015 = vadd.f32 0.0, %v1014
  %1016 = vmatmul.bf16.gmra.mxu0 %v946
  %v1017 = vpop.f32.mrf.mxu0
  %v1018 = vadd.f32 0.0, %v1017
  %v1019 = vpop.f32.mrf.mxu0
  %v1020 = vadd.f32 0.0, %v1019
  %1021 = vmatmul.bf16.gmra.mxu0 %v947
  %v1022 = vpop.f32.mrf.mxu0
  %v1023 = vadd.f32 0.0, %v1022
  %v1024 = vpop.f32.mrf.mxu0
  %v1025 = vadd.f32 0.0, %v1024
  %1026 = vmatmul.bf16.gmra.mxu0 %v948
  %v1027 = vpop.f32.mrf.mxu0
  %v1028 = vadd.f32 0.0, %v1027
  %v1029 = vpop.f32.mrf.mxu0
  %v1030 = vadd.f32 0.0, %v1029
  %1031 = vmatmul.bf16.gmra.mxu0 %v949
  %v1032 = vpop.f32.mrf.mxu0
  %v1033 = vadd.f32 0.0, %v1032
  %v1034 = vpop.f32.mrf.mxu0
  %v1035 = vadd.f32 0.0, %v1034
  %1036 = vmatmul.bf16.gmra.mxu0 %v950
  %v1037 = vpop.f32.mrf.mxu0
  %v1038 = vadd.f32 0.0, %v1037
  %v1039 = vpop.f32.mrf.mxu0
  %v1040 = vadd.f32 0.0, %v1039
  %1041 = vmatmul.bf16.gmra.mxu0 %v951
  %v1042 = vpop.f32.mrf.mxu0
  %v1043 = vadd.f32 0.0, %v1042
  %v1044 = vpop.f32.mrf.mxu0
  %v1045 = vadd.f32 0.0, %v1044
  %1046 = vmatmul.bf16.gmra.mxu0 %v952
  %v1047 = vpop.f32.mrf.mxu0
  %v1048 = vadd.f32 0.0, %v1047
  %v1049 = vpop.f32.mrf.mxu0
  %v1050 = vadd.f32 0.0, %v1049
  %1051 = vmatmul.bf16.gmra.mxu0 %v953
  %v1052 = vpop.f32.mrf.mxu0
  %v1053 = vadd.f32 0.0, %v1052
  %v1054 = vpop.f32.mrf.mxu0
  %v1055 = vadd.f32 0.0, %v1054
  %1056 = vmatmul.bf16.gmra.mxu0 %v954
  %v1057 = vpop.f32.mrf.mxu0
  %v1058 = vadd.f32 0.0, %v1057
  %v1059 = vpop.f32.mrf.mxu0
  %v1060 = vadd.f32 0.0, %v1059
  %1061 = vmatmul.bf16.gmra.mxu0 %v955
  %v1062 = vpop.f32.mrf.mxu0
  %v1063 = vadd.f32 0.0, %v1062
  %v1064 = vpop.f32.mrf.mxu0
  %v1065 = vadd.f32 0.0, %v1064
  %1066 = vmatmul.bf16.gmra.mxu0 %v956
  %v1067 = vpop.f32.mrf.mxu0
  %v1068 = vadd.f32 0.0, %v1067
  %v1069 = vpop.f32.mrf.mxu0
  %v1070 = vadd.f32 0.0, %v1069
  %1071 = vmatmul.bf16.gmra.mxu0 %v957
  %v1072 = vpop.f32.mrf.mxu0
  %v1073 = vadd.f32 0.0, %v1072
  %v1074 = vpop.f32.mrf.mxu0
  %v1075 = vadd.f32 0.0, %v1074
  %1076 = vmatmul.bf16.gmra.mxu0 %v958
  %v1077 = vpop.f32.mrf.mxu0
  %v1078 = vadd.f32 0.0, %v1077
  %v1079 = vpop.f32.mrf.mxu0
  %v1080 = vadd.f32 0.0, %v1079
  %1081 = vmatmul.bf16.gmra.mxu0 %v959
  %v1082 = vpop.f32.mrf.mxu0
  %v1083 = vadd.f32 0.0, %v1082
  %v1084 = vpop.f32.mrf.mxu0
  %v1085 = vadd.f32 0.0, %v1084
  %1086 = vmatmul.bf16.gmra.mxu0 %v960
  %v1087 = vpop.f32.mrf.mxu0
  %v1088 = vadd.f32 0.0, %v1087
  %v1089 = vpop.f32.mrf.mxu0
  %v1090 = vadd.f32 0.0, %v1089
  %1091 = vmatmul.bf16.gmra.mxu0 %v961
  %v1092 = vpop.f32.mrf.mxu0
  %v1093 = vadd.f32 0.0, %v1092
  %v1094 = vpop.f32.mrf.mxu0
  %v1095 = vadd.f32 0.0, %v1094
  %1096 = vmatmul.bf16.gmra.mxu0 %v962
  %v1097 = vpop.f32.mrf.mxu0
  %v1098 = vadd.f32 0.0, %v1097
  %v1099 = vpop.f32.mrf.mxu0
  %v1100 = vadd.f32 0.0, %v1099
  %1101 = vmatmul.bf16.gmra.mxu0 %v963
  %v1102 = vpop.f32.mrf.mxu0
  %v1103 = vadd.f32 0.0, %v1102
  %v1104 = vpop.f32.mrf.mxu0
  %v1105 = vadd.f32 0.0, %v1104
  %1106 = vmatmul.bf16.gmra.mxu0 %v964
  %v1107 = vpop.f32.mrf.mxu0
  %v1108 = vadd.f32 0.0, %v1107
  %v1109 = vpop.f32.mrf.mxu0
  %v1110 = vadd.f32 0.0, %v1109
  %1111 = vmatmul.bf16.gmra.mxu0 %v965
  %v1112 = vpop.f32.mrf.mxu0
  %v1113 = vadd.f32 0.0, %v1112
  %v1114 = vpop.f32.mrf.mxu0
  %v1115 = vadd.f32 0.0, %v1114
  %1116 = vmatmul.bf16.gmra.mxu0 %v966
  %v1117 = vpop.f32.mrf.mxu0
  %v1118 = vadd.f32 0.0, %v1117
  %v1119 = vpop.f32.mrf.mxu0
  %v1120 = vadd.f32 0.0, %v1119
  %1121 = vmatmul.bf16.gmra.mxu0 %v967
  %v1122 = vpop.f32.mrf.mxu0
  %v1123 = vadd.f32 0.0, %v1122
  %v1124 = vpop.f32.mrf.mxu0
  %1125 = vdwg.mxu0
  %v1126 = vld [vmem:[%s3] sm:$0xf]
  %v1127 = vld [vmem:[%s3 + $0x4] sm:$0xf]
  %v1128 = vld [vmem:[%s3 + $0x8] sm:$0xf]
  %v1129 = vld [vmem:[%s3 + $0xc] sm:$0xf]
  %v1130 = vld [vmem:[%s3 + $0x10] sm:$0xf]
  %v1131 = vld [vmem:[%s3 + $0x14] sm:$0xf]
  %v1132 = vld [vmem:[%s3 + $0x18] sm:$0xf]
  %v1133 = vld [vmem:[%s3 + $0x1c] sm:$0xf]
  %v1134 = vld [vmem:[%s3 + $0x20] sm:$0xf]
  %v1135 = vld [vmem:[%s3 + $0x24] sm:$0xf]
  %v1136 = vld [vmem:[%s3 + $0x28] sm:$0xf]
  %v1137 = vld [vmem:[%s3 + $0x2c] sm:$0xf]
  %v1138 = vld [vmem:[%s3 + $0x30] sm:$0xf]
  %v1139 = vld [vmem:[%s3 + $0x34] sm:$0xf]
  %v1140 = vld [vmem:[%s3 + $0x38] sm:$0xf]
  %v1141 = vld [vmem:[%s3 + $0x3c] sm:$0xf]
  %v1142 = vld [vmem:[%s3 + $0x40] sm:$0xf]
  %v1143 = vld [vmem:[%s3 + $0x44] sm:$0xf]
  %v1144 = vld [vmem:[%s3 + $0x48] sm:$0xf]
  %v1145 = vld [vmem:[%s3 + $0x4c] sm:$0xf]
  %v1146 = vld [vmem:[%s3 + $0x50] sm:$0xf]
  %v1147 = vld [vmem:[%s3 + $0x54] sm:$0xf]
  %v1148 = vld [vmem:[%s3 + $0x58] sm:$0xf]
  %v1149 = vld [vmem:[%s3 + $0x5c] sm:$0xf]
  %v1150 = vld [vmem:[%s3 + $0x60] sm:$0xf]
  %v1151 = vld [vmem:[%s3 + $0x64] sm:$0xf]
  %v1152 = vld [vmem:[%s3 + $0x68] sm:$0xf]
  %v1153 = vld [vmem:[%s3 + $0x6c] sm:$0xf]
  %v1154 = vld [vmem:[%s3 + $0x70] sm:$0xf]
  %v1155 = vld [vmem:[%s3 + $0x74] sm:$0xf]
  %v1156 = vld [vmem:[%s3 + $0x78] sm:$0xf]
  %v1157 = vld [vmem:[%s3 + $0x7c] sm:$0xf]
  %v1158 = vld [vmem:[%s3 + $0x80] sm:$0xf]
  %v1159 = vld [vmem:[%s3 + $0x84] sm:$0xf]
  %v1160 = vld [vmem:[%s3 + $0x88] sm:$0xf]
  %v1161 = vld [vmem:[%s3 + $0x8c] sm:$0xf]
  %v1162 = vld [vmem:[%s3 + $0x90] sm:$0xf]
  %v1163 = vld [vmem:[%s3 + $0x94] sm:$0xf]
  %v1164 = vld [vmem:[%s3 + $0x98] sm:$0xf]
  %v1165 = vld [vmem:[%s3 + $0x9c] sm:$0xf]
  %v1166 = vld [vmem:[%s3 + $0xa0] sm:$0xf]
  %v1167 = vld [vmem:[%s3 + $0xa4] sm:$0xf]
  %v1168 = vld [vmem:[%s3 + $0xa8] sm:$0xf]
  %v1169 = vld [vmem:[%s3 + $0xac] sm:$0xf]
  %v1170 = vld [vmem:[%s3 + $0xb0] sm:$0xf]
  %v1171 = vld [vmem:[%s3 + $0xb4] sm:$0xf]
  %v1172 = vld [vmem:[%s3 + $0xb8] sm:$0xf]
  %v1173 = vld [vmem:[%s3 + $0xbc] sm:$0xf]
  %v1174 = vld [vmem:[%s3 + $0xc0] sm:$0xf]
  %v1224 = vunpack.c.l.b16 %v1126
  %v1225 = vunpack.c.l.b16 %v1127
  %v1226 = vunpack.c.l.b16 %v1128
  %v1227 = vunpack.c.l.b16 %v1129
  %v1228 = vunpack.c.l.b16 %v1130
  %v1229 = vunpack.c.l.b16 %v1131
  %v1230 = vunpack.c.l.b16 %v1132
  %v1231 = vunpack.c.l.b16 %v1133
  %v1232 = vunpack.c.l.b16 %v1134
  %v1233 = vunpack.c.l.b16 %v1135
  %v1234 = vunpack.c.l.b16 %v1136
  %v1235 = vunpack.c.l.b16 %v1137
  %v1236 = vunpack.c.l.b16 %v1138
  %v1237 = vunpack.c.l.b16 %v1139
  %v1238 = vunpack.c.l.b16 %v1140
  %v1239 = vunpack.c.l.b16 %v1141
  %v1240 = vunpack.c.l.b16 %v1142
  %v1241 = vunpack.c.l.b16 %v1143
  %v1242 = vunpack.c.l.b16 %v1144
  %v1243 = vunpack.c.l.b16 %v1145
  %v1244 = vunpack.c.l.b16 %v1146
  %v1245 = vunpack.c.l.b16 %v1147
  %v1246 = vunpack.c.l.b16 %v1148
  %v1247 = vunpack.c.l.b16 %v1149
  %v1248 = vunpack.c.l.b16 %v1150
  %v1249 = vunpack.c.l.b16 %v1151
  %v1250 = vunpack.c.l.b16 %v1152
  %v1251 = vunpack.c.l.b16 %v1153
  %v1252 = vunpack.c.l.b16 %v1154
  %v1253 = vunpack.c.l.b16 %v1155
  %v1254 = vunpack.c.l.b16 %v1156
  %v1255 = vunpack.c.l.b16 %v1157
  %v1256 = vunpack.c.l.b16 %v1158
  %v1257 = vunpack.c.l.b16 %v1159
  %v1258 = vunpack.c.l.b16 %v1160
  %v1259 = vunpack.c.l.b16 %v1161
  %v1260 = vunpack.c.l.b16 %v1162
  %v1261 = vunpack.c.l.b16 %v1163
  %v1262 = vunpack.c.l.b16 %v1164
  %v1263 = vunpack.c.l.b16 %v1165
  %v1264 = vunpack.c.l.b16 %v1166
  %v1265 = vunpack.c.l.b16 %v1167
  %v1266 = vunpack.c.l.b16 %v1168
  %v1267 = vunpack.c.l.b16 %v1169
  %v1268 = vunpack.c.l.b16 %v1170
  %v1269 = vunpack.c.l.b16 %v1171
  %v1270 = vunpack.c.l.b16 %v1172
  %v1271 = vunpack.c.l.b16 %v1173
  %v1272 = vunpack.c.l.b16 %v1174
  %v1273 = vpack.c.b16 %v1225, %v1224
  %v1274 = vpack.c.b16 %v1227, %v1226
  %v1275 = vpack.c.b16 %v1229, %v1228
  %v1276 = vpack.c.b16 %v1231, %v1230
  %v1277 = vpack.c.b16 %v1233, %v1232
  %v1278 = vpack.c.b16 %v1235, %v1234
  %v1279 = vpack.c.b16 %v1237, %v1236
  %v1280 = vpack.c.b16 %v1239, %v1238
  %v1281 = vpack.c.b16 %v1241, %v1240
  %v1282 = vpack.c.b16 %v1243, %v1242
  %v1283 = vpack.c.b16 %v1245, %v1244
  %v1284 = vpack.c.b16 %v1247, %v1246
  %v1285 = vpack.c.b16 %v1249, %v1248
  %v1286 = vpack.c.b16 %v1251, %v1250
  %v1287 = vpack.c.b16 %v1253, %v1252
  %v1288 = vpack.c.b16 %v1255, %v1254
  %v1289 = vpack.c.b16 %v1257, %v1256
  %v1290 = vpack.c.b16 %v1259, %v1258
  %v1291 = vpack.c.b16 %v1261, %v1260
  %v1292 = vpack.c.b16 %v1263, %v1262
  %v1293 = vpack.c.b16 %v1265, %v1264
  %v1294 = vpack.c.b16 %v1267, %v1266
  %v1295 = vpack.c.b16 %v1269, %v1268
  %v1296 = vpack.c.b16 %v1271, %v1270
  %v1297 = vpack.c.b16 %v1272, %v1272
  %1323 = vmatpush.bf16.msra.mxu0 %v275
  %1324 = vmatpush.bf16.msra.mxu0 %v274
  %1325 = vmatpush.bf16.msra.mxu0 %v273
  %1326 = vmatpush.bf16.msra.mxu0 %v272
  %1327 = vmatpush.bf16.msra.mxu0 %v271
  %1328 = vmatpush.bf16.msra.mxu0 %v270
  %1329 = vmatpush.bf16.msra.mxu0 %v269
  %1330 = vmatpush.bf16.msra.mxu0 %v268
  %1331 = vmatmul.bf16.gmra.mxu0 %v1273
  %v1332 = vpop.f32.mrf.mxu0
  %v1333 = vadd.f32 0.0, %v1332
  %v1334 = vpop.f32.mrf.mxu0
  %v1335 = vadd.f32 0.0, %v1334
  %1336 = vmatmul.bf16.gmra.mxu0 %v1274
  %v1337 = vpop.f32.mrf.mxu0
  %v1338 = vadd.f32 0.0, %v1337
  %v1339 = vpop.f32.mrf.mxu0
  %v1340 = vadd.f32 0.0, %v1339
  %1341 = vmatmul.bf16.gmra.mxu0 %v1275
  %v1342 = vpop.f32.mrf.mxu0
  %v1343 = vadd.f32 0.0, %v1342
  %v1344 = vpop.f32.mrf.mxu0
  %v1345 = vadd.f32 0.0, %v1344
  %1346 = vmatmul.bf16.gmra.mxu0 %v1276
  %v1347 = vpop.f32.mrf.mxu0
  %v1348 = vadd.f32 0.0, %v1347
  %v1349 = vpop.f32.mrf.mxu0
  %v1350 = vadd.f32 0.0, %v1349
  %1351 = vmatmul.bf16.gmra.mxu0 %v1277
  %v1352 = vpop.f32.mrf.mxu0
  %v1353 = vadd.f32 0.0, %v1352
  %v1354 = vpop.f32.mrf.mxu0
  %v1355 = vadd.f32 0.0, %v1354
  %1356 = vmatmul.bf16.gmra.mxu0 %v1278
  %v1357 = vpop.f32.mrf.mxu0
  %v1358 = vadd.f32 0.0, %v1357
  %v1359 = vpop.f32.mrf.mxu0
  %v1360 = vadd.f32 0.0, %v1359
  %1361 = vmatmul.bf16.gmra.mxu0 %v1279
  %v1362 = vpop.f32.mrf.mxu0
  %v1363 = vadd.f32 0.0, %v1362
  %v1364 = vpop.f32.mrf.mxu0
  %v1365 = vadd.f32 0.0, %v1364
  %1366 = vmatmul.bf16.gmra.mxu0 %v1280
  %v1367 = vpop.f32.mrf.mxu0
  %v1368 = vadd.f32 0.0, %v1367
  %v1369 = vpop.f32.mrf.mxu0
  %v1370 = vadd.f32 0.0, %v1369
  %1371 = vmatmul.bf16.gmra.mxu0 %v1281
  %v1372 = vpop.f32.mrf.mxu0
  %v1373 = vadd.f32 0.0, %v1372
  %v1374 = vpop.f32.mrf.mxu0
  %v1375 = vadd.f32 0.0, %v1374
  %1376 = vmatmul.bf16.gmra.mxu0 %v1282
  %v1377 = vpop.f32.mrf.mxu0
  %v1378 = vadd.f32 0.0, %v1377
  %v1379 = vpop.f32.mrf.mxu0
  %v1380 = vadd.f32 0.0, %v1379
  %1381 = vmatmul.bf16.gmra.mxu0 %v1283
  %v1382 = vpop.f32.mrf.mxu0
  %v1383 = vadd.f32 0.0, %v1382
  %v1384 = vpop.f32.mrf.mxu0
  %v1385 = vadd.f32 0.0, %v1384
  %1386 = vmatmul.bf16.gmra.mxu0 %v1284
  %v1387 = vpop.f32.mrf.mxu0
  %v1388 = vadd.f32 0.0, %v1387
  %v1389 = vpop.f32.mrf.mxu0
  %v1390 = vadd.f32 0.0, %v1389
  %1391 = vmatmul.bf16.gmra.mxu0 %v1285
  %v1392 = vpop.f32.mrf.mxu0
  %v1393 = vadd.f32 0.0, %v1392
  %v1394 = vpop.f32.mrf.mxu0
  %v1395 = vadd.f32 0.0, %v1394
  %1396 = vmatmul.bf16.gmra.mxu0 %v1286
  %v1397 = vpop.f32.mrf.mxu0
  %v1398 = vadd.f32 0.0, %v1397
  %v1399 = vpop.f32.mrf.mxu0
  %v1400 = vadd.f32 0.0, %v1399
  %1401 = vmatmul.bf16.gmra.mxu0 %v1287
  %v1402 = vpop.f32.mrf.mxu0
  %v1403 = vadd.f32 0.0, %v1402
  %v1404 = vpop.f32.mrf.mxu0
  %v1405 = vadd.f32 0.0, %v1404
  %1406 = vmatmul.bf16.gmra.mxu0 %v1288
  %v1407 = vpop.f32.mrf.mxu0
  %v1408 = vadd.f32 0.0, %v1407
  %v1409 = vpop.f32.mrf.mxu0
  %v1410 = vadd.f32 0.0, %v1409
  %1411 = vmatmul.bf16.gmra.mxu0 %v1289
  %v1412 = vpop.f32.mrf.mxu0
  %v1413 = vadd.f32 0.0, %v1412
  %v1414 = vpop.f32.mrf.mxu0
  %v1415 = vadd.f32 0.0, %v1414
  %1416 = vmatmul.bf16.gmra.mxu0 %v1290
  %v1417 = vpop.f32.mrf.mxu0
  %v1418 = vadd.f32 0.0, %v1417
  %v1419 = vpop.f32.mrf.mxu0
  %v1420 = vadd.f32 0.0, %v1419
  %1421 = vmatmul.bf16.gmra.mxu0 %v1291
  %v1422 = vpop.f32.mrf.mxu0
  %v1423 = vadd.f32 0.0, %v1422
  %v1424 = vpop.f32.mrf.mxu0
  %v1425 = vadd.f32 0.0, %v1424
  %1426 = vmatmul.bf16.gmra.mxu0 %v1292
  %v1427 = vpop.f32.mrf.mxu0
  %v1428 = vadd.f32 0.0, %v1427
  %v1429 = vpop.f32.mrf.mxu0
  %v1430 = vadd.f32 0.0, %v1429
  %1431 = vmatmul.bf16.gmra.mxu0 %v1293
  %v1432 = vpop.f32.mrf.mxu0
  %v1433 = vadd.f32 0.0, %v1432
  %v1434 = vpop.f32.mrf.mxu0
  %v1435 = vadd.f32 0.0, %v1434
  %1436 = vmatmul.bf16.gmra.mxu0 %v1294
  %v1437 = vpop.f32.mrf.mxu0
  %v1438 = vadd.f32 0.0, %v1437
  %v1439 = vpop.f32.mrf.mxu0
  %v1440 = vadd.f32 0.0, %v1439
  %1441 = vmatmul.bf16.gmra.mxu0 %v1295
  %v1442 = vpop.f32.mrf.mxu0
  %v1443 = vadd.f32 0.0, %v1442
  %v1444 = vpop.f32.mrf.mxu0
  %v1445 = vadd.f32 0.0, %v1444
  %1446 = vmatmul.bf16.gmra.mxu0 %v1296
  %v1447 = vpop.f32.mrf.mxu0
  %v1448 = vadd.f32 0.0, %v1447
  %v1449 = vpop.f32.mrf.mxu0
  %v1450 = vadd.f32 0.0, %v1449
  %1451 = vmatmul.bf16.gmra.mxu0 %v1297
  %v1452 = vpop.f32.mrf.mxu0
  %v1453 = vadd.f32 0.0, %v1452
  %v1454 = vpop.f32.mrf.mxu0
  %1455 = vdwg.mxu0
  %v1456 = vmax.f32 %v1003, %v1333
  %v1457 = vmax.f32 %v1005, %v1335
  %v1458 = vmax.f32 %v1008, %v1338
  %v1459 = vmax.f32 %v1010, %v1340
  %v1460 = vmax.f32 %v1013, %v1343
  %v1461 = vmax.f32 %v1015, %v1345
  %v1462 = vmax.f32 %v1018, %v1348
  %v1463 = vmax.f32 %v1020, %v1350
  %v1464 = vmax.f32 %v1023, %v1353
  %v1465 = vmax.f32 %v1025, %v1355
  %v1466 = vmax.f32 %v1028, %v1358
  %v1467 = vmax.f32 %v1030, %v1360
  %v1468 = vmax.f32 %v1033, %v1363
  %v1469 = vmax.f32 %v1035, %v1365
  %v1470 = vmax.f32 %v1038, %v1368
  %v1471 = vmax.f32 %v1040, %v1370
  %v1472 = vmax.f32 %v1043, %v1373
  %v1473 = vmax.f32 %v1045, %v1375
  %v1474 = vmax.f32 %v1048, %v1378
  %v1475 = vmax.f32 %v1050, %v1380
  %v1476 = vmax.f32 %v1053, %v1383
  %v1477 = vmax.f32 %v1055, %v1385
  %v1478 = vmax.f32 %v1058, %v1388
  %v1479 = vmax.f32 %v1060, %v1390
  %v1480 = vmax.f32 %v1063, %v1393
  %v1481 = vmax.f32 %v1065, %v1395
  %v1482 = vmax.f32 %v1068, %v1398
  %v1483 = vmax.f32 %v1070, %v1400
  %v1484 = vmax.f32 %v1073, %v1403
  %v1485 = vmax.f32 %v1075, %v1405
  %v1486 = vmax.f32 %v1078, %v1408
  %v1487 = vmax.f32 %v1080, %v1410
  %v1488 = vmax.f32 %v1083, %v1413
  %v1489 = vmax.f32 %v1085, %v1415
  %v1490 = vmax.f32 %v1088, %v1418
  %v1491 = vmax.f32 %v1090, %v1420
  %v1492 = vmax.f32 %v1093, %v1423
  %v1493 = vmax.f32 %v1095, %v1425
  %v1494 = vmax.f32 %v1098, %v1428
  %v1495 = vmax.f32 %v1100, %v1430
  %v1496 = vmax.f32 %v1103, %v1433
  %v1497 = vmax.f32 %v1105, %v1435
  %v1498 = vmax.f32 %v1108, %v1438
  %v1499 = vmax.f32 %v1110, %v1440
  %v1500 = vmax.f32 %v1113, %v1443
  %v1501 = vmax.f32 %v1115, %v1445
  %v1502 = vmax.f32 %v1118, %v1448
  %v1503 = vmax.f32 %v1120, %v1450
  %v1504 = vmax.f32 %v1123, %v1453
  %v1505 = vmax.f32 %v747, %v1456
  %v1506 = vmax.f32 %v748, %v1457
  %v1507 = vmax.f32 %v749, %v1458
  %v1508 = vmax.f32 %v750, %v1459
  %v1509 = vmax.f32 %v751, %v1460
  %v1510 = vmax.f32 %v752, %v1461
  %v1511 = vmax.f32 %v753, %v1462
  %v1512 = vmax.f32 %v754, %v1463
  %v1513 = vmax.f32 %v755, %v1464
  %v1514 = vmax.f32 %v756, %v1465
  %v1515 = vmax.f32 %v757, %v1466
  %v1516 = vmax.f32 %v758, %v1467
  %v1517 = vmax.f32 %v759, %v1468
  %v1518 = vmax.f32 %v760, %v1469
  %v1519 = vmax.f32 %v761, %v1470
  %v1520 = vmax.f32 %v762, %v1471
  %v1521 = vmax.f32 %v763, %v1472
  %v1522 = vmax.f32 %v764, %v1473
  %v1523 = vmax.f32 %v765, %v1474
  %v1524 = vmax.f32 %v766, %v1475
  %v1525 = vmax.f32 %v767, %v1476
  %v1526 = vmax.f32 %v768, %v1477
  %v1527 = vmax.f32 %v769, %v1478
  %v1528 = vmax.f32 %v770, %v1479
  %v1529 = vmax.f32 %v771, %v1480
  %v1530 = vmax.f32 %v772, %v1481
  %v1531 = vmax.f32 %v773, %v1482
  %v1532 = vmax.f32 %v774, %v1483
  %v1533 = vmax.f32 %v775, %v1484
  %v1534 = vmax.f32 %v776, %v1485
  %v1535 = vmax.f32 %v777, %v1486
  %v1536 = vmax.f32 %v778, %v1487
  %v1537 = vmax.f32 %v779, %v1488
  %v1538 = vmax.f32 %v780, %v1489
  %v1539 = vmax.f32 %v781, %v1490
  %v1540 = vmax.f32 %v782, %v1491
  %v1541 = vmax.f32 %v783, %v1492
  %v1542 = vmax.f32 %v784, %v1493
  %v1543 = vmax.f32 %v785, %v1494
  %v1544 = vmax.f32 %v786, %v1495
  %v1545 = vmax.f32 %v787, %v1496
  %v1546 = vmax.f32 %v788, %v1497
  %v1547 = vmax.f32 %v789, %v1498
  %v1548 = vmax.f32 %v790, %v1499
  %v1549 = vmax.f32 %v791, %v1500
  %v1550 = vmax.f32 %v792, %v1501
  %v1551 = vmax.f32 %v793, %v1502
  %v1552 = vmax.f32 %v794, %v1503
  %v1553 = vmax.f32 %v795, %v1504
  %v1554 = vld [vmem:[%s5] sm:$0x1]
  %v1556 = vperm.slane %v1554, 0
  %v1558 = vadd.f32 %v1505, %v1556
  %v1559 = vadd.f32 %v1506, %v1556
  %v1560 = vadd.f32 %v1507, %v1556
  %v1561 = vadd.f32 %v1508, %v1556
  %v1562 = vadd.f32 %v1509, %v1556
  %v1563 = vadd.f32 %v1510, %v1556
  %v1564 = vadd.f32 %v1511, %v1556
  %v1565 = vadd.f32 %v1512, %v1556
  %v1566 = vadd.f32 %v1513, %v1556
  %v1567 = vadd.f32 %v1514, %v1556
  %v1568 = vadd.f32 %v1515, %v1556
  %v1569 = vadd.f32 %v1516, %v1556
  %v1570 = vadd.f32 %v1517, %v1556
  %v1571 = vadd.f32 %v1518, %v1556
  %v1572 = vadd.f32 %v1519, %v1556
  %v1573 = vadd.f32 %v1520, %v1556
  %v1574 = vadd.f32 %v1521, %v1556
  %v1575 = vadd.f32 %v1522, %v1556
  %v1576 = vadd.f32 %v1523, %v1556
  %v1577 = vadd.f32 %v1524, %v1556
  %v1578 = vadd.f32 %v1525, %v1556
  %v1579 = vadd.f32 %v1526, %v1556
  %v1580 = vadd.f32 %v1527, %v1556
  %v1581 = vadd.f32 %v1528, %v1556
  %v1582 = vadd.f32 %v1529, %v1556
  %v1583 = vadd.f32 %v1530, %v1556
  %v1584 = vadd.f32 %v1531, %v1556
  %v1585 = vadd.f32 %v1532, %v1556
  %v1586 = vadd.f32 %v1533, %v1556
  %v1587 = vadd.f32 %v1534, %v1556
  %v1588 = vadd.f32 %v1535, %v1556
  %v1589 = vadd.f32 %v1536, %v1556
  %v1590 = vadd.f32 %v1537, %v1556
  %v1591 = vadd.f32 %v1538, %v1556
  %v1592 = vadd.f32 %v1539, %v1556
  %v1593 = vadd.f32 %v1540, %v1556
  %v1594 = vadd.f32 %v1541, %v1556
  %v1595 = vadd.f32 %v1542, %v1556
  %v1596 = vadd.f32 %v1543, %v1556
  %v1597 = vadd.f32 %v1544, %v1556
  %v1598 = vadd.f32 %v1545, %v1556
  %v1599 = vadd.f32 %v1546, %v1556
  %v1600 = vadd.f32 %v1547, %v1556
  %v1601 = vadd.f32 %v1548, %v1556
  %v1602 = vadd.f32 %v1549, %v1556
  %v1603 = vadd.f32 %v1550, %v1556
  %v1604 = vadd.f32 %v1551, %v1556
  %v1605 = vadd.f32 %v1552, %v1556
  %v1606 = vadd.f32 %v1553, %v1556
  %v1607 = vmax.f32 %v1558, 0.0
  %v1608 = vmax.f32 %v1559, 0.0
  %v1609 = vmax.f32 %v1560, 0.0
  %v1610 = vmax.f32 %v1561, 0.0
  %v1611 = vmax.f32 %v1562, 0.0
  %v1612 = vmax.f32 %v1563, 0.0
  %v1613 = vmax.f32 %v1564, 0.0
  %v1614 = vmax.f32 %v1565, 0.0
  %v1615 = vmax.f32 %v1566, 0.0
  %v1616 = vmax.f32 %v1567, 0.0
  %v1617 = vmax.f32 %v1568, 0.0
  %v1618 = vmax.f32 %v1569, 0.0
  %v1619 = vmax.f32 %v1570, 0.0
  %v1620 = vmax.f32 %v1571, 0.0
  %v1621 = vmax.f32 %v1572, 0.0
  %v1622 = vmax.f32 %v1573, 0.0
  %v1623 = vmax.f32 %v1574, 0.0
  %v1624 = vmax.f32 %v1575, 0.0
  %v1625 = vmax.f32 %v1576, 0.0
  %v1626 = vmax.f32 %v1577, 0.0
  %v1627 = vmax.f32 %v1578, 0.0
  %v1628 = vmax.f32 %v1579, 0.0
  %v1629 = vmax.f32 %v1580, 0.0
  %v1630 = vmax.f32 %v1581, 0.0
  %v1631 = vmax.f32 %v1582, 0.0
  %v1632 = vmax.f32 %v1583, 0.0
  %v1633 = vmax.f32 %v1584, 0.0
  %v1634 = vmax.f32 %v1585, 0.0
  %v1635 = vmax.f32 %v1586, 0.0
  %v1636 = vmax.f32 %v1587, 0.0
  %v1637 = vmax.f32 %v1588, 0.0
  %v1638 = vmax.f32 %v1589, 0.0
  %v1639 = vmax.f32 %v1590, 0.0
  %v1640 = vmax.f32 %v1591, 0.0
  %v1641 = vmax.f32 %v1592, 0.0
  %v1642 = vmax.f32 %v1593, 0.0
  %v1643 = vmax.f32 %v1594, 0.0
  %v1644 = vmax.f32 %v1595, 0.0
  %v1645 = vmax.f32 %v1596, 0.0
  %v1646 = vmax.f32 %v1597, 0.0
  %v1647 = vmax.f32 %v1598, 0.0
  %v1648 = vmax.f32 %v1599, 0.0
  %v1649 = vmax.f32 %v1600, 0.0
  %v1650 = vmax.f32 %v1601, 0.0
  %v1651 = vmax.f32 %v1602, 0.0
  %v1652 = vmax.f32 %v1603, 0.0
  %v1653 = vmax.f32 %v1604, 0.0
  %v1654 = vmax.f32 %v1605, 0.0
  %v1655 = vmax.f32 %v1606, 0.0
  %v1656 = vpack.c.bf16 %v1607, %v1607
  %v1657 = vpack.c.bf16 %v1608, %v1608
  %v1658 = vpack.c.bf16 %v1609, %v1609
  %v1659 = vpack.c.bf16 %v1610, %v1610
  %v1660 = vpack.c.bf16 %v1611, %v1611
  %v1661 = vpack.c.bf16 %v1612, %v1612
  %v1662 = vpack.c.bf16 %v1613, %v1613
  %v1663 = vpack.c.bf16 %v1614, %v1614
  %v1664 = vpack.c.bf16 %v1615, %v1615
  %v1665 = vpack.c.bf16 %v1616, %v1616
  %v1666 = vpack.c.bf16 %v1617, %v1617
  %v1667 = vpack.c.bf16 %v1618, %v1618
  %v1668 = vpack.c.bf16 %v1619, %v1619
  %v1669 = vpack.c.bf16 %v1620, %v1620
  %v1670 = vpack.c.bf16 %v1621, %v1621
  %v1671 = vpack.c.bf16 %v1622, %v1622
  %v1672 = vpack.c.bf16 %v1623, %v1623
  %v1673 = vpack.c.bf16 %v1624, %v1624
  %v1674 = vpack.c.bf16 %v1625, %v1625
  %v1675 = vpack.c.bf16 %v1626, %v1626
  %v1676 = vpack.c.bf16 %v1627, %v1627
  %v1677 = vpack.c.bf16 %v1628, %v1628
  %v1678 = vpack.c.bf16 %v1629, %v1629
  %v1679 = vpack.c.bf16 %v1630, %v1630
  %v1680 = vpack.c.bf16 %v1631, %v1631
  %v1681 = vpack.c.bf16 %v1632, %v1632
  %v1682 = vpack.c.bf16 %v1633, %v1633
  %v1683 = vpack.c.bf16 %v1634, %v1634
  %v1684 = vpack.c.bf16 %v1635, %v1635
  %v1685 = vpack.c.bf16 %v1636, %v1636
  %v1686 = vpack.c.bf16 %v1637, %v1637
  %v1687 = vpack.c.bf16 %v1638, %v1638
  %v1688 = vpack.c.bf16 %v1639, %v1639
  %v1689 = vpack.c.bf16 %v1640, %v1640
  %v1690 = vpack.c.bf16 %v1641, %v1641
  %v1691 = vpack.c.bf16 %v1642, %v1642
  %v1692 = vpack.c.bf16 %v1643, %v1643
  %v1693 = vpack.c.bf16 %v1644, %v1644
  %v1694 = vpack.c.bf16 %v1645, %v1645
  %v1695 = vpack.c.bf16 %v1646, %v1646
  %v1696 = vpack.c.bf16 %v1647, %v1647
  %v1697 = vpack.c.bf16 %v1648, %v1648
  %v1698 = vpack.c.bf16 %v1649, %v1649
  %v1699 = vpack.c.bf16 %v1650, %v1650
  %v1700 = vpack.c.bf16 %v1651, %v1651
  %v1701 = vpack.c.bf16 %v1652, %v1652
  %v1702 = vpack.c.bf16 %v1653, %v1653
  %v1703 = vpack.c.bf16 %v1654, %v1654
  %v1704 = vpack.c.bf16 %v1655, %v1655
  %1705 = vst [vmem:[%s6] sm:$0xf] %v1656
  %1706 = vst [vmem:[%s6 + $0x4] sm:$0xf] %v1657
  %1707 = vst [vmem:[%s6 + $0x8] sm:$0xf] %v1658
  %1708 = vst [vmem:[%s6 + $0xc] sm:$0xf] %v1659
  %1709 = vst [vmem:[%s6 + $0x10] sm:$0xf] %v1660
  %1710 = vst [vmem:[%s6 + $0x14] sm:$0xf] %v1661
  %1711 = vst [vmem:[%s6 + $0x18] sm:$0xf] %v1662
  %1712 = vst [vmem:[%s6 + $0x1c] sm:$0xf] %v1663
  %1713 = vst [vmem:[%s6 + $0x20] sm:$0xf] %v1664
  %1714 = vst [vmem:[%s6 + $0x24] sm:$0xf] %v1665
  %1715 = vst [vmem:[%s6 + $0x28] sm:$0xf] %v1666
  %1716 = vst [vmem:[%s6 + $0x2c] sm:$0xf] %v1667
  %1717 = vst [vmem:[%s6 + $0x30] sm:$0xf] %v1668
  %1718 = vst [vmem:[%s6 + $0x34] sm:$0xf] %v1669
  %1719 = vst [vmem:[%s6 + $0x38] sm:$0xf] %v1670
  %1720 = vst [vmem:[%s6 + $0x3c] sm:$0xf] %v1671
  %1721 = vst [vmem:[%s6 + $0x40] sm:$0xf] %v1672
  %1722 = vst [vmem:[%s6 + $0x44] sm:$0xf] %v1673
  %1723 = vst [vmem:[%s6 + $0x48] sm:$0xf] %v1674
  %1724 = vst [vmem:[%s6 + $0x4c] sm:$0xf] %v1675
  %1725 = vst [vmem:[%s6 + $0x50] sm:$0xf] %v1676
  %1726 = vst [vmem:[%s6 + $0x54] sm:$0xf] %v1677
  %1727 = vst [vmem:[%s6 + $0x58] sm:$0xf] %v1678
  %1728 = vst [vmem:[%s6 + $0x5c] sm:$0xf] %v1679
  %1729 = vst [vmem:[%s6 + $0x60] sm:$0xf] %v1680
  %1730 = vst [vmem:[%s6 + $0x64] sm:$0xf] %v1681
  %1731 = vst [vmem:[%s6 + $0x68] sm:$0xf] %v1682
  %1732 = vst [vmem:[%s6 + $0x6c] sm:$0xf] %v1683
  %1733 = vst [vmem:[%s6 + $0x70] sm:$0xf] %v1684
  %1734 = vst [vmem:[%s6 + $0x74] sm:$0xf] %v1685
  %1735 = vst [vmem:[%s6 + $0x78] sm:$0xf] %v1686
  %1736 = vst [vmem:[%s6 + $0x7c] sm:$0xf] %v1687
  %1737 = vst [vmem:[%s6 + $0x80] sm:$0xf] %v1688
  %1738 = vst [vmem:[%s6 + $0x84] sm:$0xf] %v1689
  %1739 = vst [vmem:[%s6 + $0x88] sm:$0xf] %v1690
  %1740 = vst [vmem:[%s6 + $0x8c] sm:$0xf] %v1691
  %1741 = vst [vmem:[%s6 + $0x90] sm:$0xf] %v1692
  %1742 = vst [vmem:[%s6 + $0x94] sm:$0xf] %v1693
  %1743 = vst [vmem:[%s6 + $0x98] sm:$0xf] %v1694
  %1744 = vst [vmem:[%s6 + $0x9c] sm:$0xf] %v1695
  %1745 = vst [vmem:[%s6 + $0xa0] sm:$0xf] %v1696
  %1746 = vst [vmem:[%s6 + $0xa4] sm:$0xf] %v1697
  %1747 = vst [vmem:[%s6 + $0xa8] sm:$0xf] %v1698
  %1748 = vst [vmem:[%s6 + $0xac] sm:$0xf] %v1699
  %1749 = vst [vmem:[%s6 + $0xb0] sm:$0xf] %v1700
  %1750 = vst [vmem:[%s6 + $0xb4] sm:$0xf] %v1701
  %1751 = vst [vmem:[%s6 + $0xb8] sm:$0xf] %v1702
  %1752 = vst [vmem:[%s6 + $0xbc] sm:$0xf] %v1703
  %1753 = vst [vmem:[%s6 + $0xc0] sm:$0xf] %v1704
  // Predicated region
  $region26: #{cnn_forward.3} parent=0 // pred_check
    _
  $region27: #{cnn_forward.3} parent=0 // pred_check_branch
    %1755 = sbr.rel (0) target = $region29
  $region28: #{cnn_forward.3} parent=0 // pred_region
    _
  $region29: #{cnn_forward.3} parent=0 // pred_fallthru
    _
  // Predicated region
  $region30: #{cnn_forward.3} parent=0 // pred_check
    _
  $region31: #{cnn_forward.3} parent=0 // pred_check_branch
    %1757 = sbr.rel (0) target = $region33
  $region32: #{cnn_forward.3} parent=0 // pred_region
    _
  $region33: #{cnn_forward.3} parent=0 // pred_fallthru
    _

// kernel: cnn_forward.4
$region0: #{cnn_forward.4}
  #allocation0 [shape = 'u32[]', space=smem, size = 0x4, offset = 0x4, fixed_abs, tag = 'smem constant byte address 0x4 - core index']
  #allocation1 [shape = 'u32[72,128]{1,0:T(1,128)}', space=vmem, size = 0x9000, scoped, tag = 'internal scratch']
  %s0 = inlined_call_operand.vmem [shape: bf16[104,512], index: 0, kind: input, shape index: {}]
  %s1 = inlined_call_operand.vmem [shape: bf16[104,512], index: 1, kind: input, shape index: {}]
  %s2 = inlined_call_operand.vmem [shape: bf16[104,512], index: 2, kind: input, shape index: {}]
  %s3 = inlined_call_operand.vmem [shape: bf16[104,512], index: 3, kind: input, shape index: {}]
  %s4 = inlined_call_operand.vmem [shape: bf16[512,128], index: 4, kind: input, shape index: {}]
  %s5 = inlined_call_operand.vmem [shape: f32[1,128], index: 5, kind: input, shape index: {}]
  %s6 = inlined_call_operand.vmem [shape: bf16[104,128], index: 6, kind: output, shape index: {}]
  %s7 = sld [smem:[#allocation0]]
  $region34: #{cnn_forward.4} parent=0
    _
  %s9 = ssub.s32 1, %s7
  %s10 = scalar_select 0, %s9, %s7
  // Predicated region
  $region2: #{cnn_forward.4} parent=0 // pred_check
    _
  $region3: #{cnn_forward.4} parent=0 // pred_check_branch
    %12 = sbr.rel (0) target = $region5
  $region4: #{cnn_forward.4} parent=0 // pred_region
    _
  $region5: #{cnn_forward.4} parent=0 // pred_fallthru
    _
  // Predicated region
  $region6: #{cnn_forward.4} parent=0 // pred_check
    _
  $region7: #{cnn_forward.4} parent=0 // pred_check_branch
    %14 = sbr.rel (0) target = $region9
  $region8: #{cnn_forward.4} parent=0 // pred_region
    _
  $region9: #{cnn_forward.4} parent=0 // pred_fallthru
    _
  // Predicated region
  $region10: #{cnn_forward.4} parent=0 // pred_check
    _
  $region11: #{cnn_forward.4} parent=0 // pred_check_branch
    %16 = sbr.rel (0) target = $region13
  $region12: #{cnn_forward.4} parent=0 // pred_region
    _
  $region13: #{cnn_forward.4} parent=0 // pred_fallthru
    _
  // Predicated region
  $region14: #{cnn_forward.4} parent=0 // pred_check
    _
  $region15: #{cnn_forward.4} parent=0 // pred_check_branch
    %18 = sbr.rel (0) target = $region17
  $region16: #{cnn_forward.4} parent=0 // pred_region
    _
  $region17: #{cnn_forward.4} parent=0 // pred_fallthru
    _
  // Predicated region
  $region18: #{cnn_forward.4} parent=0 // pred_check
    _
  $region19: #{cnn_forward.4} parent=0 // pred_check_branch
    %20 = sbr.rel (0) target = $region21
  $region20: #{cnn_forward.4} parent=0 // pred_region
    _
  $region21: #{cnn_forward.4} parent=0 // pred_fallthru
    _
  // Predicated region
  $region22: #{cnn_forward.4} parent=0 // pred_check
    _
  $region23: #{cnn_forward.4} parent=0 // pred_check_branch
    %22 = sbr.rel (0) target = $region25
  $region24: #{cnn_forward.4} parent=0 // pred_region
    _
  $region25: #{cnn_forward.4} parent=0 // pred_fallthru
    _
  %v23 = vld [vmem:[%s4] sm:$0xf]
  %v24 = vld [vmem:[%s4 + $0x4] sm:$0xf]
  %v25 = vld [vmem:[%s4 + $0x8] sm:$0xf]
  %v26 = vld [vmem:[%s4 + $0xc] sm:$0xf]
  %v27 = vld [vmem:[%s4 + $0x10] sm:$0xf]
  %v28 = vld [vmem:[%s4 + $0x14] sm:$0xf]
  %v29 = vld [vmem:[%s4 + $0x18] sm:$0xf]
  %v30 = vld [vmem:[%s4 + $0x1c] sm:$0xf]
  %v31 = vld [vmem:[%s4 + $0x20] sm:$0xf]
  %v32 = vld [vmem:[%s4 + $0x24] sm:$0xf]
  %v33 = vld [vmem:[%s4 + $0x28] sm:$0xf]
  %v34 = vld [vmem:[%s4 + $0x2c] sm:$0xf]
  %v35 = vld [vmem:[%s4 + $0x30] sm:$0xf]
  %v36 = vld [vmem:[%s4 + $0x34] sm:$0xf]
  %v37 = vld [vmem:[%s4 + $0x38] sm:$0xf]
  %v38 = vld [vmem:[%s4 + $0x3c] sm:$0xf]
  %v39 = vld [vmem:[%s4 + $0x40] sm:$0xf]
  %v40 = vld [vmem:[%s4 + $0x44] sm:$0xf]
  %v41 = vld [vmem:[%s4 + $0x48] sm:$0xf]
  %v42 = vld [vmem:[%s4 + $0x4c] sm:$0xf]
  %v43 = vld [vmem:[%s4 + $0x50] sm:$0xf]
  %v44 = vld [vmem:[%s4 + $0x54] sm:$0xf]
  %v45 = vld [vmem:[%s4 + $0x58] sm:$0xf]
  %v46 = vld [vmem:[%s4 + $0x5c] sm:$0xf]
  %v47 = vld [vmem:[%s4 + $0x60] sm:$0xf]
  %v48 = vld [vmem:[%s4 + $0x64] sm:$0xf]
  %v49 = vld [vmem:[%s4 + $0x68] sm:$0xf]
  %v50 = vld [vmem:[%s4 + $0x6c] sm:$0xf]
  %v51 = vld [vmem:[%s4 + $0x70] sm:$0xf]
  %v52 = vld [vmem:[%s4 + $0x74] sm:$0xf]
  %v53 = vld [vmem:[%s4 + $0x78] sm:$0xf]
  %v54 = vld [vmem:[%s4 + $0x7c] sm:$0xf]
  %v55 = vld [vmem:[%s4 + $0x80] sm:$0xf]
  %v56 = vld [vmem:[%s4 + $0x84] sm:$0xf]
  %v57 = vld [vmem:[%s4 + $0x88] sm:$0xf]
  %v58 = vld [vmem:[%s4 + $0x8c] sm:$0xf]
  %v59 = vld [vmem:[%s4 + $0x90] sm:$0xf]
  %v60 = vld [vmem:[%s4 + $0x94] sm:$0xf]
  %v61 = vld [vmem:[%s4 + $0x98] sm:$0xf]
  %v62 = vld [vmem:[%s4 + $0x9c] sm:$0xf]
  %v63 = vld [vmem:[%s4 + $0xa0] sm:$0xf]
  %v64 = vld [vmem:[%s4 + $0xa4] sm:$0xf]
  %v65 = vld [vmem:[%s4 + $0xa8] sm:$0xf]
  %v66 = vld [vmem:[%s4 + $0xac] sm:$0xf]
  %v67 = vld [vmem:[%s4 + $0xb0] sm:$0xf]
  %v68 = vld [vmem:[%s4 + $0xb4] sm:$0xf]
  %v69 = vld [vmem:[%s4 + $0xb8] sm:$0xf]
  %v70 = vld [vmem:[%s4 + $0xbc] sm:$0xf]
  %v71 = vld [vmem:[%s4 + $0xc0] sm:$0xf]
  %v72 = vld [vmem:[%s4 + $0xc4] sm:$0xf]
  %v73 = vld [vmem:[%s4 + $0xc8] sm:$0xf]
  %v74 = vld [vmem:[%s4 + $0xcc] sm:$0xf]
  %v75 = vld [vmem:[%s4 + $0xd0] sm:$0xf]
  %v76 = vld [vmem:[%s4 + $0xd4] sm:$0xf]
  %v77 = vld [vmem:[%s4 + $0xd8] sm:$0xf]
  %v78 = vld [vmem:[%s4 + $0xdc] sm:$0xf]
  %v79 = vld [vmem:[%s4 + $0xe0] sm:$0xf]
  %v80 = vld [vmem:[%s4 + $0xe4] sm:$0xf]
  %v81 = vld [vmem:[%s4 + $0xe8] sm:$0xf]
  %v82 = vld [vmem:[%s4 + $0xec] sm:$0xf]
  %v83 = vld [vmem:[%s4 + $0xf0] sm:$0xf]
  %v84 = vld [vmem:[%s4 + $0xf4] sm:$0xf]
  %v85 = vld [vmem:[%s4 + $0xf8] sm:$0xf]
  %v86 = vld [vmem:[%s4 + $0xfc] sm:$0xf]
  %v87 = vld [vmem:[%s0] sm:$0xff]
  %v88 = vld [vmem:[%s0 + $0x8] sm:$0xff]
  %v89 = vld [vmem:[%s0 + $0x10] sm:$0xff]
  %v90 = vld [vmem:[%s0 + $0x18] sm:$0xff]
  %v91 = vld [vmem:[%s0 + $0x20] sm:$0xff]
  %v92 = vld [vmem:[%s0 + $0x28] sm:$0xff]
  %v93 = vld [vmem:[%s0 + $0x30] sm:$0xff]
  %v94 = vld [vmem:[%s0 + $0x38] sm:$0xff]
  %v95 = vld [vmem:[%s0 + $0x40] sm:$0xff]
  %v96 = vld [vmem:[%s0 + $0x48] sm:$0xff]
  %v97 = vld [vmem:[%s0 + $0x50] sm:$0xff]
  %v98 = vld [vmem:[%s0 + $0x58] sm:$0xff]
  %v99 = vld [vmem:[%s0 + $0x60] sm:$0xff]
  %v100 = vld [vmem:[%s0 + $0x68] sm:$0xff]
  %v101 = vld [vmem:[%s0 + $0x70] sm:$0xff]
  %v102 = vld [vmem:[%s0 + $0x78] sm:$0xff]
  %v103 = vld [vmem:[%s0 + $0x80] sm:$0xff]
  %v104 = vld [vmem:[%s0 + $0x88] sm:$0xff]
  %v105 = vld [vmem:[%s0 + $0x90] sm:$0xff]
  %v106 = vld [vmem:[%s0 + $0x98] sm:$0xff]
  %v107 = vld [vmem:[%s0 + $0xa0] sm:$0xff]
  %v108 = vld [vmem:[%s0 + $0xa8] sm:$0xff]
  %v109 = vld [vmem:[%s0 + $0xb0] sm:$0xff]
  %v110 = vld [vmem:[%s0 + $0xb8] sm:$0xff]
  %v111 = vld [vmem:[%s0 + $0xc0] sm:$0xff]
  %v112 = vld [vmem:[%s0 + $0xc8] sm:$0xff]
  %v139 = vunpack.c.l.b16 %v87
  %v140 = vunpack.c.h.b16 %v87
  %v141 = vunpack.c.l.b16 %v88
  %v142 = vunpack.c.h.b16 %v88
  %v143 = vunpack.c.l.b16 %v89
  %v144 = vunpack.c.h.b16 %v89
  %v145 = vunpack.c.l.b16 %v90
  %v146 = vunpack.c.h.b16 %v90
  %v147 = vunpack.c.l.b16 %v91
  %v148 = vunpack.c.h.b16 %v91
  %v149 = vunpack.c.l.b16 %v92
  %v150 = vunpack.c.h.b16 %v92
  %v151 = vunpack.c.l.b16 %v93
  %v152 = vunpack.c.h.b16 %v93
  %v153 = vunpack.c.l.b16 %v94
  %v154 = vunpack.c.h.b16 %v94
  %v155 = vunpack.c.l.b16 %v95
  %v156 = vunpack.c.h.b16 %v95
  %v157 = vunpack.c.l.b16 %v96
  %v158 = vunpack.c.h.b16 %v96
  %v159 = vunpack.c.l.b16 %v97
  %v160 = vunpack.c.h.b16 %v97
  %v161 = vunpack.c.l.b16 %v98
  %v162 = vunpack.c.h.b16 %v98
  %v163 = vunpack.c.l.b16 %v99
  %v164 = vunpack.c.h.b16 %v99
  %v165 = vunpack.c.l.b16 %v100
  %v166 = vunpack.c.h.b16 %v100
  %v167 = vunpack.c.l.b16 %v101
  %v168 = vunpack.c.h.b16 %v101
  %v169 = vunpack.c.l.b16 %v102
  %v170 = vunpack.c.h.b16 %v102
  %v171 = vunpack.c.l.b16 %v103
  %v172 = vunpack.c.h.b16 %v103
  %v173 = vunpack.c.l.b16 %v104
  %v174 = vunpack.c.h.b16 %v104
  %v175 = vunpack.c.l.b16 %v105
  %v176 = vunpack.c.h.b16 %v105
  %v177 = vunpack.c.l.b16 %v106
  %v178 = vunpack.c.h.b16 %v106
  %v179 = vunpack.c.l.b16 %v107
  %v180 = vunpack.c.h.b16 %v107
  %v181 = vunpack.c.l.b16 %v108
  %v182 = vunpack.c.h.b16 %v108
  %v183 = vunpack.c.l.b16 %v109
  %v184 = vunpack.c.h.b16 %v109
  %v185 = vunpack.c.l.b16 %v110
  %v186 = vunpack.c.h.b16 %v110
  %v187 = vunpack.c.l.b16 %v111
  %v188 = vunpack.c.h.b16 %v111
  %v189 = vunpack.c.l.b16 %v112
  %v190 = vunpack.c.h.b16 %v112
  %v191 = vpack.c.b16 %v143, %v139
  %v192 = vpack.c.b16 %v144, %v140
  %v193 = vpack.c.b16 %v145, %v141
  %v194 = vpack.c.b16 %v146, %v142
  %v195 = vpack.c.b16 %v151, %v147
  %v196 = vpack.c.b16 %v152, %v148
  %v197 = vpack.c.b16 %v153, %v149
  %v198 = vpack.c.b16 %v154, %v150
  %v199 = vpack.c.b16 %v159, %v155
  %v200 = vpack.c.b16 %v160, %v156
  %v201 = vpack.c.b16 %v161, %v157
  %v202 = vpack.c.b16 %v162, %v158
  %v203 = vpack.c.b16 %v167, %v163
  %v204 = vpack.c.b16 %v168, %v164
  %v205 = vpack.c.b16 %v169, %v165
  %v206 = vpack.c.b16 %v170, %v166
  %v207 = vpack.c.b16 %v175, %v171
  %v208 = vpack.c.b16 %v176, %v172
  %v209 = vpack.c.b16 %v177, %v173
  %v210 = vpack.c.b16 %v178, %v174
  %v211 = vpack.c.b16 %v183, %v179
  %v212 = vpack.c.b16 %v184, %v180
  %v213 = vpack.c.b16 %v185, %v181
  %v214 = vpack.c.b16 %v186, %v182
  %v215 = vpack.c.b16 %v187, %v187
  %v216 = vpack.c.b16 %v188, %v188
  %v217 = vpack.c.b16 %v189, %v189
  %v218 = vpack.c.b16 %v190, %v190
  %v311 = vunpack.c.l.b16 %v23
  %v312 = vunpack.c.l.b16 %v24
  %v313 = vunpack.c.l.b16 %v25
  %v314 = vunpack.c.l.b16 %v26
  %v315 = vunpack.c.l.b16 %v27
  %v316 = vunpack.c.l.b16 %v28
  %v317 = vunpack.c.l.b16 %v29
  %v318 = vunpack.c.l.b16 %v30
  %v319 = vunpack.c.l.b16 %v31
  %v320 = vunpack.c.l.b16 %v32
  %v321 = vunpack.c.l.b16 %v33
  %v322 = vunpack.c.l.b16 %v34
  %v323 = vunpack.c.l.b16 %v35
  %v324 = vunpack.c.l.b16 %v36
  %v325 = vunpack.c.l.b16 %v37
  %v326 = vunpack.c.l.b16 %v38
  %v327 = vunpack.c.l.b16 %v39
  %v328 = vunpack.c.l.b16 %v40
  %v329 = vunpack.c.l.b16 %v41
  %v330 = vunpack.c.l.b16 %v42
  %v331 = vunpack.c.l.b16 %v43
  %v332 = vunpack.c.l.b16 %v44
  %v333 = vunpack.c.l.b16 %v45
  %v334 = vunpack.c.l.b16 %v46
  %v335 = vunpack.c.l.b16 %v47
  %v336 = vunpack.c.l.b16 %v48
  %v337 = vunpack.c.l.b16 %v49
  %v338 = vunpack.c.l.b16 %v50
  %v339 = vunpack.c.l.b16 %v51
  %v340 = vunpack.c.l.b16 %v52
  %v341 = vunpack.c.l.b16 %v53
  %v342 = vunpack.c.l.b16 %v54
  %v343 = vunpack.c.l.b16 %v55
  %v344 = vunpack.c.l.b16 %v56
  %v345 = vunpack.c.l.b16 %v57
  %v346 = vunpack.c.l.b16 %v58
  %v347 = vunpack.c.l.b16 %v59
  %v348 = vunpack.c.l.b16 %v60
  %v349 = vunpack.c.l.b16 %v61
  %v350 = vunpack.c.l.b16 %v62
  %v351 = vunpack.c.l.b16 %v63
  %v352 = vunpack.c.l.b16 %v64
  %v353 = vunpack.c.l.b16 %v65
  %v354 = vunpack.c.l.b16 %v66
  %v355 = vunpack.c.l.b16 %v67
  %v356 = vunpack.c.l.b16 %v68
  %v357 = vunpack.c.l.b16 %v69
  %v358 = vunpack.c.l.b16 %v70
  %v359 = vunpack.c.l.b16 %v71
  %v360 = vunpack.c.l.b16 %v72
  %v361 = vunpack.c.l.b16 %v73
  %v362 = vunpack.c.l.b16 %v74
  %v363 = vunpack.c.l.b16 %v75
  %v364 = vunpack.c.l.b16 %v76
  %v365 = vunpack.c.l.b16 %v77
  %v366 = vunpack.c.l.b16 %v78
  %v367 = vunpack.c.l.b16 %v79
  %v368 = vunpack.c.l.b16 %v80
  %v369 = vunpack.c.l.b16 %v81
  %v370 = vunpack.c.l.b16 %v82
  %v371 = vunpack.c.l.b16 %v83
  %v372 = vunpack.c.l.b16 %v84
  %v373 = vunpack.c.l.b16 %v85
  %v374 = vunpack.c.l.b16 %v86
  %v375 = vpack.c.b16 %v312, %v311
  %v376 = vpack.c.b16 %v314, %v313
  %v377 = vpack.c.b16 %v316, %v315
  %v378 = vpack.c.b16 %v318, %v317
  %v379 = vpack.c.b16 %v320, %v319
  %v380 = vpack.c.b16 %v322, %v321
  %v381 = vpack.c.b16 %v324, %v323
  %v382 = vpack.c.b16 %v326, %v325
  %v383 = vpack.c.b16 %v328, %v327
  %v384 = vpack.c.b16 %v330, %v329
  %v385 = vpack.c.b16 %v332, %v331
  %v386 = vpack.c.b16 %v334, %v333
  %v387 = vpack.c.b16 %v336, %v335
  %v388 = vpack.c.b16 %v338, %v337
  %v389 = vpack.c.b16 %v340, %v339
  %v390 = vpack.c.b16 %v342, %v341
  %v391 = vpack.c.b16 %v344, %v343
  %v392 = vpack.c.b16 %v346, %v345
  %v393 = vpack.c.b16 %v348, %v347
  %v394 = vpack.c.b16 %v350, %v349
  %v395 = vpack.c.b16 %v352, %v351
  %v396 = vpack.c.b16 %v354, %v353
  %v397 = vpack.c.b16 %v356, %v355
  %v398 = vpack.c.b16 %v358, %v357
  %v399 = vpack.c.b16 %v360, %v359
  %v400 = vpack.c.b16 %v362, %v361
  %v401 = vpack.c.b16 %v364, %v363
  %v402 = vpack.c.b16 %v366, %v365
  %v403 = vpack.c.b16 %v368, %v367
  %v404 = vpack.c.b16 %v370, %v369
  %v405 = vpack.c.b16 %v372, %v371
  %v406 = vpack.c.b16 %v374, %v373
  %439 = vmatpush.bf16.msra.mxu0 %v382
  %440 = vmatpush.bf16.msra.mxu0 %v381
  %441 = vmatpush.bf16.msra.mxu0 %v380
  %442 = vmatpush.bf16.msra.mxu0 %v379
  %443 = vmatpush.bf16.msra.mxu0 %v378
  %444 = vmatpush.bf16.msra.mxu0 %v377
  %445 = vmatpush.bf16.msra.mxu0 %v376
  %446 = vmatpush.bf16.msra.mxu0 %v375
  %447 = vmatmul.bf16.gmra.mxu0 %v191
  %v448 = vpop.f32.mrf.mxu0
  %v449 = vadd.f32 0.0, %v448
  %v450 = vpop.f32.mrf.mxu0
  %v451 = vadd.f32 0.0, %v450
  %452 = vmatmul.bf16.gmra.mxu0 %v195
  %v453 = vpop.f32.mrf.mxu0
  %v454 = vadd.f32 0.0, %v453
  %v455 = vpop.f32.mrf.mxu0
  %v456 = vadd.f32 0.0, %v455
  %457 = vmatmul.bf16.gmra.mxu0 %v199
  %v458 = vpop.f32.mrf.mxu0
  %v459 = vadd.f32 0.0, %v458
  %v460 = vpop.f32.mrf.mxu0
  %v461 = vadd.f32 0.0, %v460
  %462 = vmatmul.bf16.gmra.mxu0 %v203
  %v463 = vpop.f32.mrf.mxu0
  %v464 = vadd.f32 0.0, %v463
  %v465 = vpop.f32.mrf.mxu0
  %v466 = vadd.f32 0.0, %v465
  %467 = vmatmul.bf16.gmra.mxu0 %v207
  %v468 = vpop.f32.mrf.mxu0
  %v469 = vadd.f32 0.0, %v468
  %v470 = vpop.f32.mrf.mxu0
  %v471 = vadd.f32 0.0, %v470
  %472 = vmatmul.bf16.gmra.mxu0 %v211
  %v473 = vpop.f32.mrf.mxu0
  %v474 = vadd.f32 0.0, %v473
  %v475 = vpop.f32.mrf.mxu0
  %v476 = vadd.f32 0.0, %v475
  %477 = vmatmul.bf16.gmra.mxu0 %v215
  %v478 = vpop.f32.mrf.mxu0
  %v479 = vadd.f32 0.0, %v478
  %v480 = vpop.f32.mrf.mxu0
  %481 = vdwg.mxu0
  %482 = vmatpush.bf16.msra.mxu0 %v390
  %483 = vmatpush.bf16.msra.mxu0 %v389
  %484 = vmatpush.bf16.msra.mxu0 %v388
  %485 = vmatpush.bf16.msra.mxu0 %v387
  %486 = vmatpush.bf16.msra.mxu0 %v386
  %487 = vmatpush.bf16.msra.mxu0 %v385
  %488 = vmatpush.bf16.msra.mxu0 %v384
  %489 = vmatpush.bf16.msra.mxu0 %v383
  %490 = vmatmul.bf16.gmra.mxu0 %v192
  %v491 = vpop.f32.mrf.mxu0
  %v492 = vadd.f32 %v449, %v491
  %v493 = vpop.f32.mrf.mxu0
  %v494 = vadd.f32 %v451, %v493
  %495 = vmatmul.bf16.gmra.mxu0 %v196
  %v496 = vpop.f32.mrf.mxu0
  %v497 = vadd.f32 %v454, %v496
  %v498 = vpop.f32.mrf.mxu0
  %v499 = vadd.f32 %v456, %v498
  %500 = vmatmul.bf16.gmra.mxu0 %v200
  %v501 = vpop.f32.mrf.mxu0
  %v502 = vadd.f32 %v459, %v501
  %v503 = vpop.f32.mrf.mxu0
  %v504 = vadd.f32 %v461, %v503
  %505 = vmatmul.bf16.gmra.mxu0 %v204
  %v506 = vpop.f32.mrf.mxu0
  %v507 = vadd.f32 %v464, %v506
  %v508 = vpop.f32.mrf.mxu0
  %v509 = vadd.f32 %v466, %v508
  %510 = vmatmul.bf16.gmra.mxu0 %v208
  %v511 = vpop.f32.mrf.mxu0
  %v512 = vadd.f32 %v469, %v511
  %v513 = vpop.f32.mrf.mxu0
  %v514 = vadd.f32 %v471, %v513
  %515 = vmatmul.bf16.gmra.mxu0 %v212
  %v516 = vpop.f32.mrf.mxu0
  %v517 = vadd.f32 %v474, %v516
  %v518 = vpop.f32.mrf.mxu0
  %v519 = vadd.f32 %v476, %v518
  %520 = vmatmul.bf16.gmra.mxu0 %v216
  %v521 = vpop.f32.mrf.mxu0
  %v522 = vadd.f32 %v479, %v521
  %v523 = vpop.f32.mrf.mxu0
  %524 = vdwg.mxu0
  %525 = vmatpush.bf16.msra.mxu0 %v398
  %526 = vmatpush.bf16.msra.mxu0 %v397
  %527 = vmatpush.bf16.msra.mxu0 %v396
  %528 = vmatpush.bf16.msra.mxu0 %v395
  %529 = vmatpush.bf16.msra.mxu0 %v394
  %530 = vmatpush.bf16.msra.mxu0 %v393
  %531 = vmatpush.bf16.msra.mxu0 %v392
  %532 = vmatpush.bf16.msra.mxu0 %v391
  %533 = vmatmul.bf16.gmra.mxu0 %v193
  %v534 = vpop.f32.mrf.mxu0
  %v535 = vadd.f32 %v492, %v534
  %v536 = vpop.f32.mrf.mxu0
  %v537 = vadd.f32 %v494, %v536
  %538 = vmatmul.bf16.gmra.mxu0 %v197
  %v539 = vpop.f32.mrf.mxu0
  %v540 = vadd.f32 %v497, %v539
  %v541 = vpop.f32.mrf.mxu0
  %v542 = vadd.f32 %v499, %v541
  %543 = vmatmul.bf16.gmra.mxu0 %v201
  %v544 = vpop.f32.mrf.mxu0
  %v545 = vadd.f32 %v502, %v544
  %v546 = vpop.f32.mrf.mxu0
  %v547 = vadd.f32 %v504, %v546
  %548 = vmatmul.bf16.gmra.mxu0 %v205
  %v549 = vpop.f32.mrf.mxu0
  %v550 = vadd.f32 %v507, %v549
  %v551 = vpop.f32.mrf.mxu0
  %v552 = vadd.f32 %v509, %v551
  %553 = vmatmul.bf16.gmra.mxu0 %v209
  %v554 = vpop.f32.mrf.mxu0
  %v555 = vadd.f32 %v512, %v554
  %v556 = vpop.f32.mrf.mxu0
  %v557 = vadd.f32 %v514, %v556
  %558 = vmatmul.bf16.gmra.mxu0 %v213
  %v559 = vpop.f32.mrf.mxu0
  %v560 = vadd.f32 %v517, %v559
  %v561 = vpop.f32.mrf.mxu0
  %v562 = vadd.f32 %v519, %v561
  %563 = vmatmul.bf16.gmra.mxu0 %v217
  %v564 = vpop.f32.mrf.mxu0
  %v565 = vadd.f32 %v522, %v564
  %v566 = vpop.f32.mrf.mxu0
  %567 = vdwg.mxu0
  %568 = vmatpush.bf16.msra.mxu0 %v406
  %569 = vmatpush.bf16.msra.mxu0 %v405
  %570 = vmatpush.bf16.msra.mxu0 %v404
  %571 = vmatpush.bf16.msra.mxu0 %v403
  %572 = vmatpush.bf16.msra.mxu0 %v402
  %573 = vmatpush.bf16.msra.mxu0 %v401
  %574 = vmatpush.bf16.msra.mxu0 %v400
  %575 = vmatpush.bf16.msra.mxu0 %v399
  %576 = vmatmul.bf16.gmra.mxu0 %v194
  %v577 = vpop.f32.mrf.mxu0
  %v578 = vadd.f32 %v535, %v577
  %v579 = vpop.f32.mrf.mxu0
  %v580 = vadd.f32 %v537, %v579
  %581 = vmatmul.bf16.gmra.mxu0 %v198
  %v582 = vpop.f32.mrf.mxu0
  %v583 = vadd.f32 %v540, %v582
  %v584 = vpop.f32.mrf.mxu0
  %v585 = vadd.f32 %v542, %v584
  %586 = vmatmul.bf16.gmra.mxu0 %v202
  %v587 = vpop.f32.mrf.mxu0
  %v588 = vadd.f32 %v545, %v587
  %v589 = vpop.f32.mrf.mxu0
  %v590 = vadd.f32 %v547, %v589
  %591 = vmatmul.bf16.gmra.mxu0 %v206
  %v592 = vpop.f32.mrf.mxu0
  %v593 = vadd.f32 %v550, %v592
  %v594 = vpop.f32.mrf.mxu0
  %v595 = vadd.f32 %v552, %v594
  %596 = vmatmul.bf16.gmra.mxu0 %v210
  %v597 = vpop.f32.mrf.mxu0
  %v598 = vadd.f32 %v555, %v597
  %v599 = vpop.f32.mrf.mxu0
  %v600 = vadd.f32 %v557, %v599
  %601 = vmatmul.bf16.gmra.mxu0 %v214
  %v602 = vpop.f32.mrf.mxu0
  %v603 = vadd.f32 %v560, %v602
  %v604 = vpop.f32.mrf.mxu0
  %v605 = vadd.f32 %v562, %v604
  %606 = vmatmul.bf16.gmra.mxu0 %v218
  %v607 = vpop.f32.mrf.mxu0
  %v608 = vadd.f32 %v565, %v607
  %v609 = vpop.f32.mrf.mxu0
  %610 = vdwg.mxu0
  %v611 = vld [vmem:[%s1] sm:$0xff]
  %v612 = vld [vmem:[%s1 + $0x8] sm:$0xff]
  %v613 = vld [vmem:[%s1 + $0x10] sm:$0xff]
  %v614 = vld [vmem:[%s1 + $0x18] sm:$0xff]
  %v615 = vld [vmem:[%s1 + $0x20] sm:$0xff]
  %v616 = vld [vmem:[%s1 + $0x28] sm:$0xff]
  %v617 = vld [vmem:[%s1 + $0x30] sm:$0xff]
  %v618 = vld [vmem:[%s1 + $0x38] sm:$0xff]
  %v619 = vld [vmem:[%s1 + $0x40] sm:$0xff]
  %v620 = vld [vmem:[%s1 + $0x48] sm:$0xff]
  %v621 = vld [vmem:[%s1 + $0x50] sm:$0xff]
  %v622 = vld [vmem:[%s1 + $0x58] sm:$0xff]
  %v623 = vld [vmem:[%s1 + $0x60] sm:$0xff]
  %v624 = vld [vmem:[%s1 + $0x68] sm:$0xff]
  %v625 = vld [vmem:[%s1 + $0x70] sm:$0xff]
  %v626 = vld [vmem:[%s1 + $0x78] sm:$0xff]
  %v627 = vld [vmem:[%s1 + $0x80] sm:$0xff]
  %v628 = vld [vmem:[%s1 + $0x88] sm:$0xff]
  %v629 = vld [vmem:[%s1 + $0x90] sm:$0xff]
  %v630 = vld [vmem:[%s1 + $0x98] sm:$0xff]
  %v631 = vld [vmem:[%s1 + $0xa0] sm:$0xff]
  %v632 = vld [vmem:[%s1 + $0xa8] sm:$0xff]
  %v633 = vld [vmem:[%s1 + $0xb0] sm:$0xff]
  %v634 = vld [vmem:[%s1 + $0xb8] sm:$0xff]
  %v635 = vld [vmem:[%s1 + $0xc0] sm:$0xff]
  %v636 = vld [vmem:[%s1 + $0xc8] sm:$0xff]
  %v663 = vunpack.c.l.b16 %v611
  %v664 = vunpack.c.h.b16 %v611
  %v665 = vunpack.c.l.b16 %v612
  %v666 = vunpack.c.h.b16 %v612
  %v667 = vunpack.c.l.b16 %v613
  %v668 = vunpack.c.h.b16 %v613
  %v669 = vunpack.c.l.b16 %v614
  %v670 = vunpack.c.h.b16 %v614
  %v671 = vunpack.c.l.b16 %v615
  %v672 = vunpack.c.h.b16 %v615
  %v673 = vunpack.c.l.b16 %v616
  %v674 = vunpack.c.h.b16 %v616
  %v675 = vunpack.c.l.b16 %v617
  %v676 = vunpack.c.h.b16 %v617
  %v677 = vunpack.c.l.b16 %v618
  %v678 = vunpack.c.h.b16 %v618
  %v679 = vunpack.c.l.b16 %v619
  %v680 = vunpack.c.h.b16 %v619
  %v681 = vunpack.c.l.b16 %v620
  %v682 = vunpack.c.h.b16 %v620
  %v683 = vunpack.c.l.b16 %v621
  %v684 = vunpack.c.h.b16 %v621
  %v685 = vunpack.c.l.b16 %v622
  %v686 = vunpack.c.h.b16 %v622
  %v687 = vunpack.c.l.b16 %v623
  %v688 = vunpack.c.h.b16 %v623
  %v689 = vunpack.c.l.b16 %v624
  %v690 = vunpack.c.h.b16 %v624
  %v691 = vunpack.c.l.b16 %v625
  %v692 = vunpack.c.h.b16 %v625
  %v693 = vunpack.c.l.b16 %v626
  %v694 = vunpack.c.h.b16 %v626
  %v695 = vunpack.c.l.b16 %v627
  %v696 = vunpack.c.h.b16 %v627
  %v697 = vunpack.c.l.b16 %v628
  %v698 = vunpack.c.h.b16 %v628
  %v699 = vunpack.c.l.b16 %v629
  %v700 = vunpack.c.h.b16 %v629
  %v701 = vunpack.c.l.b16 %v630
  %v702 = vunpack.c.h.b16 %v630
  %v703 = vunpack.c.l.b16 %v631
  %v704 = vunpack.c.h.b16 %v631
  %v705 = vunpack.c.l.b16 %v632
  %v706 = vunpack.c.h.b16 %v632
  %v707 = vunpack.c.l.b16 %v633
  %v708 = vunpack.c.h.b16 %v633
  %v709 = vunpack.c.l.b16 %v634
  %v710 = vunpack.c.h.b16 %v634
  %v711 = vunpack.c.l.b16 %v635
  %v712 = vunpack.c.h.b16 %v635
  %v713 = vunpack.c.l.b16 %v636
  %v714 = vunpack.c.h.b16 %v636
  %v715 = vpack.c.b16 %v667, %v663
  %v716 = vpack.c.b16 %v668, %v664
  %v717 = vpack.c.b16 %v669, %v665
  %v718 = vpack.c.b16 %v670, %v666
  %v719 = vpack.c.b16 %v675, %v671
  %v720 = vpack.c.b16 %v676, %v672
  %v721 = vpack.c.b16 %v677, %v673
  %v722 = vpack.c.b16 %v678, %v674
  %v723 = vpack.c.b16 %v683, %v679
  %v724 = vpack.c.b16 %v684, %v680
  %v725 = vpack.c.b16 %v685, %v681
  %v726 = vpack.c.b16 %v686, %v682
  %v727 = vpack.c.b16 %v691, %v687
  %v728 = vpack.c.b16 %v692, %v688
  %v729 = vpack.c.b16 %v693, %v689
  %v730 = vpack.c.b16 %v694, %v690
  %v731 = vpack.c.b16 %v699, %v695
  %v732 = vpack.c.b16 %v700, %v696
  %v733 = vpack.c.b16 %v701, %v697
  %v734 = vpack.c.b16 %v702, %v698
  %v735 = vpack.c.b16 %v707, %v703
  %v736 = vpack.c.b16 %v708, %v704
  %v737 = vpack.c.b16 %v709, %v705
  %v738 = vpack.c.b16 %v710, %v706
  %v739 = vpack.c.b16 %v711, %v711
  %v740 = vpack.c.b16 %v712, %v712
  %v741 = vpack.c.b16 %v713, %v713
  %v742 = vpack.c.b16 %v714, %v714
  %771 = vmatpush.bf16.msra.mxu0 %v382
  %772 = vmatpush.bf16.msra.mxu0 %v381
  %773 = vmatpush.bf16.msra.mxu0 %v380
  %774 = vmatpush.bf16.msra.mxu0 %v379
  %775 = vmatpush.bf16.msra.mxu0 %v378
  %776 = vmatpush.bf16.msra.mxu0 %v377
  %777 = vmatpush.bf16.msra.mxu0 %v376
  %778 = vmatpush.bf16.msra.mxu0 %v375
  %779 = vmatmul.bf16.gmra.mxu0 %v715
  %v780 = vpop.f32.mrf.mxu0
  %v781 = vadd.f32 0.0, %v780
  %v782 = vpop.f32.mrf.mxu0
  %v783 = vadd.f32 0.0, %v782
  %784 = vmatmul.bf16.gmra.mxu0 %v719
  %v785 = vpop.f32.mrf.mxu0
  %v786 = vadd.f32 0.0, %v785
  %v787 = vpop.f32.mrf.mxu0
  %v788 = vadd.f32 0.0, %v787
  %789 = vmatmul.bf16.gmra.mxu0 %v723
  %v790 = vpop.f32.mrf.mxu0
  %v791 = vadd.f32 0.0, %v790
  %v792 = vpop.f32.mrf.mxu0
  %v793 = vadd.f32 0.0, %v792
  %794 = vmatmul.bf16.gmra.mxu0 %v727
  %v795 = vpop.f32.mrf.mxu0
  %v796 = vadd.f32 0.0, %v795
  %v797 = vpop.f32.mrf.mxu0
  %v798 = vadd.f32 0.0, %v797
  %799 = vmatmul.bf16.gmra.mxu0 %v731
  %v800 = vpop.f32.mrf.mxu0
  %v801 = vadd.f32 0.0, %v800
  %v802 = vpop.f32.mrf.mxu0
  %v803 = vadd.f32 0.0, %v802
  %804 = vmatmul.bf16.gmra.mxu0 %v735
  %v805 = vpop.f32.mrf.mxu0
  %v806 = vadd.f32 0.0, %v805
  %v807 = vpop.f32.mrf.mxu0
  %v808 = vadd.f32 0.0, %v807
  %809 = vmatmul.bf16.gmra.mxu0 %v739
  %v810 = vpop.f32.mrf.mxu0
  %v811 = vadd.f32 0.0, %v810
  %v812 = vpop.f32.mrf.mxu0
  %813 = vdwg.mxu0
  %814 = vmatpush.bf16.msra.mxu0 %v390
  %815 = vmatpush.bf16.msra.mxu0 %v389
  %816 = vmatpush.bf16.msra.mxu0 %v388
  %817 = vmatpush.bf16.msra.mxu0 %v387
  %818 = vmatpush.bf16.msra.mxu0 %v386
  %819 = vmatpush.bf16.msra.mxu0 %v385
  %820 = vmatpush.bf16.msra.mxu0 %v384
  %821 = vmatpush.bf16.msra.mxu0 %v383
  %822 = vmatmul.bf16.gmra.mxu0 %v716
  %v823 = vpop.f32.mrf.mxu0
  %v824 = vadd.f32 %v781, %v823
  %v825 = vpop.f32.mrf.mxu0
  %v826 = vadd.f32 %v783, %v825
  %827 = vmatmul.bf16.gmra.mxu0 %v720
  %v828 = vpop.f32.mrf.mxu0
  %v829 = vadd.f32 %v786, %v828
  %v830 = vpop.f32.mrf.mxu0
  %v831 = vadd.f32 %v788, %v830
  %832 = vmatmul.bf16.gmra.mxu0 %v724
  %v833 = vpop.f32.mrf.mxu0
  %v834 = vadd.f32 %v791, %v833
  %v835 = vpop.f32.mrf.mxu0
  %v836 = vadd.f32 %v793, %v835
  %837 = vmatmul.bf16.gmra.mxu0 %v728
  %v838 = vpop.f32.mrf.mxu0
  %v839 = vadd.f32 %v796, %v838
  %v840 = vpop.f32.mrf.mxu0
  %v841 = vadd.f32 %v798, %v840
  %842 = vmatmul.bf16.gmra.mxu0 %v732
  %v843 = vpop.f32.mrf.mxu0
  %v844 = vadd.f32 %v801, %v843
  %v845 = vpop.f32.mrf.mxu0
  %v846 = vadd.f32 %v803, %v845
  %847 = vmatmul.bf16.gmra.mxu0 %v736
  %v848 = vpop.f32.mrf.mxu0
  %v849 = vadd.f32 %v806, %v848
  %v850 = vpop.f32.mrf.mxu0
  %v851 = vadd.f32 %v808, %v850
  %852 = vmatmul.bf16.gmra.mxu0 %v740
  %v853 = vpop.f32.mrf.mxu0
  %v854 = vadd.f32 %v811, %v853
  %v855 = vpop.f32.mrf.mxu0
  %856 = vdwg.mxu0
  %857 = vmatpush.bf16.msra.mxu0 %v398
  %858 = vmatpush.bf16.msra.mxu0 %v397
  %859 = vmatpush.bf16.msra.mxu0 %v396
  %860 = vmatpush.bf16.msra.mxu0 %v395
  %861 = vmatpush.bf16.msra.mxu0 %v394
  %862 = vmatpush.bf16.msra.mxu0 %v393
  %863 = vmatpush.bf16.msra.mxu0 %v392
  %864 = vmatpush.bf16.msra.mxu0 %v391
  %865 = vmatmul.bf16.gmra.mxu0 %v717
  %v866 = vpop.f32.mrf.mxu0
  %v867 = vadd.f32 %v824, %v866
  %v868 = vpop.f32.mrf.mxu0
  %v869 = vadd.f32 %v826, %v868
  %870 = vmatmul.bf16.gmra.mxu0 %v721
  %v871 = vpop.f32.mrf.mxu0
  %v872 = vadd.f32 %v829, %v871
  %v873 = vpop.f32.mrf.mxu0
  %v874 = vadd.f32 %v831, %v873
  %875 = vmatmul.bf16.gmra.mxu0 %v725
  %v876 = vpop.f32.mrf.mxu0
  %v877 = vadd.f32 %v834, %v876
  %v878 = vpop.f32.mrf.mxu0
  %v879 = vadd.f32 %v836, %v878
  %880 = vmatmul.bf16.gmra.mxu0 %v729
  %v881 = vpop.f32.mrf.mxu0
  %v882 = vadd.f32 %v839, %v881
  %v883 = vpop.f32.mrf.mxu0
  %v884 = vadd.f32 %v841, %v883
  %885 = vmatmul.bf16.gmra.mxu0 %v733
  %v886 = vpop.f32.mrf.mxu0
  %v887 = vadd.f32 %v844, %v886
  %v888 = vpop.f32.mrf.mxu0
  %v889 = vadd.f32 %v846, %v888
  %890 = vmatmul.bf16.gmra.mxu0 %v737
  %v891 = vpop.f32.mrf.mxu0
  %v892 = vadd.f32 %v849, %v891
  %v893 = vpop.f32.mrf.mxu0
  %v894 = vadd.f32 %v851, %v893
  %895 = vmatmul.bf16.gmra.mxu0 %v741
  %v896 = vpop.f32.mrf.mxu0
  %v897 = vadd.f32 %v854, %v896
  %v898 = vpop.f32.mrf.mxu0
  %899 = vdwg.mxu0
  %900 = vmatpush.bf16.msra.mxu0 %v406
  %901 = vmatpush.bf16.msra.mxu0 %v405
  %902 = vmatpush.bf16.msra.mxu0 %v404
  %903 = vmatpush.bf16.msra.mxu0 %v403
  %904 = vmatpush.bf16.msra.mxu0 %v402
  %905 = vmatpush.bf16.msra.mxu0 %v401
  %906 = vmatpush.bf16.msra.mxu0 %v400
  %907 = vmatpush.bf16.msra.mxu0 %v399
  %908 = vmatmul.bf16.gmra.mxu0 %v718
  %v909 = vpop.f32.mrf.mxu0
  %v910 = vadd.f32 %v867, %v909
  %v911 = vpop.f32.mrf.mxu0
  %v912 = vadd.f32 %v869, %v911
  %913 = vmatmul.bf16.gmra.mxu0 %v722
  %v914 = vpop.f32.mrf.mxu0
  %v915 = vadd.f32 %v872, %v914
  %v916 = vpop.f32.mrf.mxu0
  %v917 = vadd.f32 %v874, %v916
  %918 = vmatmul.bf16.gmra.mxu0 %v726
  %v919 = vpop.f32.mrf.mxu0
  %v920 = vadd.f32 %v877, %v919
  %v921 = vpop.f32.mrf.mxu0
  %v922 = vadd.f32 %v879, %v921
  %923 = vmatmul.bf16.gmra.mxu0 %v730
  %v924 = vpop.f32.mrf.mxu0
  %v925 = vadd.f32 %v882, %v924
  %v926 = vpop.f32.mrf.mxu0
  %v927 = vadd.f32 %v884, %v926
  %928 = vmatmul.bf16.gmra.mxu0 %v734
  %v929 = vpop.f32.mrf.mxu0
  %v930 = vadd.f32 %v887, %v929
  %v931 = vpop.f32.mrf.mxu0
  %v932 = vadd.f32 %v889, %v931
  %933 = vmatmul.bf16.gmra.mxu0 %v738
  %v934 = vpop.f32.mrf.mxu0
  %v935 = vadd.f32 %v892, %v934
  %v936 = vpop.f32.mrf.mxu0
  %v937 = vadd.f32 %v894, %v936
  %938 = vmatmul.bf16.gmra.mxu0 %v742
  %v939 = vpop.f32.mrf.mxu0
  %v940 = vadd.f32 %v897, %v939
  %v941 = vpop.f32.mrf.mxu0
  %942 = vdwg.mxu0
  %v943 = vmax.f32 %v578, %v910
  %v944 = vmax.f32 %v580, %v912
  %v945 = vmax.f32 %v583, %v915
  %v946 = vmax.f32 %v585, %v917
  %v947 = vmax.f32 %v588, %v920
  %v948 = vmax.f32 %v590, %v922
  %v949 = vmax.f32 %v593, %v925
  %v950 = vmax.f32 %v595, %v927
  %v951 = vmax.f32 %v598, %v930
  %v952 = vmax.f32 %v600, %v932
  %v953 = vmax.f32 %v603, %v935
  %v954 = vmax.f32 %v605, %v937
  %v955 = vmax.f32 %v608, %v940
  %v956 = vld [vmem:[%s2] sm:$0xff]
  %v957 = vld [vmem:[%s2 + $0x8] sm:$0xff]
  %v958 = vld [vmem:[%s2 + $0x10] sm:$0xff]
  %v959 = vld [vmem:[%s2 + $0x18] sm:$0xff]
  %v960 = vld [vmem:[%s2 + $0x20] sm:$0xff]
  %v961 = vld [vmem:[%s2 + $0x28] sm:$0xff]
  %v962 = vld [vmem:[%s2 + $0x30] sm:$0xff]
  %v963 = vld [vmem:[%s2 + $0x38] sm:$0xff]
  %v964 = vld [vmem:[%s2 + $0x40] sm:$0xff]
  %v965 = vld [vmem:[%s2 + $0x48] sm:$0xff]
  %v966 = vld [vmem:[%s2 + $0x50] sm:$0xff]
  %v967 = vld [vmem:[%s2 + $0x58] sm:$0xff]
  %v968 = vld [vmem:[%s2 + $0x60] sm:$0xff]
  %v969 = vld [vmem:[%s2 + $0x68] sm:$0xff]
  %v970 = vld [vmem:[%s2 + $0x70] sm:$0xff]
  %v971 = vld [vmem:[%s2 + $0x78] sm:$0xff]
  %v972 = vld [vmem:[%s2 + $0x80] sm:$0xff]
  %v973 = vld [vmem:[%s2 + $0x88] sm:$0xff]
  %v974 = vld [vmem:[%s2 + $0x90] sm:$0xff]
  %v975 = vld [vmem:[%s2 + $0x98] sm:$0xff]
  %v976 = vld [vmem:[%s2 + $0xa0] sm:$0xff]
  %v977 = vld [vmem:[%s2 + $0xa8] sm:$0xff]
  %v978 = vld [vmem:[%s2 + $0xb0] sm:$0xff]
  %v979 = vld [vmem:[%s2 + $0xb8] sm:$0xff]
  %v980 = vld [vmem:[%s2 + $0xc0] sm:$0xff]
  %v981 = vld [vmem:[%s2 + $0xc8] sm:$0xff]
  %v1008 = vunpack.c.l.b16 %v956
  %v1009 = vunpack.c.h.b16 %v956
  %v1010 = vunpack.c.l.b16 %v957
  %v1011 = vunpack.c.h.b16 %v957
  %v1012 = vunpack.c.l.b16 %v958
  %v1013 = vunpack.c.h.b16 %v958
  %v1014 = vunpack.c.l.b16 %v959
  %v1015 = vunpack.c.h.b16 %v959
  %v1016 = vunpack.c.l.b16 %v960
  %v1017 = vunpack.c.h.b16 %v960
  %v1018 = vunpack.c.l.b16 %v961
  %v1019 = vunpack.c.h.b16 %v961
  %v1020 = vunpack.c.l.b16 %v962
  %v1021 = vunpack.c.h.b16 %v962
  %v1022 = vunpack.c.l.b16 %v963
  %v1023 = vunpack.c.h.b16 %v963
  %v1024 = vunpack.c.l.b16 %v964
  %v1025 = vunpack.c.h.b16 %v964
  %v1026 = vunpack.c.l.b16 %v965
  %v1027 = vunpack.c.h.b16 %v965
  %v1028 = vunpack.c.l.b16 %v966
  %v1029 = vunpack.c.h.b16 %v966
  %v1030 = vunpack.c.l.b16 %v967
  %v1031 = vunpack.c.h.b16 %v967
  %v1032 = vunpack.c.l.b16 %v968
  %v1033 = vunpack.c.h.b16 %v968
  %v1034 = vunpack.c.l.b16 %v969
  %v1035 = vunpack.c.h.b16 %v969
  %v1036 = vunpack.c.l.b16 %v970
  %v1037 = vunpack.c.h.b16 %v970
  %v1038 = vunpack.c.l.b16 %v971
  %v1039 = vunpack.c.h.b16 %v971
  %v1040 = vunpack.c.l.b16 %v972
  %v1041 = vunpack.c.h.b16 %v972
  %v1042 = vunpack.c.l.b16 %v973
  %v1043 = vunpack.c.h.b16 %v973
  %v1044 = vunpack.c.l.b16 %v974
  %v1045 = vunpack.c.h.b16 %v974
  %v1046 = vunpack.c.l.b16 %v975
  %v1047 = vunpack.c.h.b16 %v975
  %v1048 = vunpack.c.l.b16 %v976
  %v1049 = vunpack.c.h.b16 %v976
  %v1050 = vunpack.c.l.b16 %v977
  %v1051 = vunpack.c.h.b16 %v977
  %v1052 = vunpack.c.l.b16 %v978
  %v1053 = vunpack.c.h.b16 %v978
  %v1054 = vunpack.c.l.b16 %v979
  %v1055 = vunpack.c.h.b16 %v979
  %v1056 = vunpack.c.l.b16 %v980
  %v1057 = vunpack.c.h.b16 %v980
  %v1058 = vunpack.c.l.b16 %v981
  %v1059 = vunpack.c.h.b16 %v981
  %v1060 = vpack.c.b16 %v1012, %v1008
  %v1061 = vpack.c.b16 %v1013, %v1009
  %v1062 = vpack.c.b16 %v1014, %v1010
  %v1063 = vpack.c.b16 %v1015, %v1011
  %v1064 = vpack.c.b16 %v1020, %v1016
  %v1065 = vpack.c.b16 %v1021, %v1017
  %v1066 = vpack.c.b16 %v1022, %v1018
  %v1067 = vpack.c.b16 %v1023, %v1019
  %v1068 = vpack.c.b16 %v1028, %v1024
  %v1069 = vpack.c.b16 %v1029, %v1025
  %v1070 = vpack.c.b16 %v1030, %v1026
  %v1071 = vpack.c.b16 %v1031, %v1027
  %v1072 = vpack.c.b16 %v1036, %v1032
  %v1073 = vpack.c.b16 %v1037, %v1033
  %v1074 = vpack.c.b16 %v1038, %v1034
  %v1075 = vpack.c.b16 %v1039, %v1035
  %v1076 = vpack.c.b16 %v1044, %v1040
  %v1077 = vpack.c.b16 %v1045, %v1041
  %v1078 = vpack.c.b16 %v1046, %v1042
  %v1079 = vpack.c.b16 %v1047, %v1043
  %v1080 = vpack.c.b16 %v1052, %v1048
  %v1081 = vpack.c.b16 %v1053, %v1049
  %v1082 = vpack.c.b16 %v1054, %v1050
  %v1083 = vpack.c.b16 %v1055, %v1051
  %v1084 = vpack.c.b16 %v1056, %v1056
  %v1085 = vpack.c.b16 %v1057, %v1057
  %v1086 = vpack.c.b16 %v1058, %v1058
  %v1087 = vpack.c.b16 %v1059, %v1059
  %1116 = vmatpush.bf16.msra.mxu0 %v382
  %1117 = vmatpush.bf16.msra.mxu0 %v381
  %1118 = vmatpush.bf16.msra.mxu0 %v380
  %1119 = vmatpush.bf16.msra.mxu0 %v379
  %1120 = vmatpush.bf16.msra.mxu0 %v378
  %1121 = vmatpush.bf16.msra.mxu0 %v377
  %1122 = vmatpush.bf16.msra.mxu0 %v376
  %1123 = vmatpush.bf16.msra.mxu0 %v375
  %1124 = vmatmul.bf16.gmra.mxu0 %v1060
  %v1125 = vpop.f32.mrf.mxu0
  %v1126 = vadd.f32 0.0, %v1125
  %v1127 = vpop.f32.mrf.mxu0
  %v1128 = vadd.f32 0.0, %v1127
  %1129 = vmatmul.bf16.gmra.mxu0 %v1064
  %v1130 = vpop.f32.mrf.mxu0
  %v1131 = vadd.f32 0.0, %v1130
  %v1132 = vpop.f32.mrf.mxu0
  %v1133 = vadd.f32 0.0, %v1132
  %1134 = vmatmul.bf16.gmra.mxu0 %v1068
  %v1135 = vpop.f32.mrf.mxu0
  %v1136 = vadd.f32 0.0, %v1135
  %v1137 = vpop.f32.mrf.mxu0
  %v1138 = vadd.f32 0.0, %v1137
  %1139 = vmatmul.bf16.gmra.mxu0 %v1072
  %v1140 = vpop.f32.mrf.mxu0
  %v1141 = vadd.f32 0.0, %v1140
  %v1142 = vpop.f32.mrf.mxu0
  %v1143 = vadd.f32 0.0, %v1142
  %1144 = vmatmul.bf16.gmra.mxu0 %v1076
  %v1145 = vpop.f32.mrf.mxu0
  %v1146 = vadd.f32 0.0, %v1145
  %v1147 = vpop.f32.mrf.mxu0
  %v1148 = vadd.f32 0.0, %v1147
  %1149 = vmatmul.bf16.gmra.mxu0 %v1080
  %v1150 = vpop.f32.mrf.mxu0
  %v1151 = vadd.f32 0.0, %v1150
  %v1152 = vpop.f32.mrf.mxu0
  %v1153 = vadd.f32 0.0, %v1152
  %1154 = vmatmul.bf16.gmra.mxu0 %v1084
  %v1155 = vpop.f32.mrf.mxu0
  %v1156 = vadd.f32 0.0, %v1155
  %v1157 = vpop.f32.mrf.mxu0
  %1158 = vdwg.mxu0
  %1159 = vmatpush.bf16.msra.mxu0 %v390
  %1160 = vmatpush.bf16.msra.mxu0 %v389
  %1161 = vmatpush.bf16.msra.mxu0 %v388
  %1162 = vmatpush.bf16.msra.mxu0 %v387
  %1163 = vmatpush.bf16.msra.mxu0 %v386
  %1164 = vmatpush.bf16.msra.mxu0 %v385
  %1165 = vmatpush.bf16.msra.mxu0 %v384
  %1166 = vmatpush.bf16.msra.mxu0 %v383
  %1167 = vmatmul.bf16.gmra.mxu0 %v1061
  %v1168 = vpop.f32.mrf.mxu0
  %v1169 = vadd.f32 %v1126, %v1168
  %v1170 = vpop.f32.mrf.mxu0
  %v1171 = vadd.f32 %v1128, %v1170
  %1172 = vmatmul.bf16.gmra.mxu0 %v1065
  %v1173 = vpop.f32.mrf.mxu0
  %v1174 = vadd.f32 %v1131, %v1173
  %v1175 = vpop.f32.mrf.mxu0
  %v1176 = vadd.f32 %v1133, %v1175
  %1177 = vmatmul.bf16.gmra.mxu0 %v1069
  %v1178 = vpop.f32.mrf.mxu0
  %v1179 = vadd.f32 %v1136, %v1178
  %v1180 = vpop.f32.mrf.mxu0
  %v1181 = vadd.f32 %v1138, %v1180
  %1182 = vmatmul.bf16.gmra.mxu0 %v1073
  %v1183 = vpop.f32.mrf.mxu0
  %v1184 = vadd.f32 %v1141, %v1183
  %v1185 = vpop.f32.mrf.mxu0
  %v1186 = vadd.f32 %v1143, %v1185
  %1187 = vmatmul.bf16.gmra.mxu0 %v1077
  %v1188 = vpop.f32.mrf.mxu0
  %v1189 = vadd.f32 %v1146, %v1188
  %v1190 = vpop.f32.mrf.mxu0
  %v1191 = vadd.f32 %v1148, %v1190
  %1192 = vmatmul.bf16.gmra.mxu0 %v1081
  %v1193 = vpop.f32.mrf.mxu0
  %v1194 = vadd.f32 %v1151, %v1193
  %v1195 = vpop.f32.mrf.mxu0
  %v1196 = vadd.f32 %v1153, %v1195
  %1197 = vmatmul.bf16.gmra.mxu0 %v1085
  %v1198 = vpop.f32.mrf.mxu0
  %v1199 = vadd.f32 %v1156, %v1198
  %v1200 = vpop.f32.mrf.mxu0
  %1201 = vdwg.mxu0
  %1202 = vmatpush.bf16.msra.mxu0 %v398
  %1203 = vmatpush.bf16.msra.mxu0 %v397
  %1204 = vmatpush.bf16.msra.mxu0 %v396
  %1205 = vmatpush.bf16.msra.mxu0 %v395
  %1206 = vmatpush.bf16.msra.mxu0 %v394
  %1207 = vmatpush.bf16.msra.mxu0 %v393
  %1208 = vmatpush.bf16.msra.mxu0 %v392
  %1209 = vmatpush.bf16.msra.mxu0 %v391
  %1210 = vmatmul.bf16.gmra.mxu0 %v1062
  %v1211 = vpop.f32.mrf.mxu0
  %v1212 = vadd.f32 %v1169, %v1211
  %v1213 = vpop.f32.mrf.mxu0
  %v1214 = vadd.f32 %v1171, %v1213
  %1215 = vmatmul.bf16.gmra.mxu0 %v1066
  %v1216 = vpop.f32.mrf.mxu0
  %v1217 = vadd.f32 %v1174, %v1216
  %v1218 = vpop.f32.mrf.mxu0
  %v1219 = vadd.f32 %v1176, %v1218
  %1220 = vmatmul.bf16.gmra.mxu0 %v1070
  %v1221 = vpop.f32.mrf.mxu0
  %v1222 = vadd.f32 %v1179, %v1221
  %v1223 = vpop.f32.mrf.mxu0
  %v1224 = vadd.f32 %v1181, %v1223
  %1225 = vmatmul.bf16.gmra.mxu0 %v1074
  %v1226 = vpop.f32.mrf.mxu0
  %v1227 = vadd.f32 %v1184, %v1226
  %v1228 = vpop.f32.mrf.mxu0
  %v1229 = vadd.f32 %v1186, %v1228
  %1230 = vmatmul.bf16.gmra.mxu0 %v1078
  %v1231 = vpop.f32.mrf.mxu0
  %v1232 = vadd.f32 %v1189, %v1231
  %v1233 = vpop.f32.mrf.mxu0
  %v1234 = vadd.f32 %v1191, %v1233
  %1235 = vmatmul.bf16.gmra.mxu0 %v1082
  %v1236 = vpop.f32.mrf.mxu0
  %v1237 = vadd.f32 %v1194, %v1236
  %v1238 = vpop.f32.mrf.mxu0
  %v1239 = vadd.f32 %v1196, %v1238
  %1240 = vmatmul.bf16.gmra.mxu0 %v1086
  %v1241 = vpop.f32.mrf.mxu0
  %v1242 = vadd.f32 %v1199, %v1241
  %v1243 = vpop.f32.mrf.mxu0
  %1244 = vdwg.mxu0
  %1245 = vmatpush.bf16.msra.mxu0 %v406
  %1246 = vmatpush.bf16.msra.mxu0 %v405
  %1247 = vmatpush.bf16.msra.mxu0 %v404
  %1248 = vmatpush.bf16.msra.mxu0 %v403
  %1249 = vmatpush.bf16.msra.mxu0 %v402
  %1250 = vmatpush.bf16.msra.mxu0 %v401
  %1251 = vmatpush.bf16.msra.mxu0 %v400
  %1252 = vmatpush.bf16.msra.mxu0 %v399
  %1253 = vmatmul.bf16.gmra.mxu0 %v1063
  %v1254 = vpop.f32.mrf.mxu0
  %v1255 = vadd.f32 %v1212, %v1254
  %v1256 = vpop.f32.mrf.mxu0
  %v1257 = vadd.f32 %v1214, %v1256
  %1258 = vmatmul.bf16.gmra.mxu0 %v1067
  %v1259 = vpop.f32.mrf.mxu0
  %v1260 = vadd.f32 %v1217, %v1259
  %v1261 = vpop.f32.mrf.mxu0
  %v1262 = vadd.f32 %v1219, %v1261
  %1263 = vmatmul.bf16.gmra.mxu0 %v1071
  %v1264 = vpop.f32.mrf.mxu0
  %v1265 = vadd.f32 %v1222, %v1264
  %v1266 = vpop.f32.mrf.mxu0
  %v1267 = vadd.f32 %v1224, %v1266
  %1268 = vmatmul.bf16.gmra.mxu0 %v1075
  %v1269 = vpop.f32.mrf.mxu0
  %v1270 = vadd.f32 %v1227, %v1269
  %v1271 = vpop.f32.mrf.mxu0
  %v1272 = vadd.f32 %v1229, %v1271
  %1273 = vmatmul.bf16.gmra.mxu0 %v1079
  %v1274 = vpop.f32.mrf.mxu0
  %v1275 = vadd.f32 %v1232, %v1274
  %v1276 = vpop.f32.mrf.mxu0
  %v1277 = vadd.f32 %v1234, %v1276
  %1278 = vmatmul.bf16.gmra.mxu0 %v1083
  %v1279 = vpop.f32.mrf.mxu0
  %v1280 = vadd.f32 %v1237, %v1279
  %v1281 = vpop.f32.mrf.mxu0
  %v1282 = vadd.f32 %v1239, %v1281
  %1283 = vmatmul.bf16.gmra.mxu0 %v1087
  %v1284 = vpop.f32.mrf.mxu0
  %v1285 = vadd.f32 %v1242, %v1284
  %v1286 = vpop.f32.mrf.mxu0
  %1287 = vdwg.mxu0
  %v1288 = vld [vmem:[%s3] sm:$0xff]
  %v1289 = vld [vmem:[%s3 + $0x8] sm:$0xff]
  %v1290 = vld [vmem:[%s3 + $0x10] sm:$0xff]
  %v1291 = vld [vmem:[%s3 + $0x18] sm:$0xff]
  %v1292 = vld [vmem:[%s3 + $0x20] sm:$0xff]
  %v1293 = vld [vmem:[%s3 + $0x28] sm:$0xff]
  %v1294 = vld [vmem:[%s3 + $0x30] sm:$0xff]
  %v1295 = vld [vmem:[%s3 + $0x38] sm:$0xff]
  %v1296 = vld [vmem:[%s3 + $0x40] sm:$0xff]
  %v1297 = vld [vmem:[%s3 + $0x48] sm:$0xff]
  %v1298 = vld [vmem:[%s3 + $0x50] sm:$0xff]
  %v1299 = vld [vmem:[%s3 + $0x58] sm:$0xff]
  %v1300 = vld [vmem:[%s3 + $0x60] sm:$0xff]
  %v1301 = vld [vmem:[%s3 + $0x68] sm:$0xff]
  %v1302 = vld [vmem:[%s3 + $0x70] sm:$0xff]
  %v1303 = vld [vmem:[%s3 + $0x78] sm:$0xff]
  %v1304 = vld [vmem:[%s3 + $0x80] sm:$0xff]
  %v1305 = vld [vmem:[%s3 + $0x88] sm:$0xff]
  %v1306 = vld [vmem:[%s3 + $0x90] sm:$0xff]
  %v1307 = vld [vmem:[%s3 + $0x98] sm:$0xff]
  %v1308 = vld [vmem:[%s3 + $0xa0] sm:$0xff]
  %v1309 = vld [vmem:[%s3 + $0xa8] sm:$0xff]
  %v1310 = vld [vmem:[%s3 + $0xb0] sm:$0xff]
  %v1311 = vld [vmem:[%s3 + $0xb8] sm:$0xff]
  %v1312 = vld [vmem:[%s3 + $0xc0] sm:$0xff]
  %v1313 = vld [vmem:[%s3 + $0xc8] sm:$0xff]
  %v1340 = vunpack.c.l.b16 %v1288
  %v1341 = vunpack.c.h.b16 %v1288
  %v1342 = vunpack.c.l.b16 %v1289
  %v1343 = vunpack.c.h.b16 %v1289
  %v1344 = vunpack.c.l.b16 %v1290
  %v1345 = vunpack.c.h.b16 %v1290
  %v1346 = vunpack.c.l.b16 %v1291
  %v1347 = vunpack.c.h.b16 %v1291
  %v1348 = vunpack.c.l.b16 %v1292
  %v1349 = vunpack.c.h.b16 %v1292
  %v1350 = vunpack.c.l.b16 %v1293
  %v1351 = vunpack.c.h.b16 %v1293
  %v1352 = vunpack.c.l.b16 %v1294
  %v1353 = vunpack.c.h.b16 %v1294
  %v1354 = vunpack.c.l.b16 %v1295
  %v1355 = vunpack.c.h.b16 %v1295
  %v1356 = vunpack.c.l.b16 %v1296
  %v1357 = vunpack.c.h.b16 %v1296
  %v1358 = vunpack.c.l.b16 %v1297
  %v1359 = vunpack.c.h.b16 %v1297
  %v1360 = vunpack.c.l.b16 %v1298
  %v1361 = vunpack.c.h.b16 %v1298
  %v1362 = vunpack.c.l.b16 %v1299
  %v1363 = vunpack.c.h.b16 %v1299
  %v1364 = vunpack.c.l.b16 %v1300
  %v1365 = vunpack.c.h.b16 %v1300
  %v1366 = vunpack.c.l.b16 %v1301
  %v1367 = vunpack.c.h.b16 %v1301
  %v1368 = vunpack.c.l.b16 %v1302
  %v1369 = vunpack.c.h.b16 %v1302
  %v1370 = vunpack.c.l.b16 %v1303
  %v1371 = vunpack.c.h.b16 %v1303
  %v1372 = vunpack.c.l.b16 %v1304
  %v1373 = vunpack.c.h.b16 %v1304
  %v1374 = vunpack.c.l.b16 %v1305
  %v1375 = vunpack.c.h.b16 %v1305
  %v1376 = vunpack.c.l.b16 %v1306
  %v1377 = vunpack.c.h.b16 %v1306
  %v1378 = vunpack.c.l.b16 %v1307
  %v1379 = vunpack.c.h.b16 %v1307
  %v1380 = vunpack.c.l.b16 %v1308
  %v1381 = vunpack.c.h.b16 %v1308
  %v1382 = vunpack.c.l.b16 %v1309
  %v1383 = vunpack.c.h.b16 %v1309
  %v1384 = vunpack.c.l.b16 %v1310
  %v1385 = vunpack.c.h.b16 %v1310
  %v1386 = vunpack.c.l.b16 %v1311
  %v1387 = vunpack.c.h.b16 %v1311
  %v1388 = vunpack.c.l.b16 %v1312
  %v1389 = vunpack.c.h.b16 %v1312
  %v1390 = vunpack.c.l.b16 %v1313
  %v1391 = vunpack.c.h.b16 %v1313
  %v1392 = vpack.c.b16 %v1344, %v1340
  %v1393 = vpack.c.b16 %v1345, %v1341
  %v1394 = vpack.c.b16 %v1346, %v1342
  %v1395 = vpack.c.b16 %v1347, %v1343
  %v1396 = vpack.c.b16 %v1352, %v1348
  %v1397 = vpack.c.b16 %v1353, %v1349
  %v1398 = vpack.c.b16 %v1354, %v1350
  %v1399 = vpack.c.b16 %v1355, %v1351
  %v1400 = vpack.c.b16 %v1360, %v1356
  %v1401 = vpack.c.b16 %v1361, %v1357
  %v1402 = vpack.c.b16 %v1362, %v1358
  %v1403 = vpack.c.b16 %v1363, %v1359
  %v1404 = vpack.c.b16 %v1368, %v1364
  %v1405 = vpack.c.b16 %v1369, %v1365
  %v1406 = vpack.c.b16 %v1370, %v1366
  %v1407 = vpack.c.b16 %v1371, %v1367
  %v1408 = vpack.c.b16 %v1376, %v1372
  %v1409 = vpack.c.b16 %v1377, %v1373
  %v1410 = vpack.c.b16 %v1378, %v1374
  %v1411 = vpack.c.b16 %v1379, %v1375
  %v1412 = vpack.c.b16 %v1384, %v1380
  %v1413 = vpack.c.b16 %v1385, %v1381
  %v1414 = vpack.c.b16 %v1386, %v1382
  %v1415 = vpack.c.b16 %v1387, %v1383
  %v1416 = vpack.c.b16 %v1388, %v1388
  %v1417 = vpack.c.b16 %v1389, %v1389
  %v1418 = vpack.c.b16 %v1390, %v1390
  %v1419 = vpack.c.b16 %v1391, %v1391
  %1448 = vmatpush.bf16.msra.mxu0 %v382
  %1449 = vmatpush.bf16.msra.mxu0 %v381
  %1450 = vmatpush.bf16.msra.mxu0 %v380
  %1451 = vmatpush.bf16.msra.mxu0 %v379
  %1452 = vmatpush.bf16.msra.mxu0 %v378
  %1453 = vmatpush.bf16.msra.mxu0 %v377
  %1454 = vmatpush.bf16.msra.mxu0 %v376
  %1455 = vmatpush.bf16.msra.mxu0 %v375
  %1456 = vmatmul.bf16.gmra.mxu0 %v1392
  %v1457 = vpop.f32.mrf.mxu0
  %v1458 = vadd.f32 0.0, %v1457
  %v1459 = vpop.f32.mrf.mxu0
  %v1460 = vadd.f32 0.0, %v1459
  %1461 = vmatmul.bf16.gmra.mxu0 %v1396
  %v1462 = vpop.f32.mrf.mxu0
  %v1463 = vadd.f32 0.0, %v1462
  %v1464 = vpop.f32.mrf.mxu0
  %v1465 = vadd.f32 0.0, %v1464
  %1466 = vmatmul.bf16.gmra.mxu0 %v1400
  %v1467 = vpop.f32.mrf.mxu0
  %v1468 = vadd.f32 0.0, %v1467
  %v1469 = vpop.f32.mrf.mxu0
  %v1470 = vadd.f32 0.0, %v1469
  %1471 = vmatmul.bf16.gmra.mxu0 %v1404
  %v1472 = vpop.f32.mrf.mxu0
  %v1473 = vadd.f32 0.0, %v1472
  %v1474 = vpop.f32.mrf.mxu0
  %v1475 = vadd.f32 0.0, %v1474
  %1476 = vmatmul.bf16.gmra.mxu0 %v1408
  %v1477 = vpop.f32.mrf.mxu0
  %v1478 = vadd.f32 0.0, %v1477
  %v1479 = vpop.f32.mrf.mxu0
  %v1480 = vadd.f32 0.0, %v1479
  %1481 = vmatmul.bf16.gmra.mxu0 %v1412
  %v1482 = vpop.f32.mrf.mxu0
  %v1483 = vadd.f32 0.0, %v1482
  %v1484 = vpop.f32.mrf.mxu0
  %v1485 = vadd.f32 0.0, %v1484
  %1486 = vmatmul.bf16.gmra.mxu0 %v1416
  %v1487 = vpop.f32.mrf.mxu0
  %v1488 = vadd.f32 0.0, %v1487
  %v1489 = vpop.f32.mrf.mxu0
  %1490 = vdwg.mxu0
  %1491 = vmatpush.bf16.msra.mxu0 %v390
  %1492 = vmatpush.bf16.msra.mxu0 %v389
  %1493 = vmatpush.bf16.msra.mxu0 %v388
  %1494 = vmatpush.bf16.msra.mxu0 %v387
  %1495 = vmatpush.bf16.msra.mxu0 %v386
  %1496 = vmatpush.bf16.msra.mxu0 %v385
  %1497 = vmatpush.bf16.msra.mxu0 %v384
  %1498 = vmatpush.bf16.msra.mxu0 %v383
  %1499 = vmatmul.bf16.gmra.mxu0 %v1393
  %v1500 = vpop.f32.mrf.mxu0
  %v1501 = vadd.f32 %v1458, %v1500
  %v1502 = vpop.f32.mrf.mxu0
  %v1503 = vadd.f32 %v1460, %v1502
  %1504 = vmatmul.bf16.gmra.mxu0 %v1397
  %v1505 = vpop.f32.mrf.mxu0
  %v1506 = vadd.f32 %v1463, %v1505
  %v1507 = vpop.f32.mrf.mxu0
  %v1508 = vadd.f32 %v1465, %v1507
  %1509 = vmatmul.bf16.gmra.mxu0 %v1401
  %v1510 = vpop.f32.mrf.mxu0
  %v1511 = vadd.f32 %v1468, %v1510
  %v1512 = vpop.f32.mrf.mxu0
  %v1513 = vadd.f32 %v1470, %v1512
  %1514 = vmatmul.bf16.gmra.mxu0 %v1405
  %v1515 = vpop.f32.mrf.mxu0
  %v1516 = vadd.f32 %v1473, %v1515
  %v1517 = vpop.f32.mrf.mxu0
  %v1518 = vadd.f32 %v1475, %v1517
  %1519 = vmatmul.bf16.gmra.mxu0 %v1409
  %v1520 = vpop.f32.mrf.mxu0
  %v1521 = vadd.f32 %v1478, %v1520
  %v1522 = vpop.f32.mrf.mxu0
  %v1523 = vadd.f32 %v1480, %v1522
  %1524 = vmatmul.bf16.gmra.mxu0 %v1413
  %v1525 = vpop.f32.mrf.mxu0
  %v1526 = vadd.f32 %v1483, %v1525
  %v1527 = vpop.f32.mrf.mxu0
  %v1528 = vadd.f32 %v1485, %v1527
  %1529 = vmatmul.bf16.gmra.mxu0 %v1417
  %v1530 = vpop.f32.mrf.mxu0
  %v1531 = vadd.f32 %v1488, %v1530
  %v1532 = vpop.f32.mrf.mxu0
  %1533 = vdwg.mxu0
  %1534 = vmatpush.bf16.msra.mxu0 %v398
  %1535 = vmatpush.bf16.msra.mxu0 %v397
  %1536 = vmatpush.bf16.msra.mxu0 %v396
  %1537 = vmatpush.bf16.msra.mxu0 %v395
  %1538 = vmatpush.bf16.msra.mxu0 %v394
  %1539 = vmatpush.bf16.msra.mxu0 %v393
  %1540 = vmatpush.bf16.msra.mxu0 %v392
  %1541 = vmatpush.bf16.msra.mxu0 %v391
  %1542 = vmatmul.bf16.gmra.mxu0 %v1394
  %v1543 = vpop.f32.mrf.mxu0
  %v1544 = vadd.f32 %v1501, %v1543
  %v1545 = vpop.f32.mrf.mxu0
  %v1546 = vadd.f32 %v1503, %v1545
  %1547 = vmatmul.bf16.gmra.mxu0 %v1398
  %v1548 = vpop.f32.mrf.mxu0
  %v1549 = vadd.f32 %v1506, %v1548
  %v1550 = vpop.f32.mrf.mxu0
  %v1551 = vadd.f32 %v1508, %v1550
  %1552 = vmatmul.bf16.gmra.mxu0 %v1402
  %v1553 = vpop.f32.mrf.mxu0
  %v1554 = vadd.f32 %v1511, %v1553
  %v1555 = vpop.f32.mrf.mxu0
  %v1556 = vadd.f32 %v1513, %v1555
  %1557 = vmatmul.bf16.gmra.mxu0 %v1406
  %v1558 = vpop.f32.mrf.mxu0
  %v1559 = vadd.f32 %v1516, %v1558
  %v1560 = vpop.f32.mrf.mxu0
  %v1561 = vadd.f32 %v1518, %v1560
  %1562 = vmatmul.bf16.gmra.mxu0 %v1410
  %v1563 = vpop.f32.mrf.mxu0
  %v1564 = vadd.f32 %v1521, %v1563
  %v1565 = vpop.f32.mrf.mxu0
  %v1566 = vadd.f32 %v1523, %v1565
  %1567 = vmatmul.bf16.gmra.mxu0 %v1414
  %v1568 = vpop.f32.mrf.mxu0
  %v1569 = vadd.f32 %v1526, %v1568
  %v1570 = vpop.f32.mrf.mxu0
  %v1571 = vadd.f32 %v1528, %v1570
  %1572 = vmatmul.bf16.gmra.mxu0 %v1418
  %v1573 = vpop.f32.mrf.mxu0
  %v1574 = vadd.f32 %v1531, %v1573
  %v1575 = vpop.f32.mrf.mxu0
  %1576 = vdwg.mxu0
  %1577 = vmatpush.bf16.msra.mxu0 %v406
  %1578 = vmatpush.bf16.msra.mxu0 %v405
  %1579 = vmatpush.bf16.msra.mxu0 %v404
  %1580 = vmatpush.bf16.msra.mxu0 %v403
  %1581 = vmatpush.bf16.msra.mxu0 %v402
  %1582 = vmatpush.bf16.msra.mxu0 %v401
  %1583 = vmatpush.bf16.msra.mxu0 %v400
  %1584 = vmatpush.bf16.msra.mxu0 %v399
  %1585 = vmatmul.bf16.gmra.mxu0 %v1395
  %v1586 = vpop.f32.mrf.mxu0
  %v1587 = vadd.f32 %v1544, %v1586
  %v1588 = vpop.f32.mrf.mxu0
  %v1589 = vadd.f32 %v1546, %v1588
  %1590 = vmatmul.bf16.gmra.mxu0 %v1399
  %v1591 = vpop.f32.mrf.mxu0
  %v1592 = vadd.f32 %v1549, %v1591
  %v1593 = vpop.f32.mrf.mxu0
  %v1594 = vadd.f32 %v1551, %v1593
  %1595 = vmatmul.bf16.gmra.mxu0 %v1403
  %v1596 = vpop.f32.mrf.mxu0
  %v1597 = vadd.f32 %v1554, %v1596
  %v1598 = vpop.f32.mrf.mxu0
  %v1599 = vadd.f32 %v1556, %v1598
  %1600 = vmatmul.bf16.gmra.mxu0 %v1407
  %v1601 = vpop.f32.mrf.mxu0
  %v1602 = vadd.f32 %v1559, %v1601
  %v1603 = vpop.f32.mrf.mxu0
  %v1604 = vadd.f32 %v1561, %v1603
  %1605 = vmatmul.bf16.gmra.mxu0 %v1411
  %v1606 = vpop.f32.mrf.mxu0
  %v1607 = vadd.f32 %v1564, %v1606
  %v1608 = vpop.f32.mrf.mxu0
  %v1609 = vadd.f32 %v1566, %v1608
  %1610 = vmatmul.bf16.gmra.mxu0 %v1415
  %v1611 = vpop.f32.mrf.mxu0
  %v1612 = vadd.f32 %v1569, %v1611
  %v1613 = vpop.f32.mrf.mxu0
  %v1614 = vadd.f32 %v1571, %v1613
  %1615 = vmatmul.bf16.gmra.mxu0 %v1419
  %v1616 = vpop.f32.mrf.mxu0
  %v1617 = vadd.f32 %v1574, %v1616
  %v1618 = vpop.f32.mrf.mxu0
  %1619 = vdwg.mxu0
  %v1620 = vmax.f32 %v1255, %v1587
  %v1621 = vmax.f32 %v1257, %v1589
  %v1622 = vmax.f32 %v1260, %v1592
  %v1623 = vmax.f32 %v1262, %v1594
  %v1624 = vmax.f32 %v1265, %v1597
  %v1625 = vmax.f32 %v1267, %v1599
  %v1626 = vmax.f32 %v1270, %v1602
  %v1627 = vmax.f32 %v1272, %v1604
  %v1628 = vmax.f32 %v1275, %v1607
  %v1629 = vmax.f32 %v1277, %v1609
  %v1630 = vmax.f32 %v1280, %v1612
  %v1631 = vmax.f32 %v1282, %v1614
  %v1632 = vmax.f32 %v1285, %v1617
  %v1633 = vmax.f32 %v943, %v1620
  %v1634 = vmax.f32 %v944, %v1621
  %v1635 = vmax.f32 %v945, %v1622
  %v1636 = vmax.f32 %v946, %v1623
  %v1637 = vmax.f32 %v947, %v1624
  %v1638 = vmax.f32 %v948, %v1625
  %v1639 = vmax.f32 %v949, %v1626
  %v1640 = vmax.f32 %v950, %v1627
  %v1641 = vmax.f32 %v951, %v1628
  %v1642 = vmax.f32 %v952, %v1629
  %v1643 = vmax.f32 %v953, %v1630
  %v1644 = vmax.f32 %v954, %v1631
  %v1645 = vmax.f32 %v955, %v1632
  %v1646 = vld [vmem:[%s5] sm:$0x1]
  %v1648 = vperm.slane %v1646, 0
  %v1650 = vadd.f32 %v1633, %v1648
  %v1651 = vadd.f32 %v1634, %v1648
  %v1652 = vadd.f32 %v1635, %v1648
  %v1653 = vadd.f32 %v1636, %v1648
  %v1654 = vadd.f32 %v1637, %v1648
  %v1655 = vadd.f32 %v1638, %v1648
  %v1656 = vadd.f32 %v1639, %v1648
  %v1657 = vadd.f32 %v1640, %v1648
  %v1658 = vadd.f32 %v1641, %v1648
  %v1659 = vadd.f32 %v1642, %v1648
  %v1660 = vadd.f32 %v1643, %v1648
  %v1661 = vadd.f32 %v1644, %v1648
  %v1662 = vadd.f32 %v1645, %v1648
  %v1663 = vmax.f32 %v1650, 0.0
  %v1664 = vmax.f32 %v1651, 0.0
  %v1665 = vmax.f32 %v1652, 0.0
  %v1666 = vmax.f32 %v1653, 0.0
  %v1667 = vmax.f32 %v1654, 0.0
  %v1668 = vmax.f32 %v1655, 0.0
  %v1669 = vmax.f32 %v1656, 0.0
  %v1670 = vmax.f32 %v1657, 0.0
  %v1671 = vmax.f32 %v1658, 0.0
  %v1672 = vmax.f32 %v1659, 0.0
  %v1673 = vmax.f32 %v1660, 0.0
  %v1674 = vmax.f32 %v1661, 0.0
  %v1675 = vmax.f32 %v1662, 0.0
  %v1676 = vpack.c.bf16 %v1663, %v1663
  %v1677 = vpack.c.bf16 %v1664, %v1664
  %v1678 = vpack.c.bf16 %v1665, %v1665
  %v1679 = vpack.c.bf16 %v1666, %v1666
  %v1680 = vpack.c.bf16 %v1667, %v1667
  %v1681 = vpack.c.bf16 %v1668, %v1668
  %v1682 = vpack.c.bf16 %v1669, %v1669
  %v1683 = vpack.c.bf16 %v1670, %v1670
  %v1684 = vpack.c.bf16 %v1671, %v1671
  %v1685 = vpack.c.bf16 %v1672, %v1672
  %v1686 = vpack.c.bf16 %v1673, %v1673
  %v1687 = vpack.c.bf16 %v1674, %v1674
  %v1688 = vpack.c.bf16 %v1675, %v1675
  %1689 = vst [vmem:[%s6] sm:$0xf] %v1676
  %1690 = vst [vmem:[%s6 + $0x4] sm:$0xf] %v1677
  %1691 = vst [vmem:[%s6 + $0x8] sm:$0xf] %v1678
  %1692 = vst [vmem:[%s6 + $0xc] sm:$0xf] %v1679
  %1693 = vst [vmem:[%s6 + $0x10] sm:$0xf] %v1680
  %1694 = vst [vmem:[%s6 + $0x14] sm:$0xf] %v1681
  %1695 = vst [vmem:[%s6 + $0x18] sm:$0xf] %v1682
  %1696 = vst [vmem:[%s6 + $0x1c] sm:$0xf] %v1683
  %1697 = vst [vmem:[%s6 + $0x20] sm:$0xf] %v1684
  %1698 = vst [vmem:[%s6 + $0x24] sm:$0xf] %v1685
  %1699 = vst [vmem:[%s6 + $0x28] sm:$0xf] %v1686
  %1700 = vst [vmem:[%s6 + $0x2c] sm:$0xf] %v1687
  %1701 = vst [vmem:[%s6 + $0x30] sm:$0xf] %v1688
  // Predicated region
  $region26: #{cnn_forward.4} parent=0 // pred_check
    _
  $region27: #{cnn_forward.4} parent=0 // pred_check_branch
    %1703 = sbr.rel (0) target = $region29
  $region28: #{cnn_forward.4} parent=0 // pred_region
    _
  $region29: #{cnn_forward.4} parent=0 // pred_fallthru
    _
  // Predicated region
  $region30: #{cnn_forward.4} parent=0 // pred_check
    _
  $region31: #{cnn_forward.4} parent=0 // pred_check_branch
    %1705 = sbr.rel (0) target = $region33
  $region32: #{cnn_forward.4} parent=0 // pred_region
    _
  $region33: #{cnn_forward.4} parent=0 // pred_fallthru
    _

// kernel: cnn_forward.5
$region0: #{cnn_forward.5}
  #allocation0 [shape = 'u32[]', space=smem, size = 0x4, offset = 0x4, fixed_abs, tag = 'smem constant byte address 0x4 - core index']
  #allocation1 [shape = 'u32[72,128]{1,0:T(1,128)}', space=vmem, size = 0x9000, scoped, tag = 'internal scratch']
  %s0 = inlined_call_operand.vmem [shape: bf16[8,1664], index: 0, kind: input, shape index: {}]
  %s1 = inlined_call_operand.vmem [shape: bf16[1664,128], index: 1, kind: input, shape index: {}]
  %s2 = inlined_call_operand.vmem [shape: f32[1,128], index: 2, kind: input, shape index: {}]
  %s3 = inlined_call_operand.vmem [shape: f32[8,128], index: 3, kind: output, shape index: {}]
  %s4 = sld [smem:[#allocation0]]
  $region22: #{cnn_forward.5} parent=0
    _
  %s6 = ssub.s32 1, %s4
  %s7 = scalar_select 0, %s6, %s4
  // Predicated region
  $region2: #{cnn_forward.5} parent=0 // pred_check
    _
  $region3: #{cnn_forward.5} parent=0 // pred_check_branch
    %9 = sbr.rel (0) target = $region5
  $region4: #{cnn_forward.5} parent=0 // pred_region
    _
  $region5: #{cnn_forward.5} parent=0 // pred_fallthru
    _
  // Predicated region
  $region6: #{cnn_forward.5} parent=0 // pred_check
    _
  $region7: #{cnn_forward.5} parent=0 // pred_check_branch
    %11 = sbr.rel (0) target = $region9
  $region8: #{cnn_forward.5} parent=0 // pred_region
    _
  $region9: #{cnn_forward.5} parent=0 // pred_fallthru
    _
  // Predicated region
  $region10: #{cnn_forward.5} parent=0 // pred_check
    _
  $region11: #{cnn_forward.5} parent=0 // pred_check_branch
    %13 = sbr.rel (0) target = $region13
  $region12: #{cnn_forward.5} parent=0 // pred_region
    _
  $region13: #{cnn_forward.5} parent=0 // pred_fallthru
    _
  %v14 = vld [vmem:[%s0] sm:$0xff]
  %v15 = vld [vmem:[%s0 + $0x8] sm:$0xff]
  %v16 = vld [vmem:[%s0 + $0x10] sm:$0xff]
  %v17 = vld [vmem:[%s0 + $0x18] sm:$0xff]
  %v18 = vld [vmem:[%s0 + $0x20] sm:$0xff]
  %v19 = vld [vmem:[%s0 + $0x28] sm:$0xff]
  %v20 = vld [vmem:[%s0 + $0x30] sm:$0xf]
  %v21 = vld [vmem:[%s1] sm:$0xf]
  %v22 = vld [vmem:[%s1 + $0x4] sm:$0xf]
  %v23 = vld [vmem:[%s1 + $0x8] sm:$0xf]
  %v24 = vld [vmem:[%s1 + $0xc] sm:$0xf]
  %v25 = vld [vmem:[%s1 + $0x10] sm:$0xf]
  %v26 = vld [vmem:[%s1 + $0x14] sm:$0xf]
  %v27 = vld [vmem:[%s1 + $0x18] sm:$0xf]
  %v28 = vld [vmem:[%s1 + $0x1c] sm:$0xf]
  %v29 = vld [vmem:[%s1 + $0x20] sm:$0xf]
  %v30 = vld [vmem:[%s1 + $0x24] sm:$0xf]
  %v31 = vld [vmem:[%s1 + $0x28] sm:$0xf]
  %v32 = vld [vmem:[%s1 + $0x2c] sm:$0xf]
  %v33 = vld [vmem:[%s1 + $0x30] sm:$0xf]
  %v34 = vld [vmem:[%s1 + $0x34] sm:$0xf]
  %v35 = vld [vmem:[%s1 + $0x38] sm:$0xf]
  %v36 = vld [vmem:[%s1 + $0x3c] sm:$0xf]
  %v37 = vld [vmem:[%s1 + $0x40] sm:$0xf]
  %v38 = vld [vmem:[%s1 + $0x44] sm:$0xf]
  %v39 = vld [vmem:[%s1 + $0x48] sm:$0xf]
  %v40 = vld [vmem:[%s1 + $0x4c] sm:$0xf]
  %v41 = vld [vmem:[%s1 + $0x50] sm:$0xf]
  %v42 = vld [vmem:[%s1 + $0x54] sm:$0xf]
  %v43 = vld [vmem:[%s1 + $0x58] sm:$0xf]
  %v44 = vld [vmem:[%s1 + $0x5c] sm:$0xf]
  %v45 = vld [vmem:[%s1 + $0x60] sm:$0xf]
  %v46 = vld [vmem:[%s1 + $0x64] sm:$0xf]
  %v47 = vld [vmem:[%s1 + $0x68] sm:$0xf]
  %v48 = vld [vmem:[%s1 + $0x6c] sm:$0xf]
  %v49 = vld [vmem:[%s1 + $0x70] sm:$0xf]
  %v50 = vld [vmem:[%s1 + $0x74] sm:$0xf]
  %v51 = vld [vmem:[%s1 + $0x78] sm:$0xf]
  %v52 = vld [vmem:[%s1 + $0x7c] sm:$0xf]
  %v53 = vld [vmem:[%s1 + $0x80] sm:$0xf]
  %v54 = vld [vmem:[%s1 + $0x84] sm:$0xf]
  %v55 = vld [vmem:[%s1 + $0x88] sm:$0xf]
  %v56 = vld [vmem:[%s1 + $0x8c] sm:$0xf]
  %v57 = vld [vmem:[%s1 + $0x90] sm:$0xf]
  %v58 = vld [vmem:[%s1 + $0x94] sm:$0xf]
  %v59 = vld [vmem:[%s1 + $0x98] sm:$0xf]
  %v60 = vld [vmem:[%s1 + $0x9c] sm:$0xf]
  %v61 = vld [vmem:[%s1 + $0xa0] sm:$0xf]
  %v62 = vld [vmem:[%s1 + $0xa4] sm:$0xf]
  %v63 = vld [vmem:[%s1 + $0xa8] sm:$0xf]
  %v64 = vld [vmem:[%s1 + $0xac] sm:$0xf]
  %v65 = vld [vmem:[%s1 + $0xb0] sm:$0xf]
  %v66 = vld [vmem:[%s1 + $0xb4] sm:$0xf]
  %v67 = vld [vmem:[%s1 + $0xb8] sm:$0xf]
  %v68 = vld [vmem:[%s1 + $0xbc] sm:$0xf]
  %v69 = vld [vmem:[%s1 + $0xc0] sm:$0xf]
  %v70 = vld [vmem:[%s1 + $0xc4] sm:$0xf]
  %v71 = vld [vmem:[%s1 + $0xc8] sm:$0xf]
  %v72 = vld [vmem:[%s1 + $0xcc] sm:$0xf]
  %v73 = vld [vmem:[%s1 + $0xd0] sm:$0xf]
  %v74 = vld [vmem:[%s1 + $0xd4] sm:$0xf]
  %v75 = vld [vmem:[%s1 + $0xd8] sm:$0xf]
  %v76 = vld [vmem:[%s1 + $0xdc] sm:$0xf]
  %v77 = vld [vmem:[%s1 + $0xe0] sm:$0xf]
  %v78 = vld [vmem:[%s1 + $0xe4] sm:$0xf]
  %v79 = vld [vmem:[%s1 + $0xe8] sm:$0xf]
  %v80 = vld [vmem:[%s1 + $0xec] sm:$0xf]
  %v81 = vld [vmem:[%s1 + $0xf0] sm:$0xf]
  %v82 = vld [vmem:[%s1 + $0xf4] sm:$0xf]
  %v83 = vld [vmem:[%s1 + $0xf8] sm:$0xf]
  %v84 = vld [vmem:[%s1 + $0xfc] sm:$0xf]
  %v85 = vld [vmem:[%s1 + $0x100] sm:$0xf]
  %v86 = vld [vmem:[%s1 + $0x104] sm:$0xf]
  %v87 = vld [vmem:[%s1 + $0x108] sm:$0xf]
  %v88 = vld [vmem:[%s1 + $0x10c] sm:$0xf]
  %v89 = vld [vmem:[%s1 + $0x110] sm:$0xf]
  %v90 = vld [vmem:[%s1 + $0x114] sm:$0xf]
  %v91 = vld [vmem:[%s1 + $0x118] sm:$0xf]
  %v92 = vld [vmem:[%s1 + $0x11c] sm:$0xf]
  %v93 = vld [vmem:[%s1 + $0x120] sm:$0xf]
  %v94 = vld [vmem:[%s1 + $0x124] sm:$0xf]
  %v95 = vld [vmem:[%s1 + $0x128] sm:$0xf]
  %v96 = vld [vmem:[%s1 + $0x12c] sm:$0xf]
  %v97 = vld [vmem:[%s1 + $0x130] sm:$0xf]
  %v98 = vld [vmem:[%s1 + $0x134] sm:$0xf]
  %v99 = vld [vmem:[%s1 + $0x138] sm:$0xf]
  %v100 = vld [vmem:[%s1 + $0x13c] sm:$0xf]
  %v101 = vld [vmem:[%s1 + $0x140] sm:$0xf]
  %v102 = vld [vmem:[%s1 + $0x144] sm:$0xf]
  %v103 = vld [vmem:[%s1 + $0x148] sm:$0xf]
  %v104 = vld [vmem:[%s1 + $0x14c] sm:$0xf]
  %v105 = vld [vmem:[%s1 + $0x150] sm:$0xf]
  %v106 = vld [vmem:[%s1 + $0x154] sm:$0xf]
  %v107 = vld [vmem:[%s1 + $0x158] sm:$0xf]
  %v108 = vld [vmem:[%s1 + $0x15c] sm:$0xf]
  %v109 = vld [vmem:[%s1 + $0x160] sm:$0xf]
  %v110 = vld [vmem:[%s1 + $0x164] sm:$0xf]
  %v111 = vld [vmem:[%s1 + $0x168] sm:$0xf]
  %v112 = vld [vmem:[%s1 + $0x16c] sm:$0xf]
  %v113 = vld [vmem:[%s1 + $0x170] sm:$0xf]
  %v114 = vld [vmem:[%s1 + $0x174] sm:$0xf]
  %v115 = vld [vmem:[%s1 + $0x178] sm:$0xf]
  %v116 = vld [vmem:[%s1 + $0x17c] sm:$0xf]
  %v117 = vld [vmem:[%s1 + $0x180] sm:$0xf]
  %v118 = vld [vmem:[%s1 + $0x184] sm:$0xf]
  %v119 = vld [vmem:[%s1 + $0x188] sm:$0xf]
  %v120 = vld [vmem:[%s1 + $0x18c] sm:$0xf]
  %v121 = vld [vmem:[%s1 + $0x190] sm:$0xf]
  %v122 = vld [vmem:[%s1 + $0x194] sm:$0xf]
  %v123 = vld [vmem:[%s1 + $0x198] sm:$0xf]
  %v124 = vld [vmem:[%s1 + $0x19c] sm:$0xf]
  %v125 = vld [vmem:[%s1 + $0x1a0] sm:$0xf]
  %v126 = vld [vmem:[%s1 + $0x1a4] sm:$0xf]
  %v127 = vld [vmem:[%s1 + $0x1a8] sm:$0xf]
  %v128 = vld [vmem:[%s1 + $0x1ac] sm:$0xf]
  %v129 = vld [vmem:[%s1 + $0x1b0] sm:$0xf]
  %v130 = vld [vmem:[%s1 + $0x1b4] sm:$0xf]
  %v131 = vld [vmem:[%s1 + $0x1b8] sm:$0xf]
  %v132 = vld [vmem:[%s1 + $0x1bc] sm:$0xf]
  %v133 = vld [vmem:[%s1 + $0x1c0] sm:$0xf]
  %v134 = vld [vmem:[%s1 + $0x1c4] sm:$0xf]
  %v135 = vld [vmem:[%s1 + $0x1c8] sm:$0xf]
  %v136 = vld [vmem:[%s1 + $0x1cc] sm:$0xf]
  %v137 = vld [vmem:[%s1 + $0x1d0] sm:$0xf]
  %v138 = vld [vmem:[%s1 + $0x1d4] sm:$0xf]
  %v139 = vld [vmem:[%s1 + $0x1d8] sm:$0xf]
  %v140 = vld [vmem:[%s1 + $0x1dc] sm:$0xf]
  %v141 = vld [vmem:[%s1 + $0x1e0] sm:$0xf]
  %v142 = vld [vmem:[%s1 + $0x1e4] sm:$0xf]
  %v143 = vld [vmem:[%s1 + $0x1e8] sm:$0xf]
  %v144 = vld [vmem:[%s1 + $0x1ec] sm:$0xf]
  %v145 = vld [vmem:[%s1 + $0x1f0] sm:$0xf]
  %v146 = vld [vmem:[%s1 + $0x1f4] sm:$0xf]
  %v147 = vld [vmem:[%s1 + $0x1f8] sm:$0xf]
  %v148 = vld [vmem:[%s1 + $0x1fc] sm:$0xf]
  %v149 = vld [vmem:[%s1 + $0x200] sm:$0xf]
  %v150 = vld [vmem:[%s1 + $0x204] sm:$0xf]
  %v151 = vld [vmem:[%s1 + $0x208] sm:$0xf]
  %v152 = vld [vmem:[%s1 + $0x20c] sm:$0xf]
  %v153 = vld [vmem:[%s1 + $0x210] sm:$0xf]
  %v154 = vld [vmem:[%s1 + $0x214] sm:$0xf]
  %v155 = vld [vmem:[%s1 + $0x218] sm:$0xf]
  %v156 = vld [vmem:[%s1 + $0x21c] sm:$0xf]
  %v157 = vld [vmem:[%s1 + $0x220] sm:$0xf]
  %v158 = vld [vmem:[%s1 + $0x224] sm:$0xf]
  %v159 = vld [vmem:[%s1 + $0x228] sm:$0xf]
  %v160 = vld [vmem:[%s1 + $0x22c] sm:$0xf]
  %v161 = vld [vmem:[%s1 + $0x230] sm:$0xf]
  %v162 = vld [vmem:[%s1 + $0x234] sm:$0xf]
  %v163 = vld [vmem:[%s1 + $0x238] sm:$0xf]
  %v164 = vld [vmem:[%s1 + $0x23c] sm:$0xf]
  %v165 = vld [vmem:[%s1 + $0x240] sm:$0xf]
  %v166 = vld [vmem:[%s1 + $0x244] sm:$0xf]
  %v167 = vld [vmem:[%s1 + $0x248] sm:$0xf]
  %v168 = vld [vmem:[%s1 + $0x24c] sm:$0xf]
  %v169 = vld [vmem:[%s1 + $0x250] sm:$0xf]
  %v170 = vld [vmem:[%s1 + $0x254] sm:$0xf]
  %v171 = vld [vmem:[%s1 + $0x258] sm:$0xf]
  %v172 = vld [vmem:[%s1 + $0x25c] sm:$0xf]
  %v173 = vld [vmem:[%s1 + $0x260] sm:$0xf]
  %v174 = vld [vmem:[%s1 + $0x264] sm:$0xf]
  %v175 = vld [vmem:[%s1 + $0x268] sm:$0xf]
  %v176 = vld [vmem:[%s1 + $0x26c] sm:$0xf]
  %v177 = vld [vmem:[%s1 + $0x270] sm:$0xf]
  %v178 = vld [vmem:[%s1 + $0x274] sm:$0xf]
  %v179 = vld [vmem:[%s1 + $0x278] sm:$0xf]
  %v180 = vld [vmem:[%s1 + $0x27c] sm:$0xf]
  %v181 = vld [vmem:[%s1 + $0x280] sm:$0xf]
  %v182 = vld [vmem:[%s1 + $0x284] sm:$0xf]
  %v183 = vld [vmem:[%s1 + $0x288] sm:$0xf]
  %v184 = vld [vmem:[%s1 + $0x28c] sm:$0xf]
  %v185 = vld [vmem:[%s1 + $0x290] sm:$0xf]
  %v186 = vld [vmem:[%s1 + $0x294] sm:$0xf]
  %v187 = vld [vmem:[%s1 + $0x298] sm:$0xf]
  %v188 = vld [vmem:[%s1 + $0x29c] sm:$0xf]
  %v189 = vld [vmem:[%s1 + $0x2a0] sm:$0xf]
  %v190 = vld [vmem:[%s1 + $0x2a4] sm:$0xf]
  %v191 = vld [vmem:[%s1 + $0x2a8] sm:$0xf]
  %v192 = vld [vmem:[%s1 + $0x2ac] sm:$0xf]
  %v193 = vld [vmem:[%s1 + $0x2b0] sm:$0xf]
  %v194 = vld [vmem:[%s1 + $0x2b4] sm:$0xf]
  %v195 = vld [vmem:[%s1 + $0x2b8] sm:$0xf]
  %v196 = vld [vmem:[%s1 + $0x2bc] sm:$0xf]
  %v197 = vld [vmem:[%s1 + $0x2c0] sm:$0xf]
  %v198 = vld [vmem:[%s1 + $0x2c4] sm:$0xf]
  %v199 = vld [vmem:[%s1 + $0x2c8] sm:$0xf]
  %v200 = vld [vmem:[%s1 + $0x2cc] sm:$0xf]
  %v201 = vld [vmem:[%s1 + $0x2d0] sm:$0xf]
  %v202 = vld [vmem:[%s1 + $0x2d4] sm:$0xf]
  %v203 = vld [vmem:[%s1 + $0x2d8] sm:$0xf]
  %v204 = vld [vmem:[%s1 + $0x2dc] sm:$0xf]
  %v205 = vld [vmem:[%s1 + $0x2e0] sm:$0xf]
  %v206 = vld [vmem:[%s1 + $0x2e4] sm:$0xf]
  %v207 = vld [vmem:[%s1 + $0x2e8] sm:$0xf]
  %v208 = vld [vmem:[%s1 + $0x2ec] sm:$0xf]
  %v209 = vld [vmem:[%s1 + $0x2f0] sm:$0xf]
  %v210 = vld [vmem:[%s1 + $0x2f4] sm:$0xf]
  %v211 = vld [vmem:[%s1 + $0x2f8] sm:$0xf]
  %v212 = vld [vmem:[%s1 + $0x2fc] sm:$0xf]
  %v213 = vld [vmem:[%s1 + $0x300] sm:$0xf]
  %v214 = vld [vmem:[%s1 + $0x304] sm:$0xf]
  %v215 = vld [vmem:[%s1 + $0x308] sm:$0xf]
  %v216 = vld [vmem:[%s1 + $0x30c] sm:$0xf]
  %v217 = vld [vmem:[%s1 + $0x310] sm:$0xf]
  %v218 = vld [vmem:[%s1 + $0x314] sm:$0xf]
  %v219 = vld [vmem:[%s1 + $0x318] sm:$0xf]
  %v220 = vld [vmem:[%s1 + $0x31c] sm:$0xf]
  %v221 = vld [vmem:[%s1 + $0x320] sm:$0xf]
  %v222 = vld [vmem:[%s1 + $0x324] sm:$0xf]
  %v223 = vld [vmem:[%s1 + $0x328] sm:$0xf]
  %v224 = vld [vmem:[%s1 + $0x32c] sm:$0xf]
  %v225 = vld [vmem:[%s1 + $0x330] sm:$0xf]
  %v226 = vld [vmem:[%s1 + $0x334] sm:$0xf]
  %v227 = vld [vmem:[%s1 + $0x338] sm:$0xf]
  %v228 = vld [vmem:[%s1 + $0x33c] sm:$0xf]
  %v229 = vld [vmem:[%s2] sm:$0x1]
  %v231 = vperm.slane %v229, 0
  %v240 = vunpack.c.l.b16 %v14
  %v241 = vunpack.c.h.b16 %v14
  %v242 = vunpack.c.l.b16 %v15
  %v243 = vunpack.c.h.b16 %v15
  %v244 = vunpack.c.l.b16 %v16
  %v245 = vunpack.c.h.b16 %v16
  %v246 = vunpack.c.l.b16 %v17
  %v247 = vunpack.c.h.b16 %v17
  %v248 = vunpack.c.l.b16 %v18
  %v249 = vunpack.c.h.b16 %v18
  %v250 = vunpack.c.l.b16 %v19
  %v251 = vunpack.c.h.b16 %v19
  %v252 = vunpack.c.l.b16 %v20
  %v253 = vpack.c.b16 %v240, %v240
  %v254 = vpack.c.b16 %v241, %v241
  %v255 = vpack.c.b16 %v242, %v242
  %v256 = vpack.c.b16 %v243, %v243
  %v257 = vpack.c.b16 %v244, %v244
  %v258 = vpack.c.b16 %v245, %v245
  %v259 = vpack.c.b16 %v246, %v246
  %v260 = vpack.c.b16 %v247, %v247
  %v261 = vpack.c.b16 %v248, %v248
  %v262 = vpack.c.b16 %v249, %v249
  %v263 = vpack.c.b16 %v250, %v250
  %v264 = vpack.c.b16 %v251, %v251
  %v265 = vpack.c.b16 %v252, %v252
  %v487 = vunpack.c.l.b16 %v21
  %v488 = vunpack.c.l.b16 %v22
  %v489 = vunpack.c.l.b16 %v23
  %v490 = vunpack.c.l.b16 %v24
  %v491 = vunpack.c.l.b16 %v25
  %v492 = vunpack.c.l.b16 %v26
  %v493 = vunpack.c.l.b16 %v27
  %v494 = vunpack.c.l.b16 %v28
  %v495 = vunpack.c.l.b16 %v29
  %v496 = vunpack.c.l.b16 %v30
  %v497 = vunpack.c.l.b16 %v31
  %v498 = vunpack.c.l.b16 %v32
  %v499 = vunpack.c.l.b16 %v33
  %v500 = vunpack.c.l.b16 %v34
  %v501 = vunpack.c.l.b16 %v35
  %v502 = vunpack.c.l.b16 %v36
  %v503 = vunpack.c.l.b16 %v37
  %v504 = vunpack.c.l.b16 %v38
  %v505 = vunpack.c.l.b16 %v39
  %v506 = vunpack.c.l.b16 %v40
  %v507 = vunpack.c.l.b16 %v41
  %v508 = vunpack.c.l.b16 %v42
  %v509 = vunpack.c.l.b16 %v43
  %v510 = vunpack.c.l.b16 %v44
  %v511 = vunpack.c.l.b16 %v45
  %v512 = vunpack.c.l.b16 %v46
  %v513 = vunpack.c.l.b16 %v47
  %v514 = vunpack.c.l.b16 %v48
  %v515 = vunpack.c.l.b16 %v49
  %v516 = vunpack.c.l.b16 %v50
  %v517 = vunpack.c.l.b16 %v51
  %v518 = vunpack.c.l.b16 %v52
  %v519 = vunpack.c.l.b16 %v53
  %v520 = vunpack.c.l.b16 %v54
  %v521 = vunpack.c.l.b16 %v55
  %v522 = vunpack.c.l.b16 %v56
  %v523 = vunpack.c.l.b16 %v57
  %v524 = vunpack.c.l.b16 %v58
  %v525 = vunpack.c.l.b16 %v59
  %v526 = vunpack.c.l.b16 %v60
  %v527 = vunpack.c.l.b16 %v61
  %v528 = vunpack.c.l.b16 %v62
  %v529 = vunpack.c.l.b16 %v63
  %v530 = vunpack.c.l.b16 %v64
  %v531 = vunpack.c.l.b16 %v65
  %v532 = vunpack.c.l.b16 %v66
  %v533 = vunpack.c.l.b16 %v67
  %v534 = vunpack.c.l.b16 %v68
  %v535 = vunpack.c.l.b16 %v69
  %v536 = vunpack.c.l.b16 %v70
  %v537 = vunpack.c.l.b16 %v71
  %v538 = vunpack.c.l.b16 %v72
  %v539 = vunpack.c.l.b16 %v73
  %v540 = vunpack.c.l.b16 %v74
  %v541 = vunpack.c.l.b16 %v75
  %v542 = vunpack.c.l.b16 %v76
  %v543 = vunpack.c.l.b16 %v77
  %v544 = vunpack.c.l.b16 %v78
  %v545 = vunpack.c.l.b16 %v79
  %v546 = vunpack.c.l.b16 %v80
  %v547 = vunpack.c.l.b16 %v81
  %v548 = vunpack.c.l.b16 %v82
  %v549 = vunpack.c.l.b16 %v83
  %v550 = vunpack.c.l.b16 %v84
  %v551 = vunpack.c.l.b16 %v85
  %v552 = vunpack.c.l.b16 %v86
  %v553 = vunpack.c.l.b16 %v87
  %v554 = vunpack.c.l.b16 %v88
  %v555 = vunpack.c.l.b16 %v89
  %v556 = vunpack.c.l.b16 %v90
  %v557 = vunpack.c.l.b16 %v91
  %v558 = vunpack.c.l.b16 %v92
  %v559 = vunpack.c.l.b16 %v93
  %v560 = vunpack.c.l.b16 %v94
  %v561 = vunpack.c.l.b16 %v95
  %v562 = vunpack.c.l.b16 %v96
  %v563 = vunpack.c.l.b16 %v97
  %v564 = vunpack.c.l.b16 %v98
  %v565 = vunpack.c.l.b16 %v99
  %v566 = vunpack.c.l.b16 %v100
  %v567 = vunpack.c.l.b16 %v101
  %v568 = vunpack.c.l.b16 %v102
  %v569 = vunpack.c.l.b16 %v103
  %v570 = vunpack.c.l.b16 %v104
  %v571 = vunpack.c.l.b16 %v105
  %v572 = vunpack.c.l.b16 %v106
  %v573 = vunpack.c.l.b16 %v107
  %v574 = vunpack.c.l.b16 %v108
  %v575 = vunpack.c.l.b16 %v109
  %v576 = vunpack.c.l.b16 %v110
  %v577 = vunpack.c.l.b16 %v111
  %v578 = vunpack.c.l.b16 %v112
  %v579 = vunpack.c.l.b16 %v113
  %v580 = vunpack.c.l.b16 %v114
  %v581 = vunpack.c.l.b16 %v115
  %v582 = vunpack.c.l.b16 %v116
  %v583 = vunpack.c.l.b16 %v117
  %v584 = vunpack.c.l.b16 %v118
  %v585 = vunpack.c.l.b16 %v119
  %v586 = vunpack.c.l.b16 %v120
  %v587 = vunpack.c.l.b16 %v121
  %v588 = vunpack.c.l.b16 %v122
  %v589 = vunpack.c.l.b16 %v123
  %v590 = vunpack.c.l.b16 %v124
  %v591 = vunpack.c.l.b16 %v125
  %v592 = vunpack.c.l.b16 %v126
  %v593 = vunpack.c.l.b16 %v127
  %v594 = vunpack.c.l.b16 %v128
  %v595 = vunpack.c.l.b16 %v129
  %v596 = vunpack.c.l.b16 %v130
  %v597 = vunpack.c.l.b16 %v131
  %v598 = vunpack.c.l.b16 %v132
  %v599 = vunpack.c.l.b16 %v133
  %v600 = vunpack.c.l.b16 %v134
  %v601 = vunpack.c.l.b16 %v135
  %v602 = vunpack.c.l.b16 %v136
  %v603 = vunpack.c.l.b16 %v137
  %v604 = vunpack.c.l.b16 %v138
  %v605 = vunpack.c.l.b16 %v139
  %v606 = vunpack.c.l.b16 %v140
  %v607 = vunpack.c.l.b16 %v141
  %v608 = vunpack.c.l.b16 %v142
  %v609 = vunpack.c.l.b16 %v143
  %v610 = vunpack.c.l.b16 %v144
  %v611 = vunpack.c.l.b16 %v145
  %v612 = vunpack.c.l.b16 %v146
  %v613 = vunpack.c.l.b16 %v147
  %v614 = vunpack.c.l.b16 %v148
  %v615 = vunpack.c.l.b16 %v149
  %v616 = vunpack.c.l.b16 %v150
  %v617 = vunpack.c.l.b16 %v151
  %v618 = vunpack.c.l.b16 %v152
  %v619 = vunpack.c.l.b16 %v153
  %v620 = vunpack.c.l.b16 %v154
  %v621 = vunpack.c.l.b16 %v155
  %v622 = vunpack.c.l.b16 %v156
  %v623 = vunpack.c.l.b16 %v157
  %v624 = vunpack.c.l.b16 %v158
  %v625 = vunpack.c.l.b16 %v159
  %v626 = vunpack.c.l.b16 %v160
  %v627 = vunpack.c.l.b16 %v161
  %v628 = vunpack.c.l.b16 %v162
  %v629 = vunpack.c.l.b16 %v163
  %v630 = vunpack.c.l.b16 %v164
  %v631 = vunpack.c.l.b16 %v165
  %v632 = vunpack.c.l.b16 %v166
  %v633 = vunpack.c.l.b16 %v167
  %v634 = vunpack.c.l.b16 %v168
  %v635 = vunpack.c.l.b16 %v169
  %v636 = vunpack.c.l.b16 %v170
  %v637 = vunpack.c.l.b16 %v171
  %v638 = vunpack.c.l.b16 %v172
  %v639 = vunpack.c.l.b16 %v173
  %v640 = vunpack.c.l.b16 %v174
  %v641 = vunpack.c.l.b16 %v175
  %v642 = vunpack.c.l.b16 %v176
  %v643 = vunpack.c.l.b16 %v177
  %v644 = vunpack.c.l.b16 %v178
  %v645 = vunpack.c.l.b16 %v179
  %v646 = vunpack.c.l.b16 %v180
  %v647 = vunpack.c.l.b16 %v181
  %v648 = vunpack.c.l.b16 %v182
  %v649 = vunpack.c.l.b16 %v183
  %v650 = vunpack.c.l.b16 %v184
  %v651 = vunpack.c.l.b16 %v185
  %v652 = vunpack.c.l.b16 %v186
  %v653 = vunpack.c.l.b16 %v187
  %v654 = vunpack.c.l.b16 %v188
  %v655 = vunpack.c.l.b16 %v189
  %v656 = vunpack.c.l.b16 %v190
  %v657 = vunpack.c.l.b16 %v191
  %v658 = vunpack.c.l.b16 %v192
  %v659 = vunpack.c.l.b16 %v193
  %v660 = vunpack.c.l.b16 %v194
  %v661 = vunpack.c.l.b16 %v195
  %v662 = vunpack.c.l.b16 %v196
  %v663 = vunpack.c.l.b16 %v197
  %v664 = vunpack.c.l.b16 %v198
  %v665 = vunpack.c.l.b16 %v199
  %v666 = vunpack.c.l.b16 %v200
  %v667 = vunpack.c.l.b16 %v201
  %v668 = vunpack.c.l.b16 %v202
  %v669 = vunpack.c.l.b16 %v203
  %v670 = vunpack.c.l.b16 %v204
  %v671 = vunpack.c.l.b16 %v205
  %v672 = vunpack.c.l.b16 %v206
  %v673 = vunpack.c.l.b16 %v207
  %v674 = vunpack.c.l.b16 %v208
  %v675 = vunpack.c.l.b16 %v209
  %v676 = vunpack.c.l.b16 %v210
  %v677 = vunpack.c.l.b16 %v211
  %v678 = vunpack.c.l.b16 %v212
  %v679 = vunpack.c.l.b16 %v213
  %v680 = vunpack.c.l.b16 %v214
  %v681 = vunpack.c.l.b16 %v215
  %v682 = vunpack.c.l.b16 %v216
  %v683 = vunpack.c.l.b16 %v217
  %v684 = vunpack.c.l.b16 %v218
  %v685 = vunpack.c.l.b16 %v219
  %v686 = vunpack.c.l.b16 %v220
  %v687 = vunpack.c.l.b16 %v221
  %v688 = vunpack.c.l.b16 %v222
  %v689 = vunpack.c.l.b16 %v223
  %v690 = vunpack.c.l.b16 %v224
  %v691 = vunpack.c.l.b16 %v225
  %v692 = vunpack.c.l.b16 %v226
  %v693 = vunpack.c.l.b16 %v227
  %v694 = vunpack.c.l.b16 %v228
  %v695 = vpack.c.b16 %v488, %v487
  %v696 = vpack.c.b16 %v490, %v489
  %v697 = vpack.c.b16 %v492, %v491
  %v698 = vpack.c.b16 %v494, %v493
  %v699 = vpack.c.b16 %v496, %v495
  %v700 = vpack.c.b16 %v498, %v497
  %v701 = vpack.c.b16 %v500, %v499
  %v702 = vpack.c.b16 %v502, %v501
  %v703 = vpack.c.b16 %v504, %v503
  %v704 = vpack.c.b16 %v506, %v505
  %v705 = vpack.c.b16 %v508, %v507
  %v706 = vpack.c.b16 %v510, %v509
  %v707 = vpack.c.b16 %v512, %v511
  %v708 = vpack.c.b16 %v514, %v513
  %v709 = vpack.c.b16 %v516, %v515
  %v710 = vpack.c.b16 %v518, %v517
  %v711 = vpack.c.b16 %v520, %v519
  %v712 = vpack.c.b16 %v522, %v521
  %v713 = vpack.c.b16 %v524, %v523
  %v714 = vpack.c.b16 %v526, %v525
  %v715 = vpack.c.b16 %v528, %v527
  %v716 = vpack.c.b16 %v530, %v529
  %v717 = vpack.c.b16 %v532, %v531
  %v718 = vpack.c.b16 %v534, %v533
  %v719 = vpack.c.b16 %v536, %v535
  %v720 = vpack.c.b16 %v538, %v537
  %v721 = vpack.c.b16 %v540, %v539
  %v722 = vpack.c.b16 %v542, %v541
  %v723 = vpack.c.b16 %v544, %v543
  %v724 = vpack.c.b16 %v546, %v545
  %v725 = vpack.c.b16 %v548, %v547
  %v726 = vpack.c.b16 %v550, %v549
  %v727 = vpack.c.b16 %v552, %v551
  %v728 = vpack.c.b16 %v554, %v553
  %v729 = vpack.c.b16 %v556, %v555
  %v730 = vpack.c.b16 %v558, %v557
  %v731 = vpack.c.b16 %v560, %v559
  %v732 = vpack.c.b16 %v562, %v561
  %v733 = vpack.c.b16 %v564, %v563
  %v734 = vpack.c.b16 %v566, %v565
  %v735 = vpack.c.b16 %v568, %v567
  %v736 = vpack.c.b16 %v570, %v569
  %v737 = vpack.c.b16 %v572, %v571
  %v738 = vpack.c.b16 %v574, %v573
  %v739 = vpack.c.b16 %v576, %v575
  %v740 = vpack.c.b16 %v578, %v577
  %v741 = vpack.c.b16 %v580, %v579
  %v742 = vpack.c.b16 %v582, %v581
  %v743 = vpack.c.b16 %v584, %v583
  %v744 = vpack.c.b16 %v586, %v585
  %v745 = vpack.c.b16 %v588, %v587
  %v746 = vpack.c.b16 %v590, %v589
  %v747 = vpack.c.b16 %v592, %v591
  %v748 = vpack.c.b16 %v594, %v593
  %v749 = vpack.c.b16 %v596, %v595
  %v750 = vpack.c.b16 %v598, %v597
  %v751 = vpack.c.b16 %v600, %v599
  %v752 = vpack.c.b16 %v602, %v601
  %v753 = vpack.c.b16 %v604, %v603
  %v754 = vpack.c.b16 %v606, %v605
  %v755 = vpack.c.b16 %v608, %v607
  %v756 = vpack.c.b16 %v610, %v609
  %v757 = vpack.c.b16 %v612, %v611
  %v758 = vpack.c.b16 %v614, %v613
  %v759 = vpack.c.b16 %v616, %v615
  %v760 = vpack.c.b16 %v618, %v617
  %v761 = vpack.c.b16 %v620, %v619
  %v762 = vpack.c.b16 %v622, %v621
  %v763 = vpack.c.b16 %v624, %v623
  %v764 = vpack.c.b16 %v626, %v625
  %v765 = vpack.c.b16 %v628, %v627
  %v766 = vpack.c.b16 %v630, %v629
  %v767 = vpack.c.b16 %v632, %v631
  %v768 = vpack.c.b16 %v634, %v633
  %v769 = vpack.c.b16 %v636, %v635
  %v770 = vpack.c.b16 %v638, %v637
  %v771 = vpack.c.b16 %v640, %v639
  %v772 = vpack.c.b16 %v642, %v641
  %v773 = vpack.c.b16 %v644, %v643
  %v774 = vpack.c.b16 %v646, %v645
  %v775 = vpack.c.b16 %v648, %v647
  %v776 = vpack.c.b16 %v650, %v649
  %v777 = vpack.c.b16 %v652, %v651
  %v778 = vpack.c.b16 %v654, %v653
  %v779 = vpack.c.b16 %v656, %v655
  %v780 = vpack.c.b16 %v658, %v657
  %v781 = vpack.c.b16 %v660, %v659
  %v782 = vpack.c.b16 %v662, %v661
  %v783 = vpack.c.b16 %v664, %v663
  %v784 = vpack.c.b16 %v666, %v665
  %v785 = vpack.c.b16 %v668, %v667
  %v786 = vpack.c.b16 %v670, %v669
  %v787 = vpack.c.b16 %v672, %v671
  %v788 = vpack.c.b16 %v674, %v673
  %v789 = vpack.c.b16 %v676, %v675
  %v790 = vpack.c.b16 %v678, %v677
  %v791 = vpack.c.b16 %v680, %v679
  %v792 = vpack.c.b16 %v682, %v681
  %v793 = vpack.c.b16 %v684, %v683
  %v794 = vpack.c.b16 %v686, %v685
  %v795 = vpack.c.b16 %v688, %v687
  %v796 = vpack.c.b16 %v690, %v689
  %v797 = vpack.c.b16 %v692, %v691
  %v798 = vpack.c.b16 %v694, %v693
  %903 = vmatpush.bf16.msra.mxu0 %v702
  %904 = vmatpush.bf16.msra.mxu0 %v701
  %905 = vmatpush.bf16.msra.mxu0 %v700
  %906 = vmatpush.bf16.msra.mxu0 %v699
  %907 = vmatpush.bf16.msra.mxu0 %v698
  %908 = vmatpush.bf16.msra.mxu0 %v697
  %909 = vmatpush.bf16.msra.mxu0 %v696
  %910 = vmatpush.bf16.msra.mxu0 %v695
  %911 = vmatmul.bf16.gmra.mxu0 %v253
  %v912 = vpop.f32.mrf.mxu0
  %v913 = vadd.f32 %v231, %v912
  %v914 = vpop.f32.mrf.mxu0
  %915 = vdwg.mxu0
  %916 = vmatpush.bf16.msra.mxu0 %v710
  %917 = vmatpush.bf16.msra.mxu0 %v709
  %918 = vmatpush.bf16.msra.mxu0 %v708
  %919 = vmatpush.bf16.msra.mxu0 %v707
  %920 = vmatpush.bf16.msra.mxu0 %v706
  %921 = vmatpush.bf16.msra.mxu0 %v705
  %922 = vmatpush.bf16.msra.mxu0 %v704
  %923 = vmatpush.bf16.msra.mxu0 %v703
  %924 = vmatmul.bf16.gmra.mxu0 %v254
  %v925 = vpop.f32.mrf.mxu0
  %v926 = vadd.f32 %v913, %v925
  %v927 = vpop.f32.mrf.mxu0
  %928 = vdwg.mxu0
  %929 = vmatpush.bf16.msra.mxu0 %v718
  %930 = vmatpush.bf16.msra.mxu0 %v717
  %931 = vmatpush.bf16.msra.mxu0 %v716
  %932 = vmatpush.bf16.msra.mxu0 %v715
  %933 = vmatpush.bf16.msra.mxu0 %v714
  %934 = vmatpush.bf16.msra.mxu0 %v713
  %935 = vmatpush.bf16.msra.mxu0 %v712
  %936 = vmatpush.bf16.msra.mxu0 %v711
  %937 = vmatmul.bf16.gmra.mxu0 %v255
  %v938 = vpop.f32.mrf.mxu0
  %v939 = vadd.f32 %v926, %v938
  %v940 = vpop.f32.mrf.mxu0
  %941 = vdwg.mxu0
  %942 = vmatpush.bf16.msra.mxu0 %v726
  %943 = vmatpush.bf16.msra.mxu0 %v725
  %944 = vmatpush.bf16.msra.mxu0 %v724
  %945 = vmatpush.bf16.msra.mxu0 %v723
  %946 = vmatpush.bf16.msra.mxu0 %v722
  %947 = vmatpush.bf16.msra.mxu0 %v721
  %948 = vmatpush.bf16.msra.mxu0 %v720
  %949 = vmatpush.bf16.msra.mxu0 %v719
  %950 = vmatmul.bf16.gmra.mxu0 %v256
  %v951 = vpop.f32.mrf.mxu0
  %v952 = vadd.f32 %v939, %v951
  %v953 = vpop.f32.mrf.mxu0
  %954 = vdwg.mxu0
  %955 = vmatpush.bf16.msra.mxu0 %v734
  %956 = vmatpush.bf16.msra.mxu0 %v733
  %957 = vmatpush.bf16.msra.mxu0 %v732
  %958 = vmatpush.bf16.msra.mxu0 %v731
  %959 = vmatpush.bf16.msra.mxu0 %v730
  %960 = vmatpush.bf16.msra.mxu0 %v729
  %961 = vmatpush.bf16.msra.mxu0 %v728
  %962 = vmatpush.bf16.msra.mxu0 %v727
  %963 = vmatmul.bf16.gmra.mxu0 %v257
  %v964 = vpop.f32.mrf.mxu0
  %v965 = vadd.f32 %v952, %v964
  %v966 = vpop.f32.mrf.mxu0
  %967 = vdwg.mxu0
  %968 = vmatpush.bf16.msra.mxu0 %v742
  %969 = vmatpush.bf16.msra.mxu0 %v741
  %970 = vmatpush.bf16.msra.mxu0 %v740
  %971 = vmatpush.bf16.msra.mxu0 %v739
  %972 = vmatpush.bf16.msra.mxu0 %v738
  %973 = vmatpush.bf16.msra.mxu0 %v737
  %974 = vmatpush.bf16.msra.mxu0 %v736
  %975 = vmatpush.bf16.msra.mxu0 %v735
  %976 = vmatmul.bf16.gmra.mxu0 %v258
  %v977 = vpop.f32.mrf.mxu0
  %v978 = vadd.f32 %v965, %v977
  %v979 = vpop.f32.mrf.mxu0
  %980 = vdwg.mxu0
  %981 = vmatpush.bf16.msra.mxu0 %v750
  %982 = vmatpush.bf16.msra.mxu0 %v749
  %983 = vmatpush.bf16.msra.mxu0 %v748
  %984 = vmatpush.bf16.msra.mxu0 %v747
  %985 = vmatpush.bf16.msra.mxu0 %v746
  %986 = vmatpush.bf16.msra.mxu0 %v745
  %987 = vmatpush.bf16.msra.mxu0 %v744
  %988 = vmatpush.bf16.msra.mxu0 %v743
  %989 = vmatmul.bf16.gmra.mxu0 %v259
  %v990 = vpop.f32.mrf.mxu0
  %v991 = vadd.f32 %v978, %v990
  %v992 = vpop.f32.mrf.mxu0
  %993 = vdwg.mxu0
  %994 = vmatpush.bf16.msra.mxu0 %v758
  %995 = vmatpush.bf16.msra.mxu0 %v757
  %996 = vmatpush.bf16.msra.mxu0 %v756
  %997 = vmatpush.bf16.msra.mxu0 %v755
  %998 = vmatpush.bf16.msra.mxu0 %v754
  %999 = vmatpush.bf16.msra.mxu0 %v753
  %1000 = vmatpush.bf16.msra.mxu0 %v752
  %1001 = vmatpush.bf16.msra.mxu0 %v751
  %1002 = vmatmul.bf16.gmra.mxu0 %v260
  %v1003 = vpop.f32.mrf.mxu0
  %v1004 = vadd.f32 %v991, %v1003
  %v1005 = vpop.f32.mrf.mxu0
  %1006 = vdwg.mxu0
  %1007 = vmatpush.bf16.msra.mxu0 %v766
  %1008 = vmatpush.bf16.msra.mxu0 %v765
  %1009 = vmatpush.bf16.msra.mxu0 %v764
  %1010 = vmatpush.bf16.msra.mxu0 %v763
  %1011 = vmatpush.bf16.msra.mxu0 %v762
  %1012 = vmatpush.bf16.msra.mxu0 %v761
  %1013 = vmatpush.bf16.msra.mxu0 %v760
  %1014 = vmatpush.bf16.msra.mxu0 %v759
  %1015 = vmatmul.bf16.gmra.mxu0 %v261
  %v1016 = vpop.f32.mrf.mxu0
  %v1017 = vadd.f32 %v1004, %v1016
  %v1018 = vpop.f32.mrf.mxu0
  %1019 = vdwg.mxu0
  %1020 = vmatpush.bf16.msra.mxu0 %v774
  %1021 = vmatpush.bf16.msra.mxu0 %v773
  %1022 = vmatpush.bf16.msra.mxu0 %v772
  %1023 = vmatpush.bf16.msra.mxu0 %v771
  %1024 = vmatpush.bf16.msra.mxu0 %v770
  %1025 = vmatpush.bf16.msra.mxu0 %v769
  %1026 = vmatpush.bf16.msra.mxu0 %v768
  %1027 = vmatpush.bf16.msra.mxu0 %v767
  %1028 = vmatmul.bf16.gmra.mxu0 %v262
  %v1029 = vpop.f32.mrf.mxu0
  %v1030 = vadd.f32 %v1017, %v1029
  %v1031 = vpop.f32.mrf.mxu0
  %1032 = vdwg.mxu0
  %1033 = vmatpush.bf16.msra.mxu0 %v782
  %1034 = vmatpush.bf16.msra.mxu0 %v781
  %1035 = vmatpush.bf16.msra.mxu0 %v780
  %1036 = vmatpush.bf16.msra.mxu0 %v779
  %1037 = vmatpush.bf16.msra.mxu0 %v778
  %1038 = vmatpush.bf16.msra.mxu0 %v777
  %1039 = vmatpush.bf16.msra.mxu0 %v776
  %1040 = vmatpush.bf16.msra.mxu0 %v775
  %1041 = vmatmul.bf16.gmra.mxu0 %v263
  %v1042 = vpop.f32.mrf.mxu0
  %v1043 = vadd.f32 %v1030, %v1042
  %v1044 = vpop.f32.mrf.mxu0
  %1045 = vdwg.mxu0
  %1046 = vmatpush.bf16.msra.mxu0 %v790
  %1047 = vmatpush.bf16.msra.mxu0 %v789
  %1048 = vmatpush.bf16.msra.mxu0 %v788
  %1049 = vmatpush.bf16.msra.mxu0 %v787
  %1050 = vmatpush.bf16.msra.mxu0 %v786
  %1051 = vmatpush.bf16.msra.mxu0 %v785
  %1052 = vmatpush.bf16.msra.mxu0 %v784
  %1053 = vmatpush.bf16.msra.mxu0 %v783
  %1054 = vmatmul.bf16.gmra.mxu0 %v264
  %v1055 = vpop.f32.mrf.mxu0
  %v1056 = vadd.f32 %v1043, %v1055
  %v1057 = vpop.f32.mrf.mxu0
  %1058 = vdwg.mxu0
  %1059 = vmatpush.bf16.msra.mxu0 %v798
  %1060 = vmatpush.bf16.msra.mxu0 %v797
  %1061 = vmatpush.bf16.msra.mxu0 %v796
  %1062 = vmatpush.bf16.msra.mxu0 %v795
  %1063 = vmatpush.bf16.msra.mxu0 %v794
  %1064 = vmatpush.bf16.msra.mxu0 %v793
  %1065 = vmatpush.bf16.msra.mxu0 %v792
  %1066 = vmatpush.bf16.msra.mxu0 %v791
  %1067 = vmatmul.bf16.gmra.mxu0 %v265
  %v1068 = vpop.f32.mrf.mxu0
  %v1069 = vadd.f32 %v1056, %v1068
  %v1070 = vpop.f32.mrf.mxu0
  %1071 = vdwg.mxu0
  %1072 = vst [vmem:[%s3] sm:$0xff] %v1069
  // Predicated region
  $region14: #{cnn_forward.5} parent=0 // pred_check
    _
  $region15: #{cnn_forward.5} parent=0 // pred_check_branch
    %1074 = sbr.rel (0) target = $region17
  $region16: #{cnn_forward.5} parent=0 // pred_region
    _
  $region17: #{cnn_forward.5} parent=0 // pred_fallthru
    _
  // Predicated region
  $region18: #{cnn_forward.5} parent=0 // pred_check
    _
  $region19: #{cnn_forward.5} parent=0 // pred_check_branch
    %1076 = sbr.rel (0) target = $region21
  $region20: #{cnn_forward.5} parent=0 // pred_region
    _
  $region21: #{cnn_forward.5} parent=0 // pred_fallthru
    _

</llo_original>
